<compile_context>
chip_gen: v5e
topology: v5e:2x2
jax: 0.10.0
libtpu: 0.0.40
codegen_flags: <defaults>
</compile_context>

<pallas_src>
import numpy as np
import jax
import jax.numpy as jnp
from jax import lax
from jax.experimental import pallas as pl
from jax.experimental.pallas import tpu as pltpu

_SQRT_2PI = float(np.sqrt(2.0 * np.pi))


def _sigmoid(x):
    # tanh-based logistic: numerically stable, identical in kernel & reference.
    return 0.5 * (jnp.tanh(0.5 * x) + 1.0)


def _softplus(x):
    # stable softplus without relying on log1p lowering.
    return jnp.maximum(x, 0.0) + jnp.log(1.0 + jnp.exp(-jnp.abs(x)))


def _softmax_lastdim(x):
    m = jnp.max(x, axis=-1, keepdims=True)
    e = jnp.exp(x - m)
    return e / jnp.sum(e, axis=-1, keepdims=True)


# ----------------------------------------------------------------------------
# Pallas kernel: one decode step per grid iteration, state in VMEM scratch.
# ----------------------------------------------------------------------------
def _decoder_kernel(
    mem_ref, enc_ref, mask_ref,
    w_pre_ref, b_pre_ref,
    wa_m_ref, wa_c_ref, wa_h_ref, ba_ref,
    wg1_ref, bg1_ref, wg2_ref, bg2_ref,
    wd_h_ref, wd_c_ref, wd_hh_ref, bd_ref,
    wp_h_ref, wp_c_ref, bp_ref,
    ws_h_ref, ws_o_ref, bs_ref,
    h0a_ref, h0d_ref,
    out_ref, stop_ref, align_ref,
    h_att, c_att, h_dec, c_dec, ctx, mu_sc,
):
    t = pl.program_id(0)
    B, T_enc, D = enc_ref.shape
    H = h_att.shape[1]
    K_mix = mu_sc.shape[1]
    f32 = jnp.float32
    dot = lambda a, b: jnp.dot(a, b, preferred_element_type=f32)

    # ---- _init_states(): only on the first decode step ----
    @pl.when(t == 0)
    def _init():
        h_att[...] = jnp.broadcast_to(h0a_ref[...], (B, H))
        c_att[...] = jnp.zeros_like(c_att)
        h_dec[...] = jnp.broadcast_to(h0d_ref[...], (B, H))
        c_dec[...] = jnp.zeros_like(c_dec)
        ctx[...] = jnp.zeros_like(ctx)
        mu_sc[...] = jnp.zeros_like(mu_sc)

    memory = mem_ref[0].astype(f32)                                    # (B, E*r)

    # ---- Prenet: Linear + ReLU (dropout disabled in eval-mode forward) ----
    mem_p = jnp.maximum(dot(memory, w_pre_ref[...]) + b_pre_ref[...], 0.0)

    # ---- attention LSTMCell, input = [prenet(memory), context] ----
    ctx_prev = ctx[...]
    gates = (dot(mem_p, wa_m_ref[...]) + dot(ctx_prev, wa_c_ref[...])
             + dot(h_att[...], wa_h_ref[...]) + ba_ref[...])           # (B, 4H)
    i_g = _sigmoid(gates[:, 0 * H:1 * H])
    f_g = _sigmoid(gates[:, 1 * H:2 * H])
    g_g = jnp.tanh(gates[:, 2 * H:3 * H])
    o_g = _sigmoid(gates[:, 3 * H:4 * H])
    c_a = f_g * c_att[...] + i_g * g_g
    h_a = o_g * jnp.tanh(c_a)
    h_att[...] = h_a
    c_att[...] = c_a

    # ---- GMM (Graves) attention, v2 parameterisation ----
    inter = jnp.tanh(dot(h_a, wg1_ref[...]) + bg1_ref[...])            # (B, A)
    gbk = dot(inter, wg2_ref[...]) + bg2_ref[...]                      # (B, 3K)
    w_mix = _softmax_lastdim(gbk[:, 0 * K_mix:1 * K_mix])
    delta = _softplus(gbk[:, 1 * K_mix:2 * K_mix])
    sigma = _softplus(gbk[:, 2 * K_mix:3 * K_mix]) + 1e-5
    mu = mu_sc[...] + delta
    mu_sc[...] = mu

    pos = lax.broadcasted_iota(jnp.int32, (B, K_mix, T_enc), 2).astype(f32)
    diff = pos - mu[:, :, None]
    dens = jnp.exp(-0.5 * (diff * diff) / (sigma * sigma)[:, :, None])
    coef = (w_mix / (sigma * _SQRT_2PI))[:, :, None]
    alpha = jnp.sum(coef * dens, axis=1)                               # (B, T)
    alpha = alpha * mask_ref[...]
    context = jnp.sum(alpha[:, :, None] * enc_ref[...].astype(f32), axis=1)
    ctx[...] = context

    # ---- decoder LSTMCell, input = [attention_hidden, context] ----
    gates2 = (dot(h_a, wd_h_ref[...]) + dot(context, wd_c_ref[...])
              + dot(h_dec[...], wd_hh_ref[...]) + bd_ref[...])
    i2 = _sigmoid(gates2[:, 0 * H:1 * H])
    f2 = _sigmoid(gates2[:, 1 * H:2 * H])
    g2 = jnp.tanh(gates2[:, 2 * H:3 * H])
    o2 = _sigmoid(gates2[:, 3 * H:4 * H])
    c_d = f2 * c_dec[...] + i2 * g2
    h_d = o2 * jnp.tanh(c_d)
    h_dec[...] = h_d
    c_dec[...] = c_d

    # ---- linear projection, input = [decoder_hidden, context] ----
    dec_out = dot(h_d, wp_h_ref[...]) + dot(context, wp_c_ref[...]) + bp_ref[...]

    # ---- stopnet: Dropout(0.1) (eval) + Linear([decoder_hidden, decoder_output]) ----
    stop = dot(h_d, ws_h_ref[...]) + dot(dec_out, ws_o_ref[...]) + bs_ref[...]

    out_ref[0] = dec_out.astype(out_ref.dtype)
    stop_ref[0] = stop.astype(stop_ref.dtype)
    align_ref[0] = alpha.astype(align_ref.dtype)


# ----------------------------------------------------------------------------
# Wrapper: embedding / go-frame / reshapes + pallas_call over the decode steps.
# ----------------------------------------------------------------------------
def _full_spec(arr):
    zeros = (0,) * arr.ndim
    return pl.BlockSpec(arr.shape, lambda t, _z=zeros: _z)


def decoder_forward(params, inputs, memories, mask, *, r):
    p = params
    B, T, D = inputs.shape
    L = memories.shape[1]
    assert L % r == 0
    Tp = L // r
    E = p['embedding'].shape[1]
    out_dim = p['embedding'].shape[0]
    Cp = out_dim * r
    H = p['att_w_hh'].shape[0]
    K_mix = p['gmm_w2'].shape[1] // 3

    # Embedding lookup + _reshape_memory + go frame (teacher forcing input).
    mem_emb = p['embedding'][memories]                                  # (B, L, E)
    mem_r = jnp.transpose(mem_emb.reshape(B, Tp, r * E), (1, 0, 2))     # (Tp, B, E*r)
    go = jnp.broadcast_to(p['go_init'], (B, r * E))[None]               # (1, B, E*r)
    mem_steps = jnp.concatenate([go, mem_r[:-1]], axis=0)               # (Tp, B, E*r)

    mask_f = mask.astype(jnp.float32)
    row = lambda v: v.reshape(1, -1).astype(jnp.float32)

    resident = [
        inputs.astype(jnp.float32), mask_f,
        p['prenet_w'], row(p['prenet_b']),
        p['att_w_ih_m'], p['att_w_ih_c'], p['att_w_hh'], row(p['att_b']),
        p['gmm_w1'], row(p['gmm_b1']), p['gmm_w2'], row(p['gmm_b2']),
        p['dec_w_ih_h'], p['dec_w_ih_c'], p['dec_w_hh'], row(p['dec_b']),
        p['proj_w_h'], p['proj_w_c'], row(p['proj_b']),
        p['stop_w_h'], p['stop_w_o'], row(p['stop_b']),
        p['att_rnn_init'], p['dec_rnn_init'],
    ]

    in_specs = ([pl.BlockSpec((1, B, r * E), lambda t: (t, 0, 0))]
                + [_full_spec(a) for a in resident])

    out_shapes = (
        jax.ShapeDtypeStruct((Tp, B, Cp), jnp.float32),
        jax.ShapeDtypeStruct((Tp, B, 1), jnp.float32),
        jax.ShapeDtypeStruct((Tp, B, T), jnp.float32),
    )
    out_specs = (
        pl.BlockSpec((1, B, Cp), lambda t: (t, 0, 0)),
        pl.BlockSpec((1, B, 1), lambda t: (t, 0, 0)),
        pl.BlockSpec((1, B, T), lambda t: (t, 0, 0)),
    )
    scratch = [
        pltpu.VMEM((B, H), jnp.float32),      # attention_hidden
        pltpu.VMEM((B, H), jnp.float32),      # attention_cell
        pltpu.VMEM((B, H), jnp.float32),      # decoder_hidden
        pltpu.VMEM((B, H), jnp.float32),      # decoder_cell
        pltpu.VMEM((B, D), jnp.float32),      # context
        pltpu.VMEM((B, K_mix), jnp.float32),  # GMM mu_prev
    ]

    outs, stops, aligns = pl.pallas_call(
        _decoder_kernel,
        out_shape=out_shapes,
        grid_spec=pltpu.PrefetchScalarGridSpec(
            num_scalar_prefetch=0, grid=(Tp,),
            in_specs=in_specs, out_specs=out_specs, scratch_shapes=scratch),
        compiler_params=pltpu.CompilerParams(
            dimension_semantics=("arbitrary",)),   # sequential recurrence
    )(mem_steps, *resident)

    # _reshape_outputs
    outputs = jnp.transpose(outs, (1, 0, 2)).reshape(B, Tp * r, out_dim)
    outputs = jnp.transpose(outputs, (0, 2, 1))                         # (B, C, L)
    stop_tokens = jnp.transpose(stops[:, :, 0], (1, 0))                 # (B, Tp)
    alignments = jnp.transpose(aligns, (1, 0, 2))                       # (B, Tp, T)
    return outputs, stop_tokens, alignments


# ----------------------------------------------------------------------------
# Parameter construction (kernel-friendly layout, shapes match the nn.Module).
# ----------------------------------------------------------------------------
def init_params(key, *, num_phones, in_dim, hidden_dim, embedding_dim, r,
                attention_dim=128, num_mixtures=5):
    out_dim = num_phones + 2
    D, H, E, A, K = in_dim, hidden_dim, embedding_dim, attention_dim, num_mixtures
    Cp = out_dim * r
    keys = iter(jax.random.split(key, 32))

    def mat(shape):
        s = 1.0 / np.sqrt(shape[0])
        return jax.random.uniform(next(keys), shape, jnp.float32, -s, s)

    def vec(n):
        return jax.random.uniform(next(keys), (n,), jnp.float32, -0.05, 0.05)

    return dict(
        embedding=0.1 * jax.random.normal(next(keys), (out_dim, E), jnp.float32),
        go_init=0.1 * jax.random.normal(next(keys), (1, E * r), jnp.float32),
        att_rnn_init=0.1 * jax.random.normal(next(keys), (1, H), jnp.float32),
        dec_rnn_init=0.1 * jax.random.normal(next(keys), (1, H), jnp.float32),
        prenet_w=mat((E * r, E)), prenet_b=vec(E),
        att_w_ih_m=mat((E, 4 * H)), att_w_ih_c=mat((D, 4 * H)),
        att_w_hh=mat((H, 4 * H)), att_b=vec(4 * H),
        gmm_w1=mat((H, A)), gmm_b1=vec(A),
        gmm_w2=mat((A, 3 * K)), gmm_b2=vec(3 * K),
        dec_w_ih_h=mat((H, 4 * H)), dec_w_ih_c=mat((D, 4 * H)),
        dec_w_hh=mat((H, 4 * H)), dec_b=vec(4 * H),
        proj_w_h=mat((H, Cp)), proj_w_c=mat((D, Cp)), proj_b=vec(Cp),
        stop_w_h=mat((H, 1)), stop_w_o=mat((Cp, 1)), stop_b=vec(1),
    )


# ----------------------------------------------------------------------------
# Pure-JAX reference of the same eval-mode forward (for correctness checking).
# ----------------------------------------------------------------------------
def _reference_forward(params, inputs, memories, mask, *, r):
    p = params
    B, T, D = inputs.shape
    L = memories.shape[1]
    Tp = L // r
    E = p['embedding'].shape[1]
    out_dim = p['embedding'].shape[0]
    H = p['att_w_hh'].shape[0]
    Km = p['gmm_w2'].shape[1] // 3

    mem_emb = p['embedding'][memories]
    mem_r = jnp.transpose(mem_emb.reshape(B, Tp, r * E), (1, 0, 2))
    go = jnp.broadcast_to(p['go_init'], (B, r * E))[None]
    mem_steps = jnp.concatenate([go, mem_r[:-1]], axis=0)
    mask_f = mask.astype(jnp.float32)

    h_a = jnp.broadcast_to(p['att_rnn_init'], (B, H))
    c_a = jnp.zeros((B, H))
    h_d = jnp.broadcast_to(p['dec_rnn_init'], (B, H))
    c_d = jnp.zeros((B, H))
    ctx = jnp.zeros((B, D))
    mu = jnp.zeros((B, Km))

    def lstm(parts, h, c, w_hh, b):
        g = h @ w_hh + b
        for x, w in parts:
            g = g + x @ w
        i, f, gg, o = jnp.split(g, 4, axis=-1)
        c2 = _sigmoid(f) * c + _sigmoid(i) * jnp.tanh(gg)
        return _sigmoid(o) * jnp.tanh(c2), c2

    outs, stops, aligns = [], [], []
    for t in range(Tp):
        mem_p = jnp.maximum(mem_steps[t] @ p['prenet_w'] + p['prenet_b'], 0.0)
        h_a, c_a = lstm([(mem_p, p['att_w_ih_m']), (ctx, p['att_w_ih_c'])],
                        h_a, c_a, p['att_w_hh'], p['att_b'])
        inter = jnp.tanh(h_a @ p['gmm_w1'] + p['gmm_b1'])
        gbk = inter @ p['gmm_w2'] + p['gmm_b2']
        w_mix = _softmax_lastdim(gbk[:, :Km])
        delta = _softplus(gbk[:, Km:2 * Km])
        sigma = _softplus(gbk[:, 2 * Km:]) + 1e-5
        mu = mu + delta
        pos = jnp.arange(T, dtype=jnp.float32)[None, None, :]
        dens = jnp.exp(-0.5 * (pos - mu[:, :, None]) ** 2 / (sigma ** 2)[:, :, None])
        alpha = jnp.sum((w_mix / (sigma * _SQRT_2PI))[:, :, None] * dens, axis=1)
        alpha = alpha * mask_f
        ctx = jnp.sum(alpha[:, :, None] * inputs, axis=1)
        h_d, c_d = lstm([(h_a, p['dec_w_ih_h']), (ctx, p['dec_w_ih_c'])],
                        h_d, c_d, p['dec_w_hh'], p['dec_b'])
        dec_out = h_d @ p['proj_w_h'] + ctx @ p['proj_w_c'] + p['proj_b']
        stop = h_d @ p['stop_w_h'] + dec_out @ p['stop_w_o'] + p['stop_b']
        outs.append(dec_out)
        stops.append(stop[:, 0])
        aligns.append(alpha)

    outputs = jnp.stack(outs).transpose(1, 0, 2).reshape(B, Tp * r, out_dim)
    outputs = outputs.transpose(0, 2, 1)
    stop_tokens = jnp.stack(stops).transpose(1, 0)
    alignments = jnp.stack(aligns).transpose(1, 0, 2)
    return outputs, stop_tokens, alignments


if __name__ == "__main__":
    key = jax.random.PRNGKey(0)
    kp, kx, km = jax.random.split(key, 3)

    # Small shapes consistent with the module.
    B, T, D = 2, 16, 32          # batch, encoder length, encoder(+lang) dim
    H = 128                      # attention / decoder RNN dim (lane-aligned)
    E = 32                       # embedding dim
    num_phones = 10              # out_dim = 12
    r = 5                        # reduction factor
    Tp = 4                       # decoder steps
    L = Tp * r                   # target length (20)
    K_mix = 5

    params = init_params(kp, num_phones=num_phones, in_dim=D, hidden_dim=H,
                         embedding_dim=E, r=r, num_mixtures=K_mix)
    inputs = jax.random.normal(kx, (B, T, D), jnp.float32)
    memories = jax.random.randint(km, (B, L), 0, num_phones)
    lengths = jnp.array([T, T - 4])
    mask = jnp.arange(T)[None, :] < lengths[:, None]

    outputs, stop_tokens, alignments = decoder_forward(
        params, inputs, memories, mask, r=r)
    jax.block_until_ready((outputs, stop_tokens, alignments))
    assert outputs.shape == (B, num_phones + 2, L)
    assert stop_tokens.shape == (B, Tp)
    assert alignments.shape == (B, Tp, T)

    ref_o, ref_s, ref_a = _reference_forward(params, inputs, memories, mask, r=r)
    np.testing.assert_allclose(np.asarray(outputs), np.asarray(ref_o),
                               rtol=5e-3, atol=5e-3)
    np.testing.assert_allclose(np.asarray(stop_tokens), np.asarray(ref_s),
                               rtol=5e-3, atol=5e-3)
    np.testing.assert_allclose(np.asarray(alignments), np.asarray(ref_a),
                               rtol=5e-3, atol=5e-3)

    print("KERNEL_OK")
</pallas_src>

<mosaic_0001>
module attributes {stable_mosaic.version = 11 : i64} {
  func.func @_decoder_kernel(%arg0: i32, %arg1: memref<1x2x160xf32, #tpu.memory_space<vmem>>, %arg2: memref<2x16x32xf32, #tpu.memory_space<vmem>>, %arg3: memref<2x16xf32, #tpu.memory_space<vmem>>, %arg4: memref<160x32xf32, #tpu.memory_space<vmem>>, %arg5: memref<1x32xf32, #tpu.memory_space<vmem>>, %arg6: memref<32x512xf32, #tpu.memory_space<vmem>>, %arg7: memref<32x512xf32, #tpu.memory_space<vmem>>, %arg8: memref<128x512xf32, #tpu.memory_space<vmem>>, %arg9: memref<1x512xf32, #tpu.memory_space<vmem>>, %arg10: memref<128x128xf32, #tpu.memory_space<vmem>>, %arg11: memref<1x128xf32, #tpu.memory_space<vmem>>, %arg12: memref<128x15xf32, #tpu.memory_space<vmem>>, %arg13: memref<1x15xf32, #tpu.memory_space<vmem>>, %arg14: memref<128x512xf32, #tpu.memory_space<vmem>>, %arg15: memref<32x512xf32, #tpu.memory_space<vmem>>, %arg16: memref<128x512xf32, #tpu.memory_space<vmem>>, %arg17: memref<1x512xf32, #tpu.memory_space<vmem>>, %arg18: memref<128x60xf32, #tpu.memory_space<vmem>>, %arg19: memref<32x60xf32, #tpu.memory_space<vmem>>, %arg20: memref<1x60xf32, #tpu.memory_space<vmem>>, %arg21: memref<128x1xf32, #tpu.memory_space<vmem>>, %arg22: memref<60x1xf32, #tpu.memory_space<vmem>>, %arg23: memref<1x1xf32, #tpu.memory_space<vmem>>, %arg24: memref<1x128xf32, #tpu.memory_space<vmem>>, %arg25: memref<1x128xf32, #tpu.memory_space<vmem>>, %arg26: memref<1x2x60xf32, #tpu.memory_space<vmem>>, %arg27: memref<1x2x1xf32, #tpu.memory_space<vmem>>, %arg28: memref<1x2x16xf32, #tpu.memory_space<vmem>>, %arg29: memref<2x128xf32, #tpu.memory_space<vmem>>, %arg30: memref<2x128xf32, #tpu.memory_space<vmem>>, %arg31: memref<2x128xf32, #tpu.memory_space<vmem>>, %arg32: memref<2x128xf32, #tpu.memory_space<vmem>>, %arg33: memref<2x32xf32, #tpu.memory_space<vmem>>, %arg34: memref<2x5xf32, #tpu.memory_space<vmem>>) attributes {dimension_semantics = [#tpu.dimension_semantics<arbitrary>], iteration_bounds = array<i64: 4>, scalar_prefetch = 0 : i64, scratch_operands = 6 : i64, tpu.core_type = #tpu.core_type<tc>, window_params = [{transform_indices = @transform_0, window_bounds = array<i64: 1, 2, 160>}, {pipeline_mode = #tpu.pipeline_mode<synchronous>, transform_indices = @transform_1, window_bounds = array<i64: 2, 16, 32>}, {pipeline_mode = #tpu.pipeline_mode<synchronous>, transform_indices = @transform_2, window_bounds = array<i64: 2, 16>}, {pipeline_mode = #tpu.pipeline_mode<synchronous>, transform_indices = @transform_3, window_bounds = array<i64: 160, 32>}, {pipeline_mode = #tpu.pipeline_mode<synchronous>, transform_indices = @transform_4, window_bounds = array<i64: 1, 32>}, {pipeline_mode = #tpu.pipeline_mode<synchronous>, transform_indices = @transform_5, window_bounds = array<i64: 32, 512>}, {pipeline_mode = #tpu.pipeline_mode<synchronous>, transform_indices = @transform_6, window_bounds = array<i64: 32, 512>}, {pipeline_mode = #tpu.pipeline_mode<synchronous>, transform_indices = @transform_7, window_bounds = array<i64: 128, 512>}, {pipeline_mode = #tpu.pipeline_mode<synchronous>, transform_indices = @transform_8, window_bounds = array<i64: 1, 512>}, {pipeline_mode = #tpu.pipeline_mode<synchronous>, transform_indices = @transform_9, window_bounds = array<i64: 128, 128>}, {pipeline_mode = #tpu.pipeline_mode<synchronous>, transform_indices = @transform_10, window_bounds = array<i64: 1, 128>}, {pipeline_mode = #tpu.pipeline_mode<synchronous>, transform_indices = @transform_11, window_bounds = array<i64: 128, 15>}, {pipeline_mode = #tpu.pipeline_mode<synchronous>, transform_indices = @transform_12, window_bounds = array<i64: 1, 15>}, {pipeline_mode = #tpu.pipeline_mode<synchronous>, transform_indices = @transform_13, window_bounds = array<i64: 128, 512>}, {pipeline_mode = #tpu.pipeline_mode<synchronous>, transform_indices = @transform_14, window_bounds = array<i64: 32, 512>}, {pipeline_mode = #tpu.pipeline_mode<synchronous>, transform_indices = @transform_15, window_bounds = array<i64: 128, 512>}, {pipeline_mode = #tpu.pipeline_mode<synchronous>, transform_indices = @transform_16, window_bounds = array<i64: 1, 512>}, {pipeline_mode = #tpu.pipeline_mode<synchronous>, transform_indices = @transform_17, window_bounds = array<i64: 128, 60>}, {pipeline_mode = #tpu.pipeline_mode<synchronous>, transform_indices = @transform_18, window_bounds = array<i64: 32, 60>}, {pipeline_mode = #tpu.pipeline_mode<synchronous>, transform_indices = @transform_19, window_bounds = array<i64: 1, 60>}, {pipeline_mode = #tpu.pipeline_mode<synchronous>, transform_indices = @transform_20, window_bounds = array<i64: 128, 1>}, {pipeline_mode = #tpu.pipeline_mode<synchronous>, transform_indices = @transform_21, window_bounds = array<i64: 60, 1>}, {pipeline_mode = #tpu.pipeline_mode<synchronous>, transform_indices = @transform_22, window_bounds = array<i64: 1, 1>}, {pipeline_mode = #tpu.pipeline_mode<synchronous>, transform_indices = @transform_23, window_bounds = array<i64: 1, 128>}, {pipeline_mode = #tpu.pipeline_mode<synchronous>, transform_indices = @transform_24, window_bounds = array<i64: 1, 128>}, {transform_indices = @transform_25, window_bounds = array<i64: 1, 2, 60>}, {transform_indices = @transform_26, window_bounds = array<i64: 1, 2, 1>}, {transform_indices = @transform_27, window_bounds = array<i64: 1, 2, 16>}]} {
    %c0_i32 = arith.constant 0 : i32
    %0 = arith.cmpi eq, %arg0, %c0_i32 : i32
    %1 = arith.extui %0 : i1 to i32
    %c0_i32_0 = arith.constant 0 : i32
    %2 = arith.cmpi ne, %1, %c0_i32_0 : i32
    scf.if %2 {
      %c0_125 = arith.constant 0 : index
      %c0_126 = arith.constant 0 : index
      %206 = vector.load %arg24[%c0_125, %c0_126] : memref<1x128xf32, #tpu.memory_space<vmem>>, vector<1x128xf32>
      %207 = vector.shape_cast %206 : vector<1x128xf32> to vector<1x128xf32>
      %208 = vector.broadcast %207 : vector<1x128xf32> to vector<2x128xf32>
      %c0_127 = arith.constant 0 : index
      %c0_128 = arith.constant 0 : index
      %209 = vector.load %arg29[%c0_127, %c0_128] : memref<2x128xf32, #tpu.memory_space<vmem>>, vector<2x128xf32>
      tpu.vector_store %arg29[%c0_127, %c0_128], %208 {strides = array<i32>} : memref<2x128xf32, #tpu.memory_space<vmem>>, vector<2x128xf32>,
      %cst_129 = arith.constant 0.000000e+00 : f32
      %210 = vector.broadcast %cst_129 : f32 to vector<2x128xf32>
      %c0_130 = arith.constant 0 : index
      %c0_131 = arith.constant 0 : index
      %211 = vector.load %arg30[%c0_130, %c0_131] : memref<2x128xf32, #tpu.memory_space<vmem>>, vector<2x128xf32>
      tpu.vector_store %arg30[%c0_130, %c0_131], %210 {strides = array<i32>} : memref<2x128xf32, #tpu.memory_space<vmem>>, vector<2x128xf32>,
      %c0_132 = arith.constant 0 : index
      %c0_133 = arith.constant 0 : index
      %212 = vector.load %arg25[%c0_132, %c0_133] : memref<1x128xf32, #tpu.memory_space<vmem>>, vector<1x128xf32>
      %213 = vector.shape_cast %212 : vector<1x128xf32> to vector<1x128xf32>
      %214 = vector.broadcast %213 : vector<1x128xf32> to vector<2x128xf32>
      %c0_134 = arith.constant 0 : index
      %c0_135 = arith.constant 0 : index
      %215 = vector.load %arg31[%c0_134, %c0_135] : memref<2x128xf32, #tpu.memory_space<vmem>>, vector<2x128xf32>
      tpu.vector_store %arg31[%c0_134, %c0_135], %214 {strides = array<i32>} : memref<2x128xf32, #tpu.memory_space<vmem>>, vector<2x128xf32>,
      %cst_136 = arith.constant 0.000000e+00 : f32
      %216 = vector.broadcast %cst_136 : f32 to vector<2x128xf32>
      %c0_137 = arith.constant 0 : index
      %c0_138 = arith.constant 0 : index
      %217 = vector.load %arg32[%c0_137, %c0_138] : memref<2x128xf32, #tpu.memory_space<vmem>>, vector<2x128xf32>
      tpu.vector_store %arg32[%c0_137, %c0_138], %216 {strides = array<i32>} : memref<2x128xf32, #tpu.memory_space<vmem>>, vector<2x128xf32>,
      %cst_139 = arith.constant 0.000000e+00 : f32
      %218 = vector.broadcast %cst_139 : f32 to vector<2x32xf32>
      %c0_140 = arith.constant 0 : index
      %c0_141 = arith.constant 0 : index
      %219 = vector.load %arg33[%c0_140, %c0_141] : memref<2x32xf32, #tpu.memory_space<vmem>>, vector<2x32xf32>
      tpu.vector_store %arg33[%c0_140, %c0_141], %218 {strides = array<i32>} : memref<2x32xf32, #tpu.memory_space<vmem>>, vector<2x32xf32>,
      %cst_142 = arith.constant 0.000000e+00 : f32
      %220 = vector.broadcast %cst_142 : f32 to vector<2x5xf32>
      %c0_143 = arith.constant 0 : index
      %c0_144 = arith.constant 0 : index
      %221 = vector.load %arg34[%c0_143, %c0_144] : memref<2x5xf32, #tpu.memory_space<vmem>>, vector<2x5xf32>
      tpu.vector_store %arg34[%c0_143, %c0_144], %220 {strides = array<i32>} : memref<2x5xf32, #tpu.memory_space<vmem>>, vector<2x5xf32>,
    } else {
    }
    %c0 = arith.constant 0 : index
    %c0_1 = arith.constant 0 : index
    %c0_2 = arith.constant 0 : index
    %3 = vector.load %arg1[%c0, %c0_1, %c0_2] : memref<1x2x160xf32, #tpu.memory_space<vmem>>, vector<1x2x160xf32>
    %4 = vector.shape_cast %3 : vector<1x2x160xf32> to vector<2x160xf32>
    %c0_3 = arith.constant 0 : index
    %c0_4 = arith.constant 0 : index
    %5 = vector.load %arg4[%c0_3, %c0_4] : memref<160x32xf32, #tpu.memory_space<vmem>>, vector<160x32xf32>
    %cst = arith.constant dense<0.000000e+00> : vector<2x32xf32>
    %6 = tpu.matmul %4, %5, %cst {dimension_numbers = #tpu.dot_dimension_numbers<[1], [0], [0], [1], [0, 0, 1, 1], [], []>} : vector<2x160xf32>, vector<160x32xf32>, vector<2x32xf32> -> vector<2x32xf32>
    %c0_5 = arith.constant 0 : index
    %c0_6 = arith.constant 0 : index
    %7 = vector.load %arg5[%c0_5, %c0_6] : memref<1x32xf32, #tpu.memory_space<vmem>>, vector<1x32xf32>
    %8 = vector.broadcast %7 : vector<1x32xf32> to vector<2x32xf32>
    %9 = arith.addf %6, %8 : vector<2x32xf32>
    %cst_7 = arith.constant 0.000000e+00 : f32
    %10 = vector.broadcast %cst_7 : f32 to vector<2x32xf32>
    %11 = arith.maximumf %9, %10 : vector<2x32xf32>
    %c0_8 = arith.constant 0 : index
    %c0_9 = arith.constant 0 : index
    %12 = vector.load %arg33[%c0_8, %c0_9] : memref<2x32xf32, #tpu.memory_space<vmem>>, vector<2x32xf32>
    %c0_10 = arith.constant 0 : index
    %c0_11 = arith.constant 0 : index
    %13 = vector.load %arg6[%c0_10, %c0_11] : memref<32x512xf32, #tpu.memory_space<vmem>>, vector<32x512xf32>
    %cst_12 = arith.constant dense<0.000000e+00> : vector<2x512xf32>
    %14 = tpu.matmul %11, %13, %cst_12 {dimension_numbers = #tpu.dot_dimension_numbers<[1], [0], [0], [1], [0, 0, 1, 1], [], []>} : vector<2x32xf32>, vector<32x512xf32>, vector<2x512xf32> -> vector<2x512xf32>
    %c0_13 = arith.constant 0 : index
    %c0_14 = arith.constant 0 : index
    %15 = vector.load %arg7[%c0_13, %c0_14] : memref<32x512xf32, #tpu.memory_space<vmem>>, vector<32x512xf32>
    %cst_15 = arith.constant dense<0.000000e+00> : vector<2x512xf32>
    %16 = tpu.matmul %12, %15, %cst_15 {dimension_numbers = #tpu.dot_dimension_numbers<[1], [0], [0], [1], [0, 0, 1, 1], [], []>} : vector<2x32xf32>, vector<32x512xf32>, vector<2x512xf32> -> vector<2x512xf32>
    %17 = arith.addf %14, %16 : vector<2x512xf32>
    %c0_16 = arith.constant 0 : index
    %c0_17 = arith.constant 0 : index
    %18 = vector.load %arg29[%c0_16, %c0_17] : memref<2x128xf32, #tpu.memory_space<vmem>>, vector<2x128xf32>
    %c0_18 = arith.constant 0 : index
    %c0_19 = arith.constant 0 : index
    %19 = vector.load %arg8[%c0_18, %c0_19] : memref<128x512xf32, #tpu.memory_space<vmem>>, vector<128x512xf32>
    %cst_20 = arith.constant dense<0.000000e+00> : vector<2x512xf32>
    %20 = tpu.matmul %18, %19, %cst_20 {dimension_numbers = #tpu.dot_dimension_numbers<[1], [0], [0], [1], [0, 0, 1, 1], [], []>} : vector<2x128xf32>, vector<128x512xf32>, vector<2x512xf32> -> vector<2x512xf32>
    %21 = arith.addf %17, %20 : vector<2x512xf32>
    %c0_21 = arith.constant 0 : index
    %c0_22 = arith.constant 0 : index
    %22 = vector.load %arg9[%c0_21, %c0_22] : memref<1x512xf32, #tpu.memory_space<vmem>>, vector<1x512xf32>
    %23 = vector.broadcast %22 : vector<1x512xf32> to vector<2x512xf32>
    %24 = arith.addf %21, %23 : vector<2x512xf32>
    %25 = vector.extract_strided_slice %24 {offsets = [0, 0], sizes = [2, 128], strides = [1, 1]} : vector<2x512xf32> to vector<2x128xf32>
    %cst_23 = arith.constant 5.000000e-01 : f32
    %26 = vector.broadcast %cst_23 : f32 to vector<2x128xf32>
    %27 = arith.mulf %26, %25 : vector<2x128xf32>
    %28 = math.tanh %27 : vector<2x128xf32>
    %cst_24 = arith.constant 1.000000e+00 : f32
    %29 = vector.broadcast %cst_24 : f32 to vector<2x128xf32>
    %30 = arith.addf %28, %29 : vector<2x128xf32>
    %cst_25 = arith.constant 5.000000e-01 : f32
    %31 = vector.broadcast %cst_25 : f32 to vector<2x128xf32>
    %32 = arith.mulf %31, %30 : vector<2x128xf32>
    %33 = vector.extract_strided_slice %24 {offsets = [0, 128], sizes = [2, 128], strides = [1, 1]} : vector<2x512xf32> to vector<2x128xf32>
    %cst_26 = arith.constant 5.000000e-01 : f32
    %34 = vector.broadcast %cst_26 : f32 to vector<2x128xf32>
    %35 = arith.mulf %34, %33 : vector<2x128xf32>
    %36 = math.tanh %35 : vector<2x128xf32>
    %cst_27 = arith.constant 1.000000e+00 : f32
    %37 = vector.broadcast %cst_27 : f32 to vector<2x128xf32>
    %38 = arith.addf %36, %37 : vector<2x128xf32>
    %cst_28 = arith.constant 5.000000e-01 : f32
    %39 = vector.broadcast %cst_28 : f32 to vector<2x128xf32>
    %40 = arith.mulf %39, %38 : vector<2x128xf32>
    %41 = vector.extract_strided_slice %24 {offsets = [0, 256], sizes = [2, 128], strides = [1, 1]} : vector<2x512xf32> to vector<2x128xf32>
    %42 = math.tanh %41 : vector<2x128xf32>
    %43 = vector.extract_strided_slice %24 {offsets = [0, 384], sizes = [2, 128], strides = [1, 1]} : vector<2x512xf32> to vector<2x128xf32>
    %cst_29 = arith.constant 5.000000e-01 : f32
    %44 = vector.broadcast %cst_29 : f32 to vector<2x128xf32>
    %45 = arith.mulf %44, %43 : vector<2x128xf32>
    %46 = math.tanh %45 : vector<2x128xf32>
    %cst_30 = arith.constant 1.000000e+00 : f32
    %47 = vector.broadcast %cst_30 : f32 to vector<2x128xf32>
    %48 = arith.addf %46, %47 : vector<2x128xf32>
    %cst_31 = arith.constant 5.000000e-01 : f32
    %49 = vector.broadcast %cst_31 : f32 to vector<2x128xf32>
    %50 = arith.mulf %49, %48 : vector<2x128xf32>
    %c0_32 = arith.constant 0 : index
    %c0_33 = arith.constant 0 : index
    %51 = vector.load %arg30[%c0_32, %c0_33] : memref<2x128xf32, #tpu.memory_space<vmem>>, vector<2x128xf32>
    %52 = arith.mulf %40, %51 : vector<2x128xf32>
    %53 = arith.mulf %32, %42 : vector<2x128xf32>
    %54 = arith.addf %52, %53 : vector<2x128xf32>
    %55 = math.tanh %54 : vector<2x128xf32>
    %56 = arith.mulf %50, %55 : vector<2x128xf32>
    %c0_34 = arith.constant 0 : index
    %c0_35 = arith.constant 0 : index
    %57 = vector.load %arg29[%c0_34, %c0_35] : memref<2x128xf32, #tpu.memory_space<vmem>>, vector<2x128xf32>
    tpu.vector_store %arg29[%c0_34, %c0_35], %56 {strides = array<i32>} : memref<2x128xf32, #tpu.memory_space<vmem>>, vector<2x128xf32>,
    %c0_36 = arith.constant 0 : index
    %c0_37 = arith.constant 0 : index
    %58 = vector.load %arg30[%c0_36, %c0_37] : memref<2x128xf32, #tpu.memory_space<vmem>>, vector<2x128xf32>
    tpu.vector_store %arg30[%c0_36, %c0_37], %54 {strides = array<i32>} : memref<2x128xf32, #tpu.memory_space<vmem>>, vector<2x128xf32>,
    %c0_38 = arith.constant 0 : index
    %c0_39 = arith.constant 0 : index
    %59 = vector.load %arg10[%c0_38, %c0_39] : memref<128x128xf32, #tpu.memory_space<vmem>>, vector<128x128xf32>
    %cst_40 = arith.constant dense<0.000000e+00> : vector<2x128xf32>
    %60 = tpu.matmul %56, %59, %cst_40 {dimension_numbers = #tpu.dot_dimension_numbers<[1], [0], [0], [1], [0, 0, 1, 1], [], []>} : vector<2x128xf32>, vector<128x128xf32>, vector<2x128xf32> -> vector<2x128xf32>
    %c0_41 = arith.constant 0 : index
    %c0_42 = arith.constant 0 : index
    %61 = vector.load %arg11[%c0_41, %c0_42] : memref<1x128xf32, #tpu.memory_space<vmem>>, vector<1x128xf32>
    %62 = vector.broadcast %61 : vector<1x128xf32> to vector<2x128xf32>
    %63 = arith.addf %60, %62 : vector<2x128xf32>
    %64 = math.tanh %63 : vector<2x128xf32>
    %c0_43 = arith.constant 0 : index
    %c0_44 = arith.constant 0 : index
    %65 = vector.load %arg12[%c0_43, %c0_44] : memref<128x15xf32, #tpu.memory_space<vmem>>, vector<128x15xf32>
    %cst_45 = arith.constant dense<0.000000e+00> : vector<2x15xf32>
    %66 = tpu.matmul %64, %65, %cst_45 {dimension_numbers = #tpu.dot_dimension_numbers<[1], [0], [0], [1], [0, 0, 1, 1], [], []>} : vector<2x128xf32>, vector<128x15xf32>, vector<2x15xf32> -> vector<2x15xf32>
    %c0_46 = arith.constant 0 : index
    %c0_47 = arith.constant 0 : index
    %67 = vector.load %arg13[%c0_46, %c0_47] : memref<1x15xf32, #tpu.memory_space<vmem>>, vector<1x15xf32>
    %68 = vector.broadcast %67 : vector<1x15xf32> to vector<2x15xf32>
    %69 = arith.addf %66, %68 : vector<2x15xf32>
    %70 = vector.extract_strided_slice %69 {offsets = [0, 0], sizes = [2, 5], strides = [1, 1]} : vector<2x15xf32> to vector<2x5xf32>
    %cst_48 = arith.constant dense<0xFF800000> : vector<2xf32>
    %71 = vector.multi_reduction <maximumf>, %70, %cst_48 [1] : vector<2x5xf32> to vector<2xf32>
    %72 = vector.shape_cast %71 : vector<2xf32> to vector<2x1xf32>
    %73 = vector.broadcast %72 : vector<2x1xf32> to vector<2x5xf32>
    %74 = arith.subf %70, %73 : vector<2x5xf32>
    %75 = math.exp %74 : vector<2x5xf32>
    %cst_49 = arith.constant dense<0.000000e+00> : vector<2xf32>
    %76 = vector.multi_reduction <add>, %75, %cst_49 [1] : vector<2x5xf32> to vector<2xf32>
    %77 = vector.shape_cast %76 : vector<2xf32> to vector<2x1xf32>
    %78 = vector.broadcast %77 : vector<2x1xf32> to vector<2x5xf32>
    %79 = arith.divf %75, %78 : vector<2x5xf32>
    %80 = vector.extract_strided_slice %69 {offsets = [0, 5], sizes = [2, 5], strides = [1, 1]} : vector<2x15xf32> to vector<2x5xf32>
    %cst_50 = arith.constant 0.000000e+00 : f32
    %81 = vector.broadcast %cst_50 : f32 to vector<2x5xf32>
    %82 = arith.maximumf %80, %81 : vector<2x5xf32>
    %83 = math.absf %80 : vector<2x5xf32>
    %cst_51 = arith.constant 0.000000e+00 : f32
    %84 = vector.broadcast %cst_51 : f32 to vector<2x5xf32>
    %85 = arith.subf %84, %83 : vector<2x5xf32>
    %86 = math.exp %85 : vector<2x5xf32>
    %cst_52 = arith.constant 1.000000e+00 : f32
    %87 = vector.broadcast %cst_52 : f32 to vector<2x5xf32>
    %88 = arith.addf %87, %86 : vector<2x5xf32>
    %89 = math.log %88 : vector<2x5xf32>
    %90 = arith.addf %82, %89 : vector<2x5xf32>
    %91 = vector.extract_strided_slice %69 {offsets = [0, 10], sizes = [2, 5], strides = [1, 1]} : vector<2x15xf32> to vector<2x5xf32>
    %cst_53 = arith.constant 0.000000e+00 : f32
    %92 = vector.broadcast %cst_53 : f32 to vector<2x5xf32>
    %93 = arith.maximumf %91, %92 : vector<2x5xf32>
    %94 = math.absf %91 : vector<2x5xf32>
    %cst_54 = arith.constant 0.000000e+00 : f32
    %95 = vector.broadcast %cst_54 : f32 to vector<2x5xf32>
    %96 = arith.subf %95, %94 : vector<2x5xf32>
    %97 = math.exp %96 : vector<2x5xf32>
    %cst_55 = arith.constant 1.000000e+00 : f32
    %98 = vector.broadcast %cst_55 : f32 to vector<2x5xf32>
    %99 = arith.addf %98, %97 : vector<2x5xf32>
    %100 = math.log %99 : vector<2x5xf32>
    %101 = arith.addf %93, %100 : vector<2x5xf32>
    %cst_56 = arith.constant 9.99999974E-6 : f32
    %102 = vector.broadcast %cst_56 : f32 to vector<2x5xf32>
    %103 = arith.addf %101, %102 : vector<2x5xf32>
    %c0_57 = arith.constant 0 : index
    %c0_58 = arith.constant 0 : index
    %104 = vector.load %arg34[%c0_57, %c0_58] : memref<2x5xf32, #tpu.memory_space<vmem>>, vector<2x5xf32>
    %105 = arith.addf %104, %90 : vector<2x5xf32>
    %c0_59 = arith.constant 0 : index
    %c0_60 = arith.constant 0 : index
    %106 = vector.load %arg34[%c0_59, %c0_60] : memref<2x5xf32, #tpu.memory_space<vmem>>, vector<2x5xf32>
    tpu.vector_store %arg34[%c0_59, %c0_60], %105 {strides = array<i32>} : memref<2x5xf32, #tpu.memory_space<vmem>>, vector<2x5xf32>,
    %107 = tpu.iota {dimensions = array<i32: 2>} : vector<2x5x16xi32>
    %108 = arith.sitofp %107 : vector<2x5x16xi32> to vector<2x5x16xf32>
    %109 = vector.shape_cast %105 : vector<2x5xf32> to vector<2x5x1xf32>
    %110 = vector.broadcast %109 : vector<2x5x1xf32> to vector<2x5x16xf32>
    %111 = arith.subf %108, %110 : vector<2x5x16xf32>
    %112 = arith.mulf %111, %111 : vector<2x5x16xf32>
    %cst_61 = arith.constant -5.000000e-01 : f32
    %113 = vector.broadcast %cst_61 : f32 to vector<2x5x16xf32>
    %114 = arith.mulf %113, %112 : vector<2x5x16xf32>
    %115 = arith.mulf %103, %103 : vector<2x5xf32>
    %116 = vector.shape_cast %115 : vector<2x5xf32> to vector<2x5x1xf32>
    %117 = vector.broadcast %116 : vector<2x5x1xf32> to vector<2x5x16xf32>
    %118 = arith.divf %114, %117 : vector<2x5x16xf32>
    %119 = math.exp %118 : vector<2x5x16xf32>
    %cst_62 = arith.constant 2.50662827 : f32
    %120 = vector.broadcast %cst_62 : f32 to vector<2x5xf32>
    %121 = arith.mulf %103, %120 : vector<2x5xf32>
    %122 = arith.divf %79, %121 : vector<2x5xf32>
    %123 = vector.shape_cast %122 : vector<2x5xf32> to vector<2x5x1xf32>
    %124 = vector.broadcast %123 : vector<2x5x1xf32> to vector<2x5x16xf32>
    %125 = arith.mulf %124, %119 : vector<2x5x16xf32>
    %cst_63 = arith.constant dense<0.000000e+00> : vector<2x16xf32>
    %126 = vector.multi_reduction <add>, %125, %cst_63 [1] : vector<2x5x16xf32> to vector<2x16xf32>
    %c0_64 = arith.constant 0 : index
    %c0_65 = arith.constant 0 : index
    %127 = vector.load %arg3[%c0_64, %c0_65] : memref<2x16xf32, #tpu.memory_space<vmem>>, vector<2x16xf32>
    %128 = arith.mulf %126, %127 : vector<2x16xf32>
    %129 = vector.shape_cast %128 : vector<2x16xf32> to vector<2x16x1xf32>
    %c0_66 = arith.constant 0 : index
    %c0_67 = arith.constant 0 : index
    %c0_68 = arith.constant 0 : index
    %130 = vector.load %arg2[%c0_66, %c0_67, %c0_68] : memref<2x16x32xf32, #tpu.memory_space<vmem>>, vector<2x16x32xf32>
    %131 = vector.broadcast %129 : vector<2x16x1xf32> to vector<2x16x32xf32>
    %132 = arith.mulf %131, %130 : vector<2x16x32xf32>
    %cst_69 = arith.constant dense<0.000000e+00> : vector<2x32xf32>
    %133 = vector.multi_reduction <add>, %132, %cst_69 [1] : vector<2x16x32xf32> to vector<2x32xf32>
    %c0_70 = arith.constant 0 : index
    %c0_71 = arith.constant 0 : index
    %134 = vector.load %arg33[%c0_70, %c0_71] : memref<2x32xf32, #tpu.memory_space<vmem>>, vector<2x32xf32>
    tpu.vector_store %arg33[%c0_70, %c0_71], %133 {strides = array<i32>} : memref<2x32xf32, #tpu.memory_space<vmem>>, vector<2x32xf32>,
    %c0_72 = arith.constant 0 : index
    %c0_73 = arith.constant 0 : index
    %135 = vector.load %arg14[%c0_72, %c0_73] : memref<128x512xf32, #tpu.memory_space<vmem>>, vector<128x512xf32>
    %cst_74 = arith.constant dense<0.000000e+00> : vector<2x512xf32>
    %136 = tpu.matmul %56, %135, %cst_74 {dimension_numbers = #tpu.dot_dimension_numbers<[1], [0], [0], [1], [0, 0, 1, 1], [], []>} : vector<2x128xf32>, vector<128x512xf32>, vector<2x512xf32> -> vector<2x512xf32>
    %c0_75 = arith.constant 0 : index
    %c0_76 = arith.constant 0 : index
    %137 = vector.load %arg15[%c0_75, %c0_76] : memref<32x512xf32, #tpu.memory_space<vmem>>, vector<32x512xf32>
    %cst_77 = arith.constant dense<0.000000e+00> : vector<2x512xf32>
    %138 = tpu.matmul %133, %137, %cst_77 {dimension_numbers = #tpu.dot_dimension_numbers<[1], [0], [0], [1], [0, 0, 1, 1], [], []>} : vector<2x32xf32>, vector<32x512xf32>, vector<2x512xf32> -> vector<2x512xf32>
    %139 = arith.addf %136, %138 : vector<2x512xf32>
    %c0_78 = arith.constant 0 : index
    %c0_79 = arith.constant 0 : index
    %140 = vector.load %arg31[%c0_78, %c0_79] : memref<2x128xf32, #tpu.memory_space<vmem>>, vector<2x128xf32>
    %c0_80 = arith.constant 0 : index
    %c0_81 = arith.constant 0 : index
    %141 = vector.load %arg16[%c0_80, %c0_81] : memref<128x512xf32, #tpu.memory_space<vmem>>, vector<128x512xf32>
    %cst_82 = arith.constant dense<0.000000e+00> : vector<2x512xf32>
    %142 = tpu.matmul %140, %141, %cst_82 {dimension_numbers = #tpu.dot_dimension_numbers<[1], [0], [0], [1], [0, 0, 1, 1], [], []>} : vector<2x128xf32>, vector<128x512xf32>, vector<2x512xf32> -> vector<2x512xf32>
    %143 = arith.addf %139, %142 : vector<2x512xf32>
    %c0_83 = arith.constant 0 : index
    %c0_84 = arith.constant 0 : index
    %144 = vector.load %arg17[%c0_83, %c0_84] : memref<1x512xf32, #tpu.memory_space<vmem>>, vector<1x512xf32>
    %145 = vector.broadcast %144 : vector<1x512xf32> to vector<2x512xf32>
    %146 = arith.addf %143, %145 : vector<2x512xf32>
    %147 = vector.extract_strided_slice %146 {offsets = [0, 0], sizes = [2, 128], strides = [1, 1]} : vector<2x512xf32> to vector<2x128xf32>
    %cst_85 = arith.constant 5.000000e-01 : f32
    %148 = vector.broadcast %cst_85 : f32 to vector<2x128xf32>
    %149 = arith.mulf %148, %147 : vector<2x128xf32>
    %150 = math.tanh %149 : vector<2x128xf32>
    %cst_86 = arith.constant 1.000000e+00 : f32
    %151 = vector.broadcast %cst_86 : f32 to vector<2x128xf32>
    %152 = arith.addf %150, %151 : vector<2x128xf32>
    %cst_87 = arith.constant 5.000000e-01 : f32
    %153 = vector.broadcast %cst_87 : f32 to vector<2x128xf32>
    %154 = arith.mulf %153, %152 : vector<2x128xf32>
    %155 = vector.extract_strided_slice %146 {offsets = [0, 128], sizes = [2, 128], strides = [1, 1]} : vector<2x512xf32> to vector<2x128xf32>
    %cst_88 = arith.constant 5.000000e-01 : f32
    %156 = vector.broadcast %cst_88 : f32 to vector<2x128xf32>
    %157 = arith.mulf %156, %155 : vector<2x128xf32>
    %158 = math.tanh %157 : vector<2x128xf32>
    %cst_89 = arith.constant 1.000000e+00 : f32
    %159 = vector.broadcast %cst_89 : f32 to vector<2x128xf32>
    %160 = arith.addf %158, %159 : vector<2x128xf32>
    %cst_90 = arith.constant 5.000000e-01 : f32
    %161 = vector.broadcast %cst_90 : f32 to vector<2x128xf32>
    %162 = arith.mulf %161, %160 : vector<2x128xf32>
    %163 = vector.extract_strided_slice %146 {offsets = [0, 256], sizes = [2, 128], strides = [1, 1]} : vector<2x512xf32> to vector<2x128xf32>
    %164 = math.tanh %163 : vector<2x128xf32>
    %165 = vector.extract_strided_slice %146 {offsets = [0, 384], sizes = [2, 128], strides = [1, 1]} : vector<2x512xf32> to vector<2x128xf32>
    %cst_91 = arith.constant 5.000000e-01 : f32
    %166 = vector.broadcast %cst_91 : f32 to vector<2x128xf32>
    %167 = arith.mulf %166, %165 : vector<2x128xf32>
    %168 = math.tanh %167 : vector<2x128xf32>
    %cst_92 = arith.constant 1.000000e+00 : f32
    %169 = vector.broadcast %cst_92 : f32 to vector<2x128xf32>
    %170 = arith.addf %168, %169 : vector<2x128xf32>
    %cst_93 = arith.constant 5.000000e-01 : f32
    %171 = vector.broadcast %cst_93 : f32 to vector<2x128xf32>
    %172 = arith.mulf %171, %170 : vector<2x128xf32>
    %c0_94 = arith.constant 0 : index
    %c0_95 = arith.constant 0 : index
    %173 = vector.load %arg32[%c0_94, %c0_95] : memref<2x128xf32, #tpu.memory_space<vmem>>, vector<2x128xf32>
    %174 = arith.mulf %162, %173 : vector<2x128xf32>
    %175 = arith.mulf %154, %164 : vector<2x128xf32>
    %176 = arith.addf %174, %175 : vector<2x128xf32>
    %177 = math.tanh %176 : vector<2x128xf32>
    %178 = arith.mulf %172, %177 : vector<2x128xf32>
    %c0_96 = arith.constant 0 : index
    %c0_97 = arith.constant 0 : index
    %179 = vector.load %arg31[%c0_96, %c0_97] : memref<2x128xf32, #tpu.memory_space<vmem>>, vector<2x128xf32>
    tpu.vector_store %arg31[%c0_96, %c0_97], %178 {strides = array<i32>} : memref<2x128xf32, #tpu.memory_space<vmem>>, vector<2x128xf32>,
    %c0_98 = arith.constant 0 : index
    %c0_99 = arith.constant 0 : index
    %180 = vector.load %arg32[%c0_98, %c0_99] : memref<2x128xf32, #tpu.memory_space<vmem>>, vector<2x128xf32>
    tpu.vector_store %arg32[%c0_98, %c0_99], %176 {strides = array<i32>} : memref<2x128xf32, #tpu.memory_space<vmem>>, vector<2x128xf32>,
    %c0_100 = arith.constant 0 : index
    %c0_101 = arith.constant 0 : index
    %181 = vector.load %arg18[%c0_100, %c0_101] : memref<128x60xf32, #tpu.memory_space<vmem>>, vector<128x60xf32>
    %cst_102 = arith.constant dense<0.000000e+00> : vector<2x60xf32>
    %182 = tpu.matmul %178, %181, %cst_102 {dimension_numbers = #tpu.dot_dimension_numbers<[1], [0], [0], [1], [0, 0, 1, 1], [], []>} : vector<2x128xf32>, vector<128x60xf32>, vector<2x60xf32> -> vector<2x60xf32>
    %c0_103 = arith.constant 0 : index
    %c0_104 = arith.constant 0 : index
    %183 = vector.load %arg19[%c0_103, %c0_104] : memref<32x60xf32, #tpu.memory_space<vmem>>, vector<32x60xf32>
    %cst_105 = arith.constant dense<0.000000e+00> : vector<2x60xf32>
    %184 = tpu.matmul %133, %183, %cst_105 {dimension_numbers = #tpu.dot_dimension_numbers<[1], [0], [0], [1], [0, 0, 1, 1], [], []>} : vector<2x32xf32>, vector<32x60xf32>, vector<2x60xf32> -> vector<2x60xf32>
    %185 = arith.addf %182, %184 : vector<2x60xf32>
    %c0_106 = arith.constant 0 : index
    %c0_107 = arith.constant 0 : index
    %186 = vector.load %arg20[%c0_106, %c0_107] : memref<1x60xf32, #tpu.memory_space<vmem>>, vector<1x60xf32>
    %187 = vector.broadcast %186 : vector<1x60xf32> to vector<2x60xf32>
    %188 = arith.addf %185, %187 : vector<2x60xf32>
    %c0_108 = arith.constant 0 : index
    %c0_109 = arith.constant 0 : index
    %189 = vector.load %arg21[%c0_108, %c0_109] : memref<128x1xf32, #tpu.memory_space<vmem>>, vector<128x1xf32>
    %cst_110 = arith.constant dense<0.000000e+00> : vector<2x1xf32>
    %190 = tpu.matmul %178, %189, %cst_110 {dimension_numbers = #tpu.dot_dimension_numbers<[1], [0], [0], [1], [0, 0, 1, 1], [], []>} : vector<2x128xf32>, vector<128x1xf32>, vector<2x1xf32> -> vector<2x1xf32>
    %c0_111 = arith.constant 0 : index
    %c0_112 = arith.constant 0 : index
    %191 = vector.load %arg22[%c0_111, %c0_112] : memref<60x1xf32, #tpu.memory_space<vmem>>, vector<60x1xf32>
    %cst_113 = arith.constant dense<0.000000e+00> : vector<2x1xf32>
    %192 = tpu.matmul %188, %191, %cst_113 {dimension_numbers = #tpu.dot_dimension_numbers<[1], [0], [0], [1], [0, 0, 1, 1], [], []>} : vector<2x60xf32>, vector<60x1xf32>, vector<2x1xf32> -> vector<2x1xf32>
    %193 = arith.addf %190, %192 : vector<2x1xf32>
    %c0_114 = arith.constant 0 : index
    %c0_115 = arith.constant 0 : index
    %194 = vector.load %arg23[%c0_114, %c0_115] : memref<1x1xf32, #tpu.memory_space<vmem>>, vector<1x1xf32>
    %195 = vector.broadcast %194 : vector<1x1xf32> to vector<2x1xf32>
    %196 = arith.addf %193, %195 : vector<2x1xf32>
    %c0_116 = arith.constant 0 : index
    %c0_117 = arith.constant 0 : index
    %c0_118 = arith.constant 0 : index
    %197 = vector.load %arg26[%c0_116, %c0_117, %c0_118] : memref<1x2x60xf32, #tpu.memory_space<vmem>>, vector<1x2x60xf32>
    %198 = vector.shape_cast %197 : vector<1x2x60xf32> to vector<2x60xf32>
    %199 = vector.shape_cast %188 : vector<2x60xf32> to vector<1x2x60xf32>
    tpu.vector_store %arg26[%c0_116, %c0_117, %c0_118], %199 {strides = array<i32>} : memref<1x2x60xf32, #tpu.memory_space<vmem>>, vector<1x2x60xf32>,
    %c0_119 = arith.constant 0 : index
    %c0_120 = arith.constant 0 : index
    %c0_121 = arith.constant 0 : index
    %200 = vector.load %arg27[%c0_119, %c0_120, %c0_121] : memref<1x2x1xf32, #tpu.memory_space<vmem>>, vector<1x2x1xf32>
    %201 = vector.shape_cast %200 : vector<1x2x1xf32> to vector<2x1xf32>
    %202 = vector.shape_cast %196 : vector<2x1xf32> to vector<1x2x1xf32>
    tpu.vector_store %arg27[%c0_119, %c0_120, %c0_121], %202 {strides = array<i32>} : memref<1x2x1xf32, #tpu.memory_space<vmem>>, vector<1x2x1xf32>,
    %c0_122 = arith.constant 0 : index
    %c0_123 = arith.constant 0 : index
    %c0_124 = arith.constant 0 : index
    %203 = vector.load %arg28[%c0_122, %c0_123, %c0_124] : memref<1x2x16xf32, #tpu.memory_space<vmem>>, vector<1x2x16xf32>
    %204 = vector.shape_cast %203 : vector<1x2x16xf32> to vector<2x16xf32>
    %205 = vector.shape_cast %128 : vector<2x16xf32> to vector<1x2x16xf32>
    tpu.vector_store %arg28[%c0_122, %c0_123, %c0_124], %205 {strides = array<i32>} : memref<1x2x16xf32, #tpu.memory_space<vmem>>, vector<1x2x16xf32>,
    return
  }
  func.func @transform_0(%arg0: i32) -> (i32, i32, i32) {
    %c0_i32 = arith.constant 0 : i32
    %c0_i32_0 = arith.constant 0 : i32
    %c0_i32_1 = arith.constant 0 : i32
    return %arg0, %c0_i32, %c0_i32_0 : i32, i32, i32
  }
  func.func @transform_1(%arg0: i32) -> (i32, i32, i32) {
    %c0_i32 = arith.constant 0 : i32
    %c0_i32_0 = arith.constant 0 : i32
    %c0_i32_1 = arith.constant 0 : i32
    %c0_i32_2 = arith.constant 0 : i32
    return %c0_i32, %c0_i32_0, %c0_i32_1 : i32, i32, i32
  }
  func.func @transform_2(%arg0: i32) -> (i32, i32) {
    %c0_i32 = arith.constant 0 : i32
    %c0_i32_0 = arith.constant 0 : i32
    %c0_i32_1 = arith.constant 0 : i32
    return %c0_i32, %c0_i32_0 : i32, i32
  }
  func.func @transform_3(%arg0: i32) -> (i32, i32) {
    %c0_i32 = arith.constant 0 : i32
    %c0_i32_0 = arith.constant 0 : i32
    %c0_i32_1 = arith.constant 0 : i32
    return %c0_i32, %c0_i32_0 : i32, i32
  }
  func.func @transform_4(%arg0: i32) -> (i32, i32) {
    %c0_i32 = arith.constant 0 : i32
    %c0_i32_0 = arith.constant 0 : i32
    %c0_i32_1 = arith.constant 0 : i32
    return %c0_i32, %c0_i32_0 : i32, i32
  }
  func.func @transform_5(%arg0: i32) -> (i32, i32) {
    %c0_i32 = arith.constant 0 : i32
    %c0_i32_0 = arith.constant 0 : i32
    %c0_i32_1 = arith.constant 0 : i32
    return %c0_i32, %c0_i32_0 : i32, i32
  }
  func.func @transform_6(%arg0: i32) -> (i32, i32) {
    %c0_i32 = arith.constant 0 : i32
    %c0_i32_0 = arith.constant 0 : i32
    %c0_i32_1 = arith.constant 0 : i32
    return %c0_i32, %c0_i32_0 : i32, i32
  }
  func.func @transform_7(%arg0: i32) -> (i32, i32) {
    %c0_i32 = arith.constant 0 : i32
    %c0_i32_0 = arith.constant 0 : i32
    %c0_i32_1 = arith.constant 0 : i32
    return %c0_i32, %c0_i32_0 : i32, i32
  }
  func.func @transform_8(%arg0: i32) -> (i32, i32) {
    %c0_i32 = arith.constant 0 : i32
    %c0_i32_0 = arith.constant 0 : i32
    %c0_i32_1 = arith.constant 0 : i32
    return %c0_i32, %c0_i32_0 : i32, i32
  }
  func.func @transform_9(%arg0: i32) -> (i32, i32) {
    %c0_i32 = arith.constant 0 : i32
    %c0_i32_0 = arith.constant 0 : i32
    %c0_i32_1 = arith.constant 0 : i32
    return %c0_i32, %c0_i32_0 : i32, i32
  }
  func.func @transform_10(%arg0: i32) -> (i32, i32) {
    %c0_i32 = arith.constant 0 : i32
    %c0_i32_0 = arith.constant 0 : i32
    %c0_i32_1 = arith.constant 0 : i32
    return %c0_i32, %c0_i32_0 : i32, i32
  }
  func.func @transform_11(%arg0: i32) -> (i32, i32) {
    %c0_i32 = arith.constant 0 : i32
    %c0_i32_0 = arith.constant 0 : i32
    %c0_i32_1 = arith.constant 0 : i32
    return %c0_i32, %c0_i32_0 : i32, i32
  }
  func.func @transform_12(%arg0: i32) -> (i32, i32) {
    %c0_i32 = arith.constant 0 : i32
    %c0_i32_0 = arith.constant 0 : i32
    %c0_i32_1 = arith.constant 0 : i32
    return %c0_i32, %c0_i32_0 : i32, i32
  }
  func.func @transform_13(%arg0: i32) -> (i32, i32) {
    %c0_i32 = arith.constant 0 : i32
    %c0_i32_0 = arith.constant 0 : i32
    %c0_i32_1 = arith.constant 0 : i32
    return %c0_i32, %c0_i32_0 : i32, i32
  }
  func.func @transform_14(%arg0: i32) -> (i32, i32) {
    %c0_i32 = arith.constant 0 : i32
    %c0_i32_0 = arith.constant 0 : i32
    %c0_i32_1 = arith.constant 0 : i32
    return %c0_i32, %c0_i32_0 : i32, i32
  }
  func.func @transform_15(%arg0: i32) -> (i32, i32) {
    %c0_i32 = arith.constant 0 : i32
    %c0_i32_0 = arith.constant 0 : i32
    %c0_i32_1 = arith.constant 0 : i32
    return %c0_i32, %c0_i32_0 : i32, i32
  }
  func.func @transform_16(%arg0: i32) -> (i32, i32) {
    %c0_i32 = arith.constant 0 : i32
    %c0_i32_0 = arith.constant 0 : i32
    %c0_i32_1 = arith.constant 0 : i32
    return %c0_i32, %c0_i32_0 : i32, i32
  }
  func.func @transform_17(%arg0: i32) -> (i32, i32) {
    %c0_i32 = arith.constant 0 : i32
    %c0_i32_0 = arith.constant 0 : i32
    %c0_i32_1 = arith.constant 0 : i32
    return %c0_i32, %c0_i32_0 : i32, i32
  }
  func.func @transform_18(%arg0: i32) -> (i32, i32) {
    %c0_i32 = arith.constant 0 : i32
    %c0_i32_0 = arith.constant 0 : i32
    %c0_i32_1 = arith.constant 0 : i32
    return %c0_i32, %c0_i32_0 : i32, i32
  }
  func.func @transform_19(%arg0: i32) -> (i32, i32) {
    %c0_i32 = arith.constant 0 : i32
    %c0_i32_0 = arith.constant 0 : i32
    %c0_i32_1 = arith.constant 0 : i32
    return %c0_i32, %c0_i32_0 : i32, i32
  }
  func.func @transform_20(%arg0: i32) -> (i32, i32) {
    %c0_i32 = arith.constant 0 : i32
    %c0_i32_0 = arith.constant 0 : i32
    %c0_i32_1 = arith.constant 0 : i32
    return %c0_i32, %c0_i32_0 : i32, i32
  }
  func.func @transform_21(%arg0: i32) -> (i32, i32) {
    %c0_i32 = arith.constant 0 : i32
    %c0_i32_0 = arith.constant 0 : i32
    %c0_i32_1 = arith.constant 0 : i32
    return %c0_i32, %c0_i32_0 : i32, i32
  }
  func.func @transform_22(%arg0: i32) -> (i32, i32) {
    %c0_i32 = arith.constant 0 : i32
    %c0_i32_0 = arith.constant 0 : i32
    %c0_i32_1 = arith.constant 0 : i32
    return %c0_i32, %c0_i32_0 : i32, i32
  }
  func.func @transform_23(%arg0: i32) -> (i32, i32) {
    %c0_i32 = arith.constant 0 : i32
    %c0_i32_0 = arith.constant 0 : i32
    %c0_i32_1 = arith.constant 0 : i32
    return %c0_i32, %c0_i32_0 : i32, i32
  }
  func.func @transform_24(%arg0: i32) -> (i32, i32) {
    %c0_i32 = arith.constant 0 : i32
    %c0_i32_0 = arith.constant 0 : i32
    %c0_i32_1 = arith.constant 0 : i32
    return %c0_i32, %c0_i32_0 : i32, i32
  }
  func.func @transform_25(%arg0: i32) -> (i32, i32, i32) {
    %c0_i32 = arith.constant 0 : i32
    %c0_i32_0 = arith.constant 0 : i32
    %c0_i32_1 = arith.constant 0 : i32
    return %arg0, %c0_i32, %c0_i32_0 : i32, i32, i32
  }
  func.func @transform_26(%arg0: i32) -> (i32, i32, i32) {
    %c0_i32 = arith.constant 0 : i32
    %c0_i32_0 = arith.constant 0 : i32
    %c0_i32_1 = arith.constant 0 : i32
    return %arg0, %c0_i32, %c0_i32_0 : i32, i32, i32
  }
  func.func @transform_27(%arg0: i32) -> (i32, i32, i32) {
    %c0_i32 = arith.constant 0 : i32
    %c0_i32_0 = arith.constant 0 : i32
    %c0_i32_1 = arith.constant 0 : i32
    return %arg0, %c0_i32, %c0_i32_0 : i32, i32, i32
  }
}

</mosaic_0001>

<llo_original>
// kernel: tpu_custom_call.1
$region0: #{tpu_custom_call.1}
  #allocation0 [shape = 'u32[]', space=smem, size = 0x4, offset = 0x4, fixed_abs, tag = 'smem constant byte address 0x4 - core index']
  #allocation1 [shape = 'u32[72,128]{1,0:T(1,128)}', space=vmem, size = 0x9000, scoped, tag = 'internal scratch']
  #allocation2 [shape = 'f32[2,128]{1,0:T(2,128)}', space=vmem, size = 0x400, scoped, tag = 'scratch operand']
  #allocation3 [shape = 'f32[2,128]{1,0:T(2,128)}', space=vmem, size = 0x400, scoped, tag = 'scratch operand']
  #allocation4 [shape = 'f32[2,128]{1,0:T(2,128)}', space=vmem, size = 0x400, scoped, tag = 'scratch operand']
  #allocation5 [shape = 'f32[2,128]{1,0:T(2,128)}', space=vmem, size = 0x400, scoped, tag = 'scratch operand']
  #allocation6 [shape = 'f32[2,32]{1,0:T(2,128)}', space=vmem, size = 0x400, scoped, tag = 'scratch operand']
  #allocation7 [shape = 'f32[2,5]{1,0:T(2,128)}', space=vmem, size = 0x400, scoped, tag = 'scratch operand']
  #allocation8 [shape = 'f32[1,1]{1,0:T(1,128)S(1)}', space=vmem, size = 0x200, scoped, tag = 'scoped memory for tpu_custom_call.1']
  %s0 = inlined_call_operand.vmem [shape: f32[4,2,160], index: 0, kind: input, shape index: {}]
  %s1 = inlined_call_operand.vmem [shape: f32[2,16,32], index: 1, kind: input, shape index: {}]
  %s2 = inlined_call_operand.vmem [shape: f32[2,16], index: 2, kind: input, shape index: {}]
  %s3 = inlined_call_operand.vmem [shape: f32[160,32], index: 3, kind: input, shape index: {}]
  %s4 = inlined_call_operand.vmem [shape: f32[1,32], index: 4, kind: input, shape index: {}]
  %s5 = inlined_call_operand.vmem [shape: f32[32,512], index: 5, kind: input, shape index: {}]
  %s6 = inlined_call_operand.vmem [shape: f32[32,512], index: 6, kind: input, shape index: {}]
  %s7 = inlined_call_operand.hbm [shape: f32[128,512], index: 7, kind: input, shape index: {}]
  %s8 = inlined_call_operand.vmem [shape: f32[1,512], index: 8, kind: input, shape index: {}]
  %s9 = inlined_call_operand.vmem [shape: f32[128,128], index: 9, kind: input, shape index: {}]
  %s10 = inlined_call_operand.vmem [shape: f32[1,128], index: 10, kind: input, shape index: {}]
  %s11 = inlined_call_operand.vmem [shape: f32[128,15], index: 11, kind: input, shape index: {}]
  %s12 = inlined_call_operand.vmem [shape: f32[1,15], index: 12, kind: input, shape index: {}]
  %s13 = inlined_call_operand.hbm [shape: f32[128,512], index: 13, kind: input, shape index: {}]
  %s14 = inlined_call_operand.vmem [shape: f32[32,512], index: 14, kind: input, shape index: {}]
  %s15 = inlined_call_operand.hbm [shape: f32[128,512], index: 15, kind: input, shape index: {}]
  %s16 = inlined_call_operand.vmem [shape: f32[1,512], index: 16, kind: input, shape index: {}]
  %s17 = inlined_call_operand.vmem [shape: f32[128,60], index: 17, kind: input, shape index: {}]
  %s18 = inlined_call_operand.vmem [shape: f32[32,60], index: 18, kind: input, shape index: {}]
  %s19 = inlined_call_operand.vmem [shape: f32[1,60], index: 19, kind: input, shape index: {}]
  %s20 = inlined_call_operand.vmem [shape: f32[128,1], index: 20, kind: input, shape index: {}]
  %s21 = inlined_call_operand.vmem [shape: f32[60,1], index: 21, kind: input, shape index: {}]
  %s22 = inlined_call_operand.<no memory space> [shape: f32[1,1], index: 22, kind: input, shape index: {}]
  %s23 = inlined_call_operand.vmem [shape: f32[1,128], index: 23, kind: input, shape index: {}]
  %s24 = inlined_call_operand.vmem [shape: f32[1,128], index: 24, kind: input, shape index: {}]
  %s25 = inlined_call_operand.hbm [shape: f32[4,2,60], index: 25, kind: output, shape index: {0}]
  %s26 = inlined_call_operand.vmem [shape: f32[4,2,1], index: 26, kind: output, shape index: {1}]
  %s27 = inlined_call_operand.hbm [shape: f32[4,2,16], index: 27, kind: output, shape index: {2}]
  %28 = xla_tuple %s25, %s26, %s27
  %s29 = sld [smem:[#allocation0]]
  $region165: #{tpu_custom_call.1} parent=0
    _
  %s31 = ssub.s32 1, %s29
  %s32 = scalar_select 0, %s31, %s29
  %v33 = vstv %s22
  %34 = vst [vmem:[#allocation8] sm:$0x1] %v33
  $region1: #{tpu_custom_call.1} parent=0
    #allocation9 [shape = 'u8[262144]{0}', space=vmem, size = 0x40000, scoped, tag = 'input window, operand 7, single buffered']
    #allocation10 [shape = 's32[2]{0}', space=sflag, size = 0x8, scoped, tag = 'scoped memory for tpu_custom_call.1']
    #allocation11 [shape = 's32[2]{0}', space=sflag, size = 0x8, scoped, tag = 'scoped memory for tpu_custom_call.1']
    #allocation12 [shape = 'u8[262144]{0}', space=vmem, size = 0x40000, scoped, tag = 'input window, operand 13, single buffered']
    #allocation13 [shape = 's32[1]{0}', space=sflag, size = 0x4, scoped, tag = 'scoped memory for tpu_custom_call.1']
    #allocation14 [shape = 'u8[262144]{0}', space=vmem, size = 0x40000, scoped, tag = 'input window, operand 15, single buffered']
    #allocation15 [shape = 'u8[2048]{0}', space=vmem, size = 0x800, scoped, tag = 'output window, operand 0']
    #allocation16 [shape = 'u8[2048]{0}', space=vmem, size = 0x800, scoped, tag = 'output window, operand 2']
    #allocation17 [shape = 's32[2]{0}', space=sflag, size = 0x8, scoped, tag = 'scoped memory for tpu_custom_call.1']
    %35 = vsyncpa [#allocation10], 0
    %36 = vsyncpa [#allocation13], 0
    %37 = vsyncpa [#allocation11], 0
    %s38 = scalar_lea.sflag [#allocation11], 1
    %39 = vsyncpa %s38, 0
    %40 = vsyncpa [#allocation17], 0
    %s41 = scalar_lea.sflag [#allocation17], 1
    %42 = vsyncpa %s41, 0
    loop: start=0, step=1, limit=6
    $region2: #{tpu_custom_call.1} parent=1 // loop_pre_header
      _
    $region3: #{tpu_custom_call.1} parent=1 // loop_header
      %s44 = sphi 0, %s48
      %p45 = scmp.ge.s32.totalorder %s44, 6
      %s54 = sphi 0, %s56
      %s57 = sphi 0, %s54
      %s58 = sphi 0, %s57
      %s74 = sphi 0, %s58
      %s78 = sphi 0, %s78
      %s80 = sphi 0, %s78
      %s81 = sphi 0, %s80
      %s95 = sphi 0, %s81
      %s99 = sphi 0, %s99
      %s101 = sphi 0, %s99
      %s102 = sphi 0, %s101
      %s116 = sphi 0, %s102
      %s120 = sphi 0, %s120
      %s122 = sphi 0, %s120
      %s123 = sphi 0, %s122
      %s137 = sphi 0, %s123
      %s141 = sphi 0, %s141
      %s143 = sphi 0, %s141
      %s144 = sphi 0, %s143
      %s158 = sphi 0, %s144
      %s162 = sphi 0, %s162
      %s164 = sphi 0, %s162
      %s165 = sphi 0, %s164
      %s179 = sphi 0, %s165
      %s183 = sphi 0, %s183
      %s185 = sphi 0, %s183
      %s186 = sphi 0, %s185
      %s200 = sphi 0, %s186
      %s204 = sphi 0, %s204
      %s206 = sphi 0, %s204
      %s207 = sphi 0, %s206
      %s221 = sphi 0, %s207
      %s225 = sphi 0, %s225
      %s227 = sphi 0, %s225
      %s228 = sphi 0, %s227
      %s242 = sphi 0, %s228
      %s246 = sphi 0, %s246
      %s248 = sphi 0, %s246
      %s249 = sphi 0, %s248
      %s263 = sphi 0, %s249
      %s267 = sphi 0, %s267
      %s269 = sphi 0, %s267
      %s270 = sphi 0, %s269
      %s284 = sphi 0, %s270
      %s288 = sphi 0, %s288
      %s290 = sphi 0, %s288
      %s291 = sphi 0, %s290
      %s305 = sphi 0, %s291
      %s309 = sphi 0, %s309
      %s311 = sphi 0, %s309
      %s312 = sphi 0, %s311
      %s326 = sphi 0, %s312
      %s330 = sphi 0, %s330
      %s332 = sphi 0, %s330
      %s333 = sphi 0, %s332
      %s347 = sphi 0, %s333
      %s351 = sphi 0, %s351
      %s353 = sphi 0, %s351
      %s354 = sphi 0, %s353
      %s368 = sphi 0, %s354
      %s372 = sphi 0, %s372
      %s374 = sphi 0, %s372
      %s375 = sphi 0, %s374
      %s389 = sphi 0, %s375
      %s393 = sphi 0, %s393
      %s395 = sphi 0, %s393
      %s396 = sphi 0, %s395
      %s410 = sphi 0, %s396
      %s414 = sphi 0, %s414
      %s416 = sphi 0, %s414
      %s417 = sphi 0, %s416
      %s431 = sphi 0, %s417
      %s435 = sphi 0, %s435
      %s437 = sphi 0, %s435
      %s438 = sphi 0, %s437
      %s452 = sphi 0, %s438
      %s456 = sphi 0, %s456
      %s458 = sphi 0, %s456
      %s459 = sphi 0, %s458
      %s473 = sphi 0, %s459
      %s477 = sphi 0, %s477
      %s479 = sphi 0, %s477
      %s480 = sphi 0, %s479
      %s494 = sphi 0, %s480
      %s498 = sphi 0, %s498
      %s500 = sphi 0, %s498
      %s501 = sphi 0, %s500
      %s515 = sphi 0, %s501
      %s519 = sphi 0, %s519
      %s521 = sphi 0, %s519
      %s522 = sphi 0, %s521
      %s536 = sphi 0, %s522
      %s540 = sphi 0, %s540
      %s542 = sphi 0, %s540
      %s543 = sphi 0, %s542
      %s557 = sphi 0, %s543
      %s561 = sphi 0, %s561
      %s563 = sphi 0, %s561
      %s564 = sphi 0, %s563
      %s578 = sphi 0, %s564
      %s584 = sphi 0, %s586
      %s587 = sphi 0, %s584
      %s588 = sphi 0, %s587
      %s604 = sphi 0, %s588
      %s610 = sphi 0, %s612
      %s613 = sphi 0, %s610
      %s614 = sphi 0, %s613
      %s630 = sphi 0, %s614
      %s636 = sphi 0, %s638
      %s639 = sphi 0, %s636
      %s640 = sphi 0, %s639
      %s656 = sphi 0, %s640
    $region4: #{tpu_custom_call.1} parent=1 // loop_header_branch
      %47 = sbr.rel (%p45) target = $region8
    $region5: #{tpu_custom_call.1} parent=1 // loop_body
      %s49 = ssub.s32 %s44, 1
      %s50 = ssub.s32 %s44, 2
      %s51 = sadd.s32 %s44, 1
      %s52 = ssub.s32 %s44, %s51
      %p53 = scmp.eq.s32.totalorder %s52, 0
      %s55 = sadd.s32 %s54, 1
      %s56 = scalar_select %p53, %s54, %s55
      %p59 = pneg %p53
      %p60 = scmp.eq.s32.totalorder %s44, 3
      %p61 = por %p59, %p60
      %p62 = scmp.ne.s32.totalorder %s54, %s57
      %p63 = scmp.eq.s32.totalorder %s44, 0
      %p64 = por %p62, %p63
      %p65 = scmp.ne.s32.totalorder %s54, %s57
      %p66 = scmp.eq.s32.totalorder %s49, 3
      %p67 = por %p65, %p66
      %p68 = scmp.ne.s32.totalorder %s57, %s58
      %p69 = scmp.eq.s32.totalorder %s49, 0
      %p70 = por %p68, %p69
      %p71 = scmp.ne.s32.totalorder %s57, %s58
      %p72 = scmp.eq.s32.totalorder %s50, 3
      %p73 = por %p71, %p72
      %p75 = scmp.ne.s32.totalorder %s58, %s74
      %p76 = scmp.eq.s32.totalorder %s50, 0
      %p77 = por %p75, %p76
      %s79 = sadd.s32 %s78, 1
      %p82 = scmp.eq.s32.totalorder %s44, 3
      %p83 = scmp.ne.s32.totalorder %s78, %s80
      %p84 = scmp.eq.s32.totalorder %s44, 0
      %p85 = por %p83, %p84
      %p86 = scmp.ne.s32.totalorder %s78, %s80
      %p87 = scmp.eq.s32.totalorder %s49, 3
      %p88 = por %p86, %p87
      %p89 = scmp.ne.s32.totalorder %s80, %s81
      %p90 = scmp.eq.s32.totalorder %s49, 0
      %p91 = por %p89, %p90
      %p92 = scmp.ne.s32.totalorder %s80, %s81
      %p93 = scmp.eq.s32.totalorder %s50, 3
      %p94 = por %p92, %p93
      %p96 = scmp.ne.s32.totalorder %s81, %s95
      %p97 = scmp.eq.s32.totalorder %s50, 0
      %p98 = por %p96, %p97
      %s100 = sadd.s32 %s99, 1
      %p103 = scmp.eq.s32.totalorder %s44, 3
      %p104 = scmp.ne.s32.totalorder %s99, %s101
      %p105 = scmp.eq.s32.totalorder %s44, 0
      %p106 = por %p104, %p105
      %p107 = scmp.ne.s32.totalorder %s99, %s101
      %p108 = scmp.eq.s32.totalorder %s49, 3
      %p109 = por %p107, %p108
      %p110 = scmp.ne.s32.totalorder %s101, %s102
      %p111 = scmp.eq.s32.totalorder %s49, 0
      %p112 = por %p110, %p111
      %p113 = scmp.ne.s32.totalorder %s101, %s102
      %p114 = scmp.eq.s32.totalorder %s50, 3
      %p115 = por %p113, %p114
      %p117 = scmp.ne.s32.totalorder %s102, %s116
      %p118 = scmp.eq.s32.totalorder %s50, 0
      %p119 = por %p117, %p118
      %s121 = sadd.s32 %s120, 1
      %p124 = scmp.eq.s32.totalorder %s44, 3
      %p125 = scmp.ne.s32.totalorder %s120, %s122
      %p126 = scmp.eq.s32.totalorder %s44, 0
      %p127 = por %p125, %p126
      %p128 = scmp.ne.s32.totalorder %s120, %s122
      %p129 = scmp.eq.s32.totalorder %s49, 3
      %p130 = por %p128, %p129
      %p131 = scmp.ne.s32.totalorder %s122, %s123
      %p132 = scmp.eq.s32.totalorder %s49, 0
      %p133 = por %p131, %p132
      %p134 = scmp.ne.s32.totalorder %s122, %s123
      %p135 = scmp.eq.s32.totalorder %s50, 3
      %p136 = por %p134, %p135
      %p138 = scmp.ne.s32.totalorder %s123, %s137
      %p139 = scmp.eq.s32.totalorder %s50, 0
      %p140 = por %p138, %p139
      %s142 = sadd.s32 %s141, 1
      %p145 = scmp.eq.s32.totalorder %s44, 3
      %p146 = scmp.ne.s32.totalorder %s141, %s143
      %p147 = scmp.eq.s32.totalorder %s44, 0
      %p148 = por %p146, %p147
      %p149 = scmp.ne.s32.totalorder %s141, %s143
      %p150 = scmp.eq.s32.totalorder %s49, 3
      %p151 = por %p149, %p150
      %p152 = scmp.ne.s32.totalorder %s143, %s144
      %p153 = scmp.eq.s32.totalorder %s49, 0
      %p154 = por %p152, %p153
      %p155 = scmp.ne.s32.totalorder %s143, %s144
      %p156 = scmp.eq.s32.totalorder %s50, 3
      %p157 = por %p155, %p156
      %p159 = scmp.ne.s32.totalorder %s144, %s158
      %p160 = scmp.eq.s32.totalorder %s50, 0
      %p161 = por %p159, %p160
      %s163 = sadd.s32 %s162, 1
      %p166 = scmp.eq.s32.totalorder %s44, 3
      %p167 = scmp.ne.s32.totalorder %s162, %s164
      %p168 = scmp.eq.s32.totalorder %s44, 0
      %p169 = por %p167, %p168
      %p170 = scmp.ne.s32.totalorder %s162, %s164
      %p171 = scmp.eq.s32.totalorder %s49, 3
      %p172 = por %p170, %p171
      %p173 = scmp.ne.s32.totalorder %s164, %s165
      %p174 = scmp.eq.s32.totalorder %s49, 0
      %p175 = por %p173, %p174
      %p176 = scmp.ne.s32.totalorder %s164, %s165
      %p177 = scmp.eq.s32.totalorder %s50, 3
      %p178 = por %p176, %p177
      %p180 = scmp.ne.s32.totalorder %s165, %s179
      %p181 = scmp.eq.s32.totalorder %s50, 0
      %p182 = por %p180, %p181
      %s184 = sadd.s32 %s183, 1
      %p187 = scmp.eq.s32.totalorder %s44, 3
      %p188 = scmp.ne.s32.totalorder %s183, %s185
      %p189 = scmp.eq.s32.totalorder %s44, 0
      %p190 = por %p188, %p189
      %p191 = scmp.ne.s32.totalorder %s183, %s185
      %p192 = scmp.eq.s32.totalorder %s49, 3
      %p193 = por %p191, %p192
      %p194 = scmp.ne.s32.totalorder %s185, %s186
      %p195 = scmp.eq.s32.totalorder %s49, 0
      %p196 = por %p194, %p195
      %p197 = scmp.ne.s32.totalorder %s185, %s186
      %p198 = scmp.eq.s32.totalorder %s50, 3
      %p199 = por %p197, %p198
      %p201 = scmp.ne.s32.totalorder %s186, %s200
      %p202 = scmp.eq.s32.totalorder %s50, 0
      %p203 = por %p201, %p202
      %s205 = sadd.s32 %s204, 1
      %p208 = scmp.eq.s32.totalorder %s44, 3
      %p209 = scmp.ne.s32.totalorder %s204, %s206
      %p210 = scmp.eq.s32.totalorder %s44, 0
      %p211 = por %p209, %p210
      %p212 = scmp.ne.s32.totalorder %s204, %s206
      %p213 = scmp.eq.s32.totalorder %s49, 3
      %p214 = por %p212, %p213
      %p215 = scmp.ne.s32.totalorder %s206, %s207
      %p216 = scmp.eq.s32.totalorder %s49, 0
      %p217 = por %p215, %p216
      %p218 = scmp.ne.s32.totalorder %s206, %s207
      %p219 = scmp.eq.s32.totalorder %s50, 3
      %p220 = por %p218, %p219
      %p222 = scmp.ne.s32.totalorder %s207, %s221
      %p223 = scmp.eq.s32.totalorder %s50, 0
      %p224 = por %p222, %p223
      %s226 = sadd.s32 %s225, 1
      %p229 = scmp.eq.s32.totalorder %s44, 3
      %p230 = scmp.ne.s32.totalorder %s225, %s227
      %p231 = scmp.eq.s32.totalorder %s44, 0
      %p232 = por %p230, %p231
      %p233 = scmp.ne.s32.totalorder %s225, %s227
      %p234 = scmp.eq.s32.totalorder %s49, 3
      %p235 = por %p233, %p234
      %p236 = scmp.ne.s32.totalorder %s227, %s228
      %p237 = scmp.eq.s32.totalorder %s49, 0
      %p238 = por %p236, %p237
      %p239 = scmp.ne.s32.totalorder %s227, %s228
      %p240 = scmp.eq.s32.totalorder %s50, 3
      %p241 = por %p239, %p240
      %p243 = scmp.ne.s32.totalorder %s228, %s242
      %p244 = scmp.eq.s32.totalorder %s50, 0
      %p245 = por %p243, %p244
      %s247 = sadd.s32 %s246, 1
      %p250 = scmp.eq.s32.totalorder %s44, 3
      %p251 = scmp.ne.s32.totalorder %s246, %s248
      %p252 = scmp.eq.s32.totalorder %s44, 0
      %p253 = por %p251, %p252
      %p254 = scmp.ne.s32.totalorder %s246, %s248
      %p255 = scmp.eq.s32.totalorder %s49, 3
      %p256 = por %p254, %p255
      %p257 = scmp.ne.s32.totalorder %s248, %s249
      %p258 = scmp.eq.s32.totalorder %s49, 0
      %p259 = por %p257, %p258
      %p260 = scmp.ne.s32.totalorder %s248, %s249
      %p261 = scmp.eq.s32.totalorder %s50, 3
      %p262 = por %p260, %p261
      %p264 = scmp.ne.s32.totalorder %s249, %s263
      %p265 = scmp.eq.s32.totalorder %s50, 0
      %p266 = por %p264, %p265
      %s268 = sadd.s32 %s267, 1
      %p271 = scmp.eq.s32.totalorder %s44, 3
      %p272 = scmp.ne.s32.totalorder %s267, %s269
      %p273 = scmp.eq.s32.totalorder %s44, 0
      %p274 = por %p272, %p273
      %p275 = scmp.ne.s32.totalorder %s267, %s269
      %p276 = scmp.eq.s32.totalorder %s49, 3
      %p277 = por %p275, %p276
      %p278 = scmp.ne.s32.totalorder %s269, %s270
      %p279 = scmp.eq.s32.totalorder %s49, 0
      %p280 = por %p278, %p279
      %p281 = scmp.ne.s32.totalorder %s269, %s270
      %p282 = scmp.eq.s32.totalorder %s50, 3
      %p283 = por %p281, %p282
      %p285 = scmp.ne.s32.totalorder %s270, %s284
      %p286 = scmp.eq.s32.totalorder %s50, 0
      %p287 = por %p285, %p286
      %s289 = sadd.s32 %s288, 1
      %p292 = scmp.eq.s32.totalorder %s44, 3
      %p293 = scmp.ne.s32.totalorder %s288, %s290
      %p294 = scmp.eq.s32.totalorder %s44, 0
      %p295 = por %p293, %p294
      %p296 = scmp.ne.s32.totalorder %s288, %s290
      %p297 = scmp.eq.s32.totalorder %s49, 3
      %p298 = por %p296, %p297
      %p299 = scmp.ne.s32.totalorder %s290, %s291
      %p300 = scmp.eq.s32.totalorder %s49, 0
      %p301 = por %p299, %p300
      %p302 = scmp.ne.s32.totalorder %s290, %s291
      %p303 = scmp.eq.s32.totalorder %s50, 3
      %p304 = por %p302, %p303
      %p306 = scmp.ne.s32.totalorder %s291, %s305
      %p307 = scmp.eq.s32.totalorder %s50, 0
      %p308 = por %p306, %p307
      %s310 = sadd.s32 %s309, 1
      %p313 = scmp.eq.s32.totalorder %s44, 3
      %p314 = scmp.ne.s32.totalorder %s309, %s311
      %p315 = scmp.eq.s32.totalorder %s44, 0
      %p316 = por %p314, %p315
      %p317 = scmp.ne.s32.totalorder %s309, %s311
      %p318 = scmp.eq.s32.totalorder %s49, 3
      %p319 = por %p317, %p318
      %p320 = scmp.ne.s32.totalorder %s311, %s312
      %p321 = scmp.eq.s32.totalorder %s49, 0
      %p322 = por %p320, %p321
      %p323 = scmp.ne.s32.totalorder %s311, %s312
      %p324 = scmp.eq.s32.totalorder %s50, 3
      %p325 = por %p323, %p324
      %p327 = scmp.ne.s32.totalorder %s312, %s326
      %p328 = scmp.eq.s32.totalorder %s50, 0
      %p329 = por %p327, %p328
      %s331 = sadd.s32 %s330, 1
      %p334 = scmp.eq.s32.totalorder %s44, 3
      %p335 = scmp.ne.s32.totalorder %s330, %s332
      %p336 = scmp.eq.s32.totalorder %s44, 0
      %p337 = por %p335, %p336
      %p338 = scmp.ne.s32.totalorder %s330, %s332
      %p339 = scmp.eq.s32.totalorder %s49, 3
      %p340 = por %p338, %p339
      %p341 = scmp.ne.s32.totalorder %s332, %s333
      %p342 = scmp.eq.s32.totalorder %s49, 0
      %p343 = por %p341, %p342
      %p344 = scmp.ne.s32.totalorder %s332, %s333
      %p345 = scmp.eq.s32.totalorder %s50, 3
      %p346 = por %p344, %p345
      %p348 = scmp.ne.s32.totalorder %s333, %s347
      %p349 = scmp.eq.s32.totalorder %s50, 0
      %p350 = por %p348, %p349
      %s352 = sadd.s32 %s351, 1
      %p355 = scmp.eq.s32.totalorder %s44, 3
      %p356 = scmp.ne.s32.totalorder %s351, %s353
      %p357 = scmp.eq.s32.totalorder %s44, 0
      %p358 = por %p356, %p357
      %p359 = scmp.ne.s32.totalorder %s351, %s353
      %p360 = scmp.eq.s32.totalorder %s49, 3
      %p361 = por %p359, %p360
      %p362 = scmp.ne.s32.totalorder %s353, %s354
      %p363 = scmp.eq.s32.totalorder %s49, 0
      %p364 = por %p362, %p363
      %p365 = scmp.ne.s32.totalorder %s353, %s354
      %p366 = scmp.eq.s32.totalorder %s50, 3
      %p367 = por %p365, %p366
      %p369 = scmp.ne.s32.totalorder %s354, %s368
      %p370 = scmp.eq.s32.totalorder %s50, 0
      %p371 = por %p369, %p370
      %s373 = sadd.s32 %s372, 1
      %p376 = scmp.eq.s32.totalorder %s44, 3
      %p377 = scmp.ne.s32.totalorder %s372, %s374
      %p378 = scmp.eq.s32.totalorder %s44, 0
      %p379 = por %p377, %p378
      %p380 = scmp.ne.s32.totalorder %s372, %s374
      %p381 = scmp.eq.s32.totalorder %s49, 3
      %p382 = por %p380, %p381
      %p383 = scmp.ne.s32.totalorder %s374, %s375
      %p384 = scmp.eq.s32.totalorder %s49, 0
      %p385 = por %p383, %p384
      %p386 = scmp.ne.s32.totalorder %s374, %s375
      %p387 = scmp.eq.s32.totalorder %s50, 3
      %p388 = por %p386, %p387
      %p390 = scmp.ne.s32.totalorder %s375, %s389
      %p391 = scmp.eq.s32.totalorder %s50, 0
      %p392 = por %p390, %p391
      %s394 = sadd.s32 %s393, 1
      %p397 = scmp.eq.s32.totalorder %s44, 3
      %p398 = scmp.ne.s32.totalorder %s393, %s395
      %p399 = scmp.eq.s32.totalorder %s44, 0
      %p400 = por %p398, %p399
      %p401 = scmp.ne.s32.totalorder %s393, %s395
      %p402 = scmp.eq.s32.totalorder %s49, 3
      %p403 = por %p401, %p402
      %p404 = scmp.ne.s32.totalorder %s395, %s396
      %p405 = scmp.eq.s32.totalorder %s49, 0
      %p406 = por %p404, %p405
      %p407 = scmp.ne.s32.totalorder %s395, %s396
      %p408 = scmp.eq.s32.totalorder %s50, 3
      %p409 = por %p407, %p408
      %p411 = scmp.ne.s32.totalorder %s396, %s410
      %p412 = scmp.eq.s32.totalorder %s50, 0
      %p413 = por %p411, %p412
      %s415 = sadd.s32 %s414, 1
      %p418 = scmp.eq.s32.totalorder %s44, 3
      %p419 = scmp.ne.s32.totalorder %s414, %s416
      %p420 = scmp.eq.s32.totalorder %s44, 0
      %p421 = por %p419, %p420
      %p422 = scmp.ne.s32.totalorder %s414, %s416
      %p423 = scmp.eq.s32.totalorder %s49, 3
      %p424 = por %p422, %p423
      %p425 = scmp.ne.s32.totalorder %s416, %s417
      %p426 = scmp.eq.s32.totalorder %s49, 0
      %p427 = por %p425, %p426
      %p428 = scmp.ne.s32.totalorder %s416, %s417
      %p429 = scmp.eq.s32.totalorder %s50, 3
      %p430 = por %p428, %p429
      %p432 = scmp.ne.s32.totalorder %s417, %s431
      %p433 = scmp.eq.s32.totalorder %s50, 0
      %p434 = por %p432, %p433
      %s436 = sadd.s32 %s435, 1
      %p439 = scmp.eq.s32.totalorder %s44, 3
      %p440 = scmp.ne.s32.totalorder %s435, %s437
      %p441 = scmp.eq.s32.totalorder %s44, 0
      %p442 = por %p440, %p441
      %p443 = scmp.ne.s32.totalorder %s435, %s437
      %p444 = scmp.eq.s32.totalorder %s49, 3
      %p445 = por %p443, %p444
      %p446 = scmp.ne.s32.totalorder %s437, %s438
      %p447 = scmp.eq.s32.totalorder %s49, 0
      %p448 = por %p446, %p447
      %p449 = scmp.ne.s32.totalorder %s437, %s438
      %p450 = scmp.eq.s32.totalorder %s50, 3
      %p451 = por %p449, %p450
      %p453 = scmp.ne.s32.totalorder %s438, %s452
      %p454 = scmp.eq.s32.totalorder %s50, 0
      %p455 = por %p453, %p454
      %s457 = sadd.s32 %s456, 1
      %p460 = scmp.eq.s32.totalorder %s44, 3
      %p461 = scmp.ne.s32.totalorder %s456, %s458
      %p462 = scmp.eq.s32.totalorder %s44, 0
      %p463 = por %p461, %p462
      %p464 = scmp.ne.s32.totalorder %s456, %s458
      %p465 = scmp.eq.s32.totalorder %s49, 3
      %p466 = por %p464, %p465
      %p467 = scmp.ne.s32.totalorder %s458, %s459
      %p468 = scmp.eq.s32.totalorder %s49, 0
      %p469 = por %p467, %p468
      %p470 = scmp.ne.s32.totalorder %s458, %s459
      %p471 = scmp.eq.s32.totalorder %s50, 3
      %p472 = por %p470, %p471
      %p474 = scmp.ne.s32.totalorder %s459, %s473
      %p475 = scmp.eq.s32.totalorder %s50, 0
      %p476 = por %p474, %p475
      %s478 = sadd.s32 %s477, 1
      %p481 = scmp.eq.s32.totalorder %s44, 3
      %p482 = scmp.ne.s32.totalorder %s477, %s479
      %p483 = scmp.eq.s32.totalorder %s44, 0
      %p484 = por %p482, %p483
      %p485 = scmp.ne.s32.totalorder %s477, %s479
      %p486 = scmp.eq.s32.totalorder %s49, 3
      %p487 = por %p485, %p486
      %p488 = scmp.ne.s32.totalorder %s479, %s480
      %p489 = scmp.eq.s32.totalorder %s49, 0
      %p490 = por %p488, %p489
      %p491 = scmp.ne.s32.totalorder %s479, %s480
      %p492 = scmp.eq.s32.totalorder %s50, 3
      %p493 = por %p491, %p492
      %p495 = scmp.ne.s32.totalorder %s480, %s494
      %p496 = scmp.eq.s32.totalorder %s50, 0
      %p497 = por %p495, %p496
      %s499 = sadd.s32 %s498, 1
      %p502 = scmp.eq.s32.totalorder %s44, 3
      %p503 = scmp.ne.s32.totalorder %s498, %s500
      %p504 = scmp.eq.s32.totalorder %s44, 0
      %p505 = por %p503, %p504
      %p506 = scmp.ne.s32.totalorder %s498, %s500
      %p507 = scmp.eq.s32.totalorder %s49, 3
      %p508 = por %p506, %p507
      %p509 = scmp.ne.s32.totalorder %s500, %s501
      %p510 = scmp.eq.s32.totalorder %s49, 0
      %p511 = por %p509, %p510
      %p512 = scmp.ne.s32.totalorder %s500, %s501
      %p513 = scmp.eq.s32.totalorder %s50, 3
      %p514 = por %p512, %p513
      %p516 = scmp.ne.s32.totalorder %s501, %s515
      %p517 = scmp.eq.s32.totalorder %s50, 0
      %p518 = por %p516, %p517
      %s520 = sadd.s32 %s519, 1
      %p523 = scmp.eq.s32.totalorder %s44, 3
      %p524 = scmp.ne.s32.totalorder %s519, %s521
      %p525 = scmp.eq.s32.totalorder %s44, 0
      %p526 = por %p524, %p525
      %p527 = scmp.ne.s32.totalorder %s519, %s521
      %p528 = scmp.eq.s32.totalorder %s49, 3
      %p529 = por %p527, %p528
      %p530 = scmp.ne.s32.totalorder %s521, %s522
      %p531 = scmp.eq.s32.totalorder %s49, 0
      %p532 = por %p530, %p531
      %p533 = scmp.ne.s32.totalorder %s521, %s522
      %p534 = scmp.eq.s32.totalorder %s50, 3
      %p535 = por %p533, %p534
      %p537 = scmp.ne.s32.totalorder %s522, %s536
      %p538 = scmp.eq.s32.totalorder %s50, 0
      %p539 = por %p537, %p538
      %s541 = sadd.s32 %s540, 1
      %p544 = scmp.eq.s32.totalorder %s44, 3
      %p545 = scmp.ne.s32.totalorder %s540, %s542
      %p546 = scmp.eq.s32.totalorder %s44, 0
      %p547 = por %p545, %p546
      %p548 = scmp.ne.s32.totalorder %s540, %s542
      %p549 = scmp.eq.s32.totalorder %s49, 3
      %p550 = por %p548, %p549
      %p551 = scmp.ne.s32.totalorder %s542, %s543
      %p552 = scmp.eq.s32.totalorder %s49, 0
      %p553 = por %p551, %p552
      %p554 = scmp.ne.s32.totalorder %s542, %s543
      %p555 = scmp.eq.s32.totalorder %s50, 3
      %p556 = por %p554, %p555
      %p558 = scmp.ne.s32.totalorder %s543, %s557
      %p559 = scmp.eq.s32.totalorder %s50, 0
      %p560 = por %p558, %p559
      %s562 = sadd.s32 %s561, 1
      %p565 = scmp.eq.s32.totalorder %s44, 3
      %p566 = scmp.ne.s32.totalorder %s561, %s563
      %p567 = scmp.eq.s32.totalorder %s44, 0
      %p568 = por %p566, %p567
      %p569 = scmp.ne.s32.totalorder %s561, %s563
      %p570 = scmp.eq.s32.totalorder %s49, 3
      %p571 = por %p569, %p570
      %p572 = scmp.ne.s32.totalorder %s563, %s564
      %p573 = scmp.eq.s32.totalorder %s49, 0
      %p574 = por %p572, %p573
      %p575 = scmp.ne.s32.totalorder %s563, %s564
      %p576 = scmp.eq.s32.totalorder %s50, 3
      %p577 = por %p575, %p576
      %p579 = scmp.ne.s32.totalorder %s564, %s578
      %p580 = scmp.eq.s32.totalorder %s50, 0
      %p581 = por %p579, %p580
      %s582 = ssub.s32 %s44, %s51
      %p583 = scmp.eq.s32.totalorder %s582, 0
      %s585 = sadd.s32 %s584, 1
      %s586 = scalar_select %p583, %s584, %s585
      %p589 = pneg %p583
      %p590 = scmp.eq.s32.totalorder %s44, 3
      %p591 = por %p589, %p590
      %p592 = scmp.ne.s32.totalorder %s584, %s587
      %p593 = scmp.eq.s32.totalorder %s44, 0
      %p594 = por %p592, %p593
      %p595 = scmp.ne.s32.totalorder %s584, %s587
      %p596 = scmp.eq.s32.totalorder %s49, 3
      %p597 = por %p595, %p596
      %p598 = scmp.ne.s32.totalorder %s587, %s588
      %p599 = scmp.eq.s32.totalorder %s49, 0
      %p600 = por %p598, %p599
      %p601 = scmp.ne.s32.totalorder %s587, %s588
      %p602 = scmp.eq.s32.totalorder %s50, 3
      %p603 = por %p601, %p602
      %p605 = scmp.ne.s32.totalorder %s588, %s604
      %p606 = scmp.eq.s32.totalorder %s50, 0
      %p607 = por %p605, %p606
      %s608 = ssub.s32 %s44, %s51
      %p609 = scmp.eq.s32.totalorder %s608, 0
      %s611 = sadd.s32 %s610, 1
      %s612 = scalar_select %p609, %s610, %s611
      %p615 = pneg %p609
      %p616 = scmp.eq.s32.totalorder %s44, 3
      %p617 = por %p615, %p616
      %p618 = scmp.ne.s32.totalorder %s610, %s613
      %p619 = scmp.eq.s32.totalorder %s44, 0
      %p620 = por %p618, %p619
      %p621 = scmp.ne.s32.totalorder %s610, %s613
      %p622 = scmp.eq.s32.totalorder %s49, 3
      %p623 = por %p621, %p622
      %p624 = scmp.ne.s32.totalorder %s613, %s614
      %p625 = scmp.eq.s32.totalorder %s49, 0
      %p626 = por %p624, %p625
      %p627 = scmp.ne.s32.totalorder %s613, %s614
      %p628 = scmp.eq.s32.totalorder %s50, 3
      %p629 = por %p627, %p628
      %p631 = scmp.ne.s32.totalorder %s614, %s630
      %p632 = scmp.eq.s32.totalorder %s50, 0
      %p633 = por %p631, %p632
      %s634 = ssub.s32 %s44, %s51
      %p635 = scmp.eq.s32.totalorder %s634, 0
      %s637 = sadd.s32 %s636, 1
      %s638 = scalar_select %p635, %s636, %s637
      %p641 = pneg %p635
      %p642 = scmp.eq.s32.totalorder %s44, 3
      %p643 = por %p641, %p642
      %p644 = scmp.ne.s32.totalorder %s636, %s639
      %p645 = scmp.eq.s32.totalorder %s44, 0
      %p646 = por %p644, %p645
      %p647 = scmp.ne.s32.totalorder %s636, %s639
      %p648 = scmp.eq.s32.totalorder %s49, 3
      %p649 = por %p647, %p648
      %p650 = scmp.ne.s32.totalorder %s639, %s640
      %p651 = scmp.eq.s32.totalorder %s49, 0
      %p652 = por %p650, %p651
      %p653 = scmp.ne.s32.totalorder %s639, %s640
      %p654 = scmp.eq.s32.totalorder %s50, 3
      %p655 = por %p653, %p654
      %p657 = scmp.ne.s32.totalorder %s640, %s656
      %p658 = scmp.eq.s32.totalorder %s50, 0
      %p659 = por %p657, %p658
      %p660 = scmp.le.s32.totalorder 1, %s44
      %p661 = scmp.lt.s32.totalorder %s44, 5
      %p662 = pnand %p660, %p661
      %p663 = pneg %p662
      // Predicated region
      $region9: #{tpu_custom_call.1} parent=5 // pred_check
        _
      $region10: #{tpu_custom_call.1} parent=5 // pred_check_branch
        %665 = sbr.rel (%p662) target = $region12
      $region11: #{tpu_custom_call.1} parent=5 // pred_region
        %s666 = ssub.s32 %s44, 1
        // Predicated region
        $region13: #{tpu_custom_call.1} parent=11 // pred_check
          %p667 = pneg %p91
        $region14: #{tpu_custom_call.1} parent=11 // pred_check_branch
          %669 = sbr.rel (%p667) target = $region16
        $region15: #{tpu_custom_call.1} parent=11 // pred_region
          _
        $region16: #{tpu_custom_call.1} parent=11 // pred_fallthru
          _
        // Predicated region
        $region17: #{tpu_custom_call.1} parent=11 // pred_check
          %p670 = pneg %p112
        $region18: #{tpu_custom_call.1} parent=11 // pred_check_branch
          %672 = sbr.rel (%p670) target = $region20
        $region19: #{tpu_custom_call.1} parent=11 // pred_region
          _
        $region20: #{tpu_custom_call.1} parent=11 // pred_fallthru
          _
        // Predicated region
        $region21: #{tpu_custom_call.1} parent=11 // pred_check
          %p673 = pneg %p133
        $region22: #{tpu_custom_call.1} parent=11 // pred_check_branch
          %675 = sbr.rel (%p673) target = $region24
        $region23: #{tpu_custom_call.1} parent=11 // pred_region
          _
        $region24: #{tpu_custom_call.1} parent=11 // pred_fallthru
          _
        // Predicated region
        $region25: #{tpu_custom_call.1} parent=11 // pred_check
          %p676 = pneg %p154
        $region26: #{tpu_custom_call.1} parent=11 // pred_check_branch
          %678 = sbr.rel (%p676) target = $region28
        $region27: #{tpu_custom_call.1} parent=11 // pred_region
          _
        $region28: #{tpu_custom_call.1} parent=11 // pred_fallthru
          _
        // Predicated region
        $region29: #{tpu_custom_call.1} parent=11 // pred_check
          %p679 = pneg %p175
        $region30: #{tpu_custom_call.1} parent=11 // pred_check_branch
          %681 = sbr.rel (%p679) target = $region32
        $region31: #{tpu_custom_call.1} parent=11 // pred_region
          _
        $region32: #{tpu_custom_call.1} parent=11 // pred_fallthru
          _
        // Predicated region
        $region33: #{tpu_custom_call.1} parent=11 // pred_check
          %p682 = pneg %p196
        $region34: #{tpu_custom_call.1} parent=11 // pred_check_branch
          %684 = sbr.rel (%p682) target = $region36
        $region35: #{tpu_custom_call.1} parent=11 // pred_region
          _
        $region36: #{tpu_custom_call.1} parent=11 // pred_fallthru
          _
        // Predicated region
        $region37: #{tpu_custom_call.1} parent=11 // pred_check
          %p685 = pneg %p217
        $region38: #{tpu_custom_call.1} parent=11 // pred_check_branch
          %687 = sbr.rel (%p685) target = $region40
        $region39: #{tpu_custom_call.1} parent=11 // pred_region
          %689 = vsyncadd [#allocation10], 0
          %s690 = sshll.u32 %s7, 4
          %s691 = int_to_ptr.hbm [resolvable:$true] %s690
          %s692 = sshll.u32 [#allocation9], 4
          %s693 = int_to_ptr.vmem [resolvable:$true] %s692
          %698 = dma.hbm_to_vmem [thread:$0]  %s691, 8192, %s693, [#allocation10], 512, 512, 32
        $region40: #{tpu_custom_call.1} parent=11 // pred_fallthru
          _
        // Predicated region
        $region41: #{tpu_custom_call.1} parent=11 // pred_check
          %p699 = pneg %p238
        $region42: #{tpu_custom_call.1} parent=11 // pred_check_branch
          %701 = sbr.rel (%p699) target = $region44
        $region43: #{tpu_custom_call.1} parent=11 // pred_region
          _
        $region44: #{tpu_custom_call.1} parent=11 // pred_fallthru
          _
        // Predicated region
        $region45: #{tpu_custom_call.1} parent=11 // pred_check
          %p702 = pneg %p259
        $region46: #{tpu_custom_call.1} parent=11 // pred_check_branch
          %704 = sbr.rel (%p702) target = $region48
        $region47: #{tpu_custom_call.1} parent=11 // pred_region
          _
        $region48: #{tpu_custom_call.1} parent=11 // pred_fallthru
          _
        // Predicated region
        $region49: #{tpu_custom_call.1} parent=11 // pred_check
          %p705 = pneg %p280
        $region50: #{tpu_custom_call.1} parent=11 // pred_check_branch
          %707 = sbr.rel (%p705) target = $region52
        $region51: #{tpu_custom_call.1} parent=11 // pred_region
          _
        $region52: #{tpu_custom_call.1} parent=11 // pred_fallthru
          _
        // Predicated region
        $region53: #{tpu_custom_call.1} parent=11 // pred_check
          %p708 = pneg %p301
        $region54: #{tpu_custom_call.1} parent=11 // pred_check_branch
          %710 = sbr.rel (%p708) target = $region56
        $region55: #{tpu_custom_call.1} parent=11 // pred_region
          _
        $region56: #{tpu_custom_call.1} parent=11 // pred_fallthru
          _
        // Predicated region
        $region57: #{tpu_custom_call.1} parent=11 // pred_check
          %p711 = pneg %p322
        $region58: #{tpu_custom_call.1} parent=11 // pred_check_branch
          %713 = sbr.rel (%p711) target = $region60
        $region59: #{tpu_custom_call.1} parent=11 // pred_region
          _
        $region60: #{tpu_custom_call.1} parent=11 // pred_fallthru
          _
        // Predicated region
        $region61: #{tpu_custom_call.1} parent=11 // pred_check
          %p714 = pneg %p343
        $region62: #{tpu_custom_call.1} parent=11 // pred_check_branch
          %716 = sbr.rel (%p714) target = $region64
        $region63: #{tpu_custom_call.1} parent=11 // pred_region
          %718 = vsyncadd [#allocation13], 0
          %s719 = sshll.u32 %s13, 4
          %s720 = int_to_ptr.hbm [resolvable:$true] %s719
          %s721 = sshll.u32 [#allocation12], 4
          %s722 = int_to_ptr.vmem [resolvable:$true] %s721
          %727 = dma.hbm_to_vmem [thread:$0]  %s720, 8192, %s722, [#allocation13], 512, 512, 32
        $region64: #{tpu_custom_call.1} parent=11 // pred_fallthru
          _
        // Predicated region
        $region65: #{tpu_custom_call.1} parent=11 // pred_check
          %p728 = pneg %p364
        $region66: #{tpu_custom_call.1} parent=11 // pred_check_branch
          %730 = sbr.rel (%p728) target = $region68
        $region67: #{tpu_custom_call.1} parent=11 // pred_region
          _
        $region68: #{tpu_custom_call.1} parent=11 // pred_fallthru
          _
        // Predicated region
        $region69: #{tpu_custom_call.1} parent=11 // pred_check
          %p731 = pneg %p385
        $region70: #{tpu_custom_call.1} parent=11 // pred_check_branch
          %733 = sbr.rel (%p731) target = $region72
        $region71: #{tpu_custom_call.1} parent=11 // pred_region
          %735 = vsyncadd [#allocation13], 0
          %s736 = sshll.u32 %s15, 4
          %s737 = int_to_ptr.hbm [resolvable:$true] %s736
          %s738 = sshll.u32 [#allocation14], 4
          %s739 = int_to_ptr.vmem [resolvable:$true] %s738
          %744 = dma.hbm_to_vmem [thread:$0]  %s737, 8192, %s739, [#allocation13], 512, 512, 32
        $region72: #{tpu_custom_call.1} parent=11 // pred_fallthru
          _
        // Predicated region
        $region73: #{tpu_custom_call.1} parent=11 // pred_check
          %p745 = pneg %p406
        $region74: #{tpu_custom_call.1} parent=11 // pred_check_branch
          %747 = sbr.rel (%p745) target = $region76
        $region75: #{tpu_custom_call.1} parent=11 // pred_region
          _
        $region76: #{tpu_custom_call.1} parent=11 // pred_fallthru
          _
        // Predicated region
        $region77: #{tpu_custom_call.1} parent=11 // pred_check
          %p748 = pneg %p427
        $region78: #{tpu_custom_call.1} parent=11 // pred_check_branch
          %750 = sbr.rel (%p748) target = $region80
        $region79: #{tpu_custom_call.1} parent=11 // pred_region
          _
        $region80: #{tpu_custom_call.1} parent=11 // pred_fallthru
          _
        // Predicated region
        $region81: #{tpu_custom_call.1} parent=11 // pred_check
          %p751 = pneg %p448
        $region82: #{tpu_custom_call.1} parent=11 // pred_check_branch
          %753 = sbr.rel (%p751) target = $region84
        $region83: #{tpu_custom_call.1} parent=11 // pred_region
          _
        $region84: #{tpu_custom_call.1} parent=11 // pred_fallthru
          _
        // Predicated region
        $region85: #{tpu_custom_call.1} parent=11 // pred_check
          %p754 = pneg %p469
        $region86: #{tpu_custom_call.1} parent=11 // pred_check_branch
          %756 = sbr.rel (%p754) target = $region88
        $region87: #{tpu_custom_call.1} parent=11 // pred_region
          _
        $region88: #{tpu_custom_call.1} parent=11 // pred_fallthru
          _
        // Predicated region
        $region89: #{tpu_custom_call.1} parent=11 // pred_check
          %p757 = pneg %p490
        $region90: #{tpu_custom_call.1} parent=11 // pred_check_branch
          %759 = sbr.rel (%p757) target = $region92
        $region91: #{tpu_custom_call.1} parent=11 // pred_region
          _
        $region92: #{tpu_custom_call.1} parent=11 // pred_fallthru
          _
        // Predicated region
        $region93: #{tpu_custom_call.1} parent=11 // pred_check
          %p760 = pneg %p511
        $region94: #{tpu_custom_call.1} parent=11 // pred_check_branch
          %762 = sbr.rel (%p760) target = $region96
        $region95: #{tpu_custom_call.1} parent=11 // pred_region
          _
        $region96: #{tpu_custom_call.1} parent=11 // pred_fallthru
          _
        // Predicated region
        $region97: #{tpu_custom_call.1} parent=11 // pred_check
          %p763 = pneg %p532
        $region98: #{tpu_custom_call.1} parent=11 // pred_check_branch
          %765 = sbr.rel (%p763) target = $region100
        $region99: #{tpu_custom_call.1} parent=11 // pred_region
          _
        $region100: #{tpu_custom_call.1} parent=11 // pred_fallthru
          _
        // Predicated region
        $region101: #{tpu_custom_call.1} parent=11 // pred_check
          %p766 = pneg %p553
        $region102: #{tpu_custom_call.1} parent=11 // pred_check_branch
          %768 = sbr.rel (%p766) target = $region104
        $region103: #{tpu_custom_call.1} parent=11 // pred_region
          _
        $region104: #{tpu_custom_call.1} parent=11 // pred_fallthru
          _
        // Predicated region
        $region105: #{tpu_custom_call.1} parent=11 // pred_check
          %p769 = pneg %p574
        $region106: #{tpu_custom_call.1} parent=11 // pred_check_branch
          %771 = sbr.rel (%p769) target = $region108
        $region107: #{tpu_custom_call.1} parent=11 // pred_region
          _
        $region108: #{tpu_custom_call.1} parent=11 // pred_fallthru
          _
      $region12: #{tpu_custom_call.1} parent=5 // pred_fallthru
        _
      %p772 = scmp.lt.s32.totalorder %s44, 4
      // Predicated region
      $region109: #{tpu_custom_call.1} parent=5 // pred_check
        %p773 = pneg %p772
      $region110: #{tpu_custom_call.1} parent=5 // pred_check_branch
        %775 = sbr.rel (%p773) target = $region112
      $region111: #{tpu_custom_call.1} parent=5 // pred_region
        // Predicated region
        $region113: #{tpu_custom_call.1} parent=111 // pred_check
          %p776 = pneg %p64
        $region114: #{tpu_custom_call.1} parent=111 // pred_check_branch
          %778 = sbr.rel (%p776) target = $region116
        $region115: #{tpu_custom_call.1} parent=111 // pred_region
          %p779 = scmp.lt.s32.totalorder %s44, 3
          %s780 = scalar_select %p779, %s44, 3
          %s781 = smul.addr %s780, 2
          %s782 = smul.addr %s781, 2
          %s783 = scalar_lea.vmem %s0, %s782
        $region116: #{tpu_custom_call.1} parent=111 // pred_fallthru
          _
      $region112: #{tpu_custom_call.1} parent=5 // pred_fallthru
        _
      %p784 = scmp.le.s32.totalorder 1, %s44
      %p785 = scmp.lt.s32.totalorder %s44, 5
      %p786 = pnand %p784, %p785
      %p787 = pneg %p786
      // Predicated region
      $region117: #{tpu_custom_call.1} parent=5 // pred_check
        _
      $region118: #{tpu_custom_call.1} parent=5 // pred_check_branch
        %789 = sbr.rel (%p786) target = $region120
      $region119: #{tpu_custom_call.1} parent=5 // pred_region
        %s790 = ssub.s32 %s44, 1
        // Predicated region
        $region121: #{tpu_custom_call.1} parent=119 // pred_check
          %p791 = pneg %p217
        $region122: #{tpu_custom_call.1} parent=119 // pred_check_branch
          %793 = sbr.rel (%p791) target = $region124
        $region123: #{tpu_custom_call.1} parent=119 // pred_region
          %795 = dma.done [#allocation10], 8192
        $region124: #{tpu_custom_call.1} parent=119 // pred_fallthru
          _
        // Predicated region
        $region125: #{tpu_custom_call.1} parent=119 // pred_check
          %p796 = pneg %p343
        $region126: #{tpu_custom_call.1} parent=119 // pred_check_branch
          %798 = sbr.rel (%p796) target = $region128
        $region127: #{tpu_custom_call.1} parent=119 // pred_region
          %800 = dma.done [#allocation13], 8192
        $region128: #{tpu_custom_call.1} parent=119 // pred_fallthru
          _
        // Predicated region
        $region129: #{tpu_custom_call.1} parent=119 // pred_check
          %p801 = pneg %p385
        $region130: #{tpu_custom_call.1} parent=119 // pred_check_branch
          %803 = sbr.rel (%p801) target = $region132
        $region131: #{tpu_custom_call.1} parent=119 // pred_region
          %805 = dma.done [#allocation13], 8192
        $region132: #{tpu_custom_call.1} parent=119 // pred_fallthru
          _
        %p806 = scmp.lt.s32.totalorder %s49, 3
        %s807 = scalar_select %p806, %s49, 3
        %s808 = smul.addr %s807, 2
        %s809 = smul.addr %s808, 2
        %s810 = scalar_lea.vmem %s0, %s809
        %p811 = pneg %p70
        %p812 = pneg %p67
        %p813 = pneg %p91
        %p814 = pneg %p88
        %p815 = pneg %p112
        %p816 = pneg %p109
        %p817 = pneg %p133
        %p818 = pneg %p130
        %p819 = pneg %p154
        %p820 = pneg %p151
        %p821 = pneg %p175
        %p822 = pneg %p172
        %p823 = pneg %p196
        %p824 = pneg %p193
        %p825 = pneg %p217
        %p826 = pneg %p214
        %p827 = pneg %p238
        %p828 = pneg %p235
        %p829 = pneg %p259
        %p830 = pneg %p256
        %p831 = pneg %p280
        %p832 = pneg %p277
        %p833 = pneg %p301
        %p834 = pneg %p298
        %p835 = pneg %p322
        %p836 = pneg %p319
        %p837 = pneg %p343
        %p838 = pneg %p340
        %p839 = pneg %p364
        %p840 = pneg %p361
        %p841 = pneg %p385
        %p842 = pneg %p382
        %p843 = pneg %p406
        %p844 = pneg %p403
        %p845 = pneg %p427
        %p846 = pneg %p424
        %p847 = pneg %p448
        %p848 = pneg %p445
        %p849 = pneg %p469
        %p850 = pneg %p466
        %p851 = pneg %p490
        %p852 = pneg %p487
        %p853 = pneg %p511
        %p854 = pneg %p508
        %p855 = pneg %p532
        %p856 = pneg %p529
        %p857 = pneg %p553
        %p858 = pneg %p550
        %p859 = pneg %p574
        %p860 = pneg %p571
        %p861 = pneg %p600
        %p862 = pneg %p597
        %s863 = sand.u32 %s587, 1
        %s864 = scalar_lea.sflag [#allocation11], %s863
        %s865 = sand.u32 %s587, 1
        %s866 = smul.addr %s865, 2
        %s867 = scalar_lea.vmem [#allocation15], %s866
        %p868 = pneg %p626
        %p869 = pneg %p623
        %p870 = scmp.lt.s32.totalorder %s49, 3
        %s871 = scalar_select %p870, %s49, 3
        %s872 = smul.addr %s871, 2
        %s873 = scalar_lea.vmem %s26, %s872
        %p874 = pneg %p652
        %p875 = pneg %p649
        %s876 = sand.u32 %s639, 1
        %s877 = scalar_lea.sflag [#allocation17], %s876
        %s878 = sand.u32 %s639, 1
        %s879 = smul.addr %s878, 2
        %s880 = scalar_lea.vmem [#allocation16], %s879
        %p881 = scmp.lt.s32.totalorder %s49, 3
        %s882 = scalar_select %p881, %s49, 3
        %s883 = smul.addr %s882, 2
        %s884 = smul.addr %s883, 2
        %s885 = scalar_lea.vmem %s0, %s884
        %p886 = scmp.lt.s32.totalorder %s49, 3
        %s887 = scalar_select %p886, %s49, 3
        %s888 = smul.addr %s887, 2
        %s889 = scalar_lea.vmem %s26, %s888
        %p890 = scmp.eq.s32.totalorder %s49, 0
        // Predicated region
        $region133: #{tpu_custom_call.1} parent=119 // pred_check
          %p891 = pneg %p890
        $region134: #{tpu_custom_call.1} parent=119 // pred_check_branch
          %893 = sbr.rel (%p891) target = $region136
        $region135: #{tpu_custom_call.1} parent=119 // pred_region
          %v894 = vld [vmem:[%s23] sm:$0x1]
          %v896 = vperm.slane %v894, 0
          %898 = vst [vmem:[#allocation2] sm:$0x3] %v896
          %899 = vst [vmem:[#allocation3] sm:$0x3] 0.0
          %v900 = vld [vmem:[%s24] sm:$0x1]
          %v902 = vperm.slane %v900, 0
          %904 = vst [vmem:[#allocation4] sm:$0x3] %v902
          %905 = vst [vmem:[#allocation5] sm:$0x3] 0.0
          %vm906 = vcmask 254976
          %907 = vst.msk [vmem:[#allocation6] sm:$0x3] %vm906, 0.0
          %vm908 = vcmask 33792
          %909 = vst.msk [vmem:[#allocation7] sm:$0x3] %vm908, 0.0
        $region136: #{tpu_custom_call.1} parent=119 // pred_fallthru
          _
        %v910 = vld [vmem:[%s885] sm:$0xf]
        %v911 = vld [vmem:[%s3] sm:$0xff]
        %v912 = vld [vmem:[%s3 + $0x8] sm:$0xff]
        %v913 = vld [vmem:[%s3 + $0x10] sm:$0xff]
        %v914 = vld [vmem:[%s3 + $0x18] sm:$0xff]
        %v915 = vld [vmem:[%s3 + $0x20] sm:$0xff]
        %v916 = vld [vmem:[%s3 + $0x28] sm:$0xff]
        %v917 = vld [vmem:[%s3 + $0x30] sm:$0xff]
        %v918 = vld [vmem:[%s3 + $0x38] sm:$0xff]
        %v919 = vld [vmem:[%s3 + $0x40] sm:$0xff]
        %v920 = vld [vmem:[%s3 + $0x48] sm:$0xff]
        %v921 = vld [vmem:[%s3 + $0x50] sm:$0xff]
        %v922 = vld [vmem:[%s3 + $0x58] sm:$0xff]
        %v923 = vld [vmem:[%s3 + $0x60] sm:$0xff]
        %v924 = vld [vmem:[%s3 + $0x68] sm:$0xff]
        %v925 = vld [vmem:[%s3 + $0x70] sm:$0xff]
        %v926 = vld [vmem:[%s3 + $0x78] sm:$0xff]
        %v927 = vld [vmem:[%s3 + $0x80] sm:$0xff]
        %v928 = vld [vmem:[%s3 + $0x88] sm:$0xff]
        %v929 = vld [vmem:[%s3 + $0x90] sm:$0xff]
        %v930 = vld [vmem:[%s3 + $0x98] sm:$0xff]
        %v931 = vld [vmem:[%s4] sm:$0x1]
        %v933 = vperm.slane %v931, 0
        %936 = vst [vmem:[#allocation1] ss:$4 sm:$0xff] %v910
        %v937 = vld.sshfl [vmem:[#allocation1] sm:$0xff pattern:$0x73625140]
        %v938 = vld.sshfl [vmem:[#allocation1 + $0x8] sm:$0xff pattern:$0x73625140]
        %vm940 = vcmask 261120
        %v941 = vsel %vm940, %v938, 0
        %943 = vmatpush.msra.mxu0 %v926
        %944 = vmatpush.msra.mxu0 %v925
        %945 = vmatpush.msra.mxu0 %v924
        %946 = vmatpush.msra.mxu0 %v923
        %947 = vmatpush.msra.mxu0 %v922
        %948 = vmatpush.msra.mxu0 %v921
        %949 = vmatpush.msra.mxu0 %v920
        %950 = vmatpush.msra.mxu0 %v919
        %951 = vmatpush.msra.mxu0 %v918
        %952 = vmatpush.msra.mxu0 %v917
        %953 = vmatpush.msra.mxu0 %v916
        %954 = vmatpush.msra.mxu0 %v915
        %955 = vmatpush.msra.mxu0 %v914
        %956 = vmatpush.msra.mxu0 %v913
        %957 = vmatpush.msra.mxu0 %v912
        %958 = vmatpush.msra.mxu0 %v911
        %959 = vmatmul.f32.gmra.mxu0 %v937
        %v960 = vpop.f32.mrf.mxu0
        %v961 = vadd.f32 %v933, %v960
        %962 = vdwg.mxu0
        %963 = vmatpush.msra.mxu0 0.0
        %964 = vmatpush.msra.mxu0 0.0
        %965 = vmatpush.msra.mxu0 0.0
        %966 = vmatpush.msra.mxu0 0.0
        %967 = vmatpush.msra.mxu0 0.0
        %968 = vmatpush.msra.mxu0 0.0
        %969 = vmatpush.msra.mxu0 0.0
        %970 = vmatpush.msra.mxu0 0.0
        %971 = vmatpush.msra.mxu0 0.0
        %972 = vmatpush.msra.mxu0 0.0
        %973 = vmatpush.msra.mxu0 0.0
        %974 = vmatpush.msra.mxu0 0.0
        %975 = vmatpush.msra.mxu0 %v930
        %976 = vmatpush.msra.mxu0 %v929
        %977 = vmatpush.msra.mxu0 %v928
        %978 = vmatpush.msra.mxu0 %v927
        %979 = vmatmul.f32.gmra.mxu0 %v941
        %v980 = vpop.f32.mrf.mxu0
        %v981 = vadd.f32 %v961, %v980
        %982 = vdwg.mxu0
        %v983 = vmax.f32 %v981, 0.0
        %v984 = vld [vmem:[#allocation6] sm:$0x3]
        %v985 = vld [vmem:[%s5] sm:$0xff]
        %v986 = vld [vmem:[%s5 + $0x8] sm:$0xff]
        %v987 = vld [vmem:[%s5 + $0x10] sm:$0xff]
        %v988 = vld [vmem:[%s5 + $0x18] sm:$0xff]
        %v989 = vld [vmem:[%s5 + $0x20] sm:$0xff]
        %v990 = vld [vmem:[%s5 + $0x28] sm:$0xff]
        %v991 = vld [vmem:[%s5 + $0x30] sm:$0xff]
        %v992 = vld [vmem:[%s5 + $0x38] sm:$0xff]
        %v993 = vld [vmem:[%s5 + $0x40] sm:$0xff]
        %v994 = vld [vmem:[%s5 + $0x48] sm:$0xff]
        %v995 = vld [vmem:[%s5 + $0x50] sm:$0xff]
        %v996 = vld [vmem:[%s5 + $0x58] sm:$0xff]
        %v997 = vld [vmem:[%s5 + $0x60] sm:$0xff]
        %v998 = vld [vmem:[%s5 + $0x68] sm:$0xff]
        %v999 = vld [vmem:[%s5 + $0x70] sm:$0xff]
        %v1000 = vld [vmem:[%s5 + $0x78] sm:$0xff]
        %v1001 = vld [vmem:[%s6] sm:$0xff]
        %v1002 = vld [vmem:[%s6 + $0x8] sm:$0xff]
        %v1003 = vld [vmem:[%s6 + $0x10] sm:$0xff]
        %v1004 = vld [vmem:[%s6 + $0x18] sm:$0xff]
        %v1005 = vld [vmem:[%s6 + $0x20] sm:$0xff]
        %v1006 = vld [vmem:[%s6 + $0x28] sm:$0xff]
        %v1007 = vld [vmem:[%s6 + $0x30] sm:$0xff]
        %v1008 = vld [vmem:[%s6 + $0x38] sm:$0xff]
        %v1009 = vld [vmem:[%s6 + $0x40] sm:$0xff]
        %v1010 = vld [vmem:[%s6 + $0x48] sm:$0xff]
        %v1011 = vld [vmem:[%s6 + $0x50] sm:$0xff]
        %v1012 = vld [vmem:[%s6 + $0x58] sm:$0xff]
        %v1013 = vld [vmem:[%s6 + $0x60] sm:$0xff]
        %v1014 = vld [vmem:[%s6 + $0x68] sm:$0xff]
        %v1015 = vld [vmem:[%s6 + $0x70] sm:$0xff]
        %v1016 = vld [vmem:[%s6 + $0x78] sm:$0xff]
        %v1018 = vsel %vm940, %v984, 0
        %1020 = vmatpush.msra.mxu0 0.0
        %1021 = vmatpush.msra.mxu0 0.0
        %1022 = vmatpush.msra.mxu0 0.0
        %1023 = vmatpush.msra.mxu0 0.0
        %1024 = vmatpush.msra.mxu0 0.0
        %1025 = vmatpush.msra.mxu0 0.0
        %1026 = vmatpush.msra.mxu0 0.0
        %1027 = vmatpush.msra.mxu0 0.0
        %1028 = vmatpush.msra.mxu0 0.0
        %1029 = vmatpush.msra.mxu0 0.0
        %1030 = vmatpush.msra.mxu0 0.0
        %1031 = vmatpush.msra.mxu0 0.0
        %1032 = vmatpush.msra.mxu0 %v1013
        %1033 = vmatpush.msra.mxu0 %v1009
        %1034 = vmatpush.msra.mxu0 %v1005
        %1035 = vmatpush.msra.mxu0 %v1001
        %1036 = vmatmul.f32.gmra.mxu0 %v1018
        %v1037 = vpop.f32.mrf.mxu0
        %v1038 = vadd.f32 0.0, %v1037
        %1039 = vdwg.mxu0
        %1040 = vmatpush.msra.mxu0 0.0
        %1041 = vmatpush.msra.mxu0 0.0
        %1042 = vmatpush.msra.mxu0 0.0
        %1043 = vmatpush.msra.mxu0 0.0
        %1044 = vmatpush.msra.mxu0 0.0
        %1045 = vmatpush.msra.mxu0 0.0
        %1046 = vmatpush.msra.mxu0 0.0
        %1047 = vmatpush.msra.mxu0 0.0
        %1048 = vmatpush.msra.mxu0 0.0
        %1049 = vmatpush.msra.mxu0 0.0
        %1050 = vmatpush.msra.mxu0 0.0
        %1051 = vmatpush.msra.mxu0 0.0
        %1052 = vmatpush.msra.mxu0 %v1014
        %1053 = vmatpush.msra.mxu0 %v1010
        %1054 = vmatpush.msra.mxu0 %v1006
        %1055 = vmatpush.msra.mxu0 %v1002
        %1056 = vmatmul.f32.gmra.mxu0 %v1018
        %v1057 = vpop.f32.mrf.mxu0
        %v1058 = vadd.f32 0.0, %v1057
        %1059 = vdwg.mxu0
        %1060 = vmatpush.msra.mxu0 0.0
        %1061 = vmatpush.msra.mxu0 0.0
        %1062 = vmatpush.msra.mxu0 0.0
        %1063 = vmatpush.msra.mxu0 0.0
        %1064 = vmatpush.msra.mxu0 0.0
        %1065 = vmatpush.msra.mxu0 0.0
        %1066 = vmatpush.msra.mxu0 0.0
        %1067 = vmatpush.msra.mxu0 0.0
        %1068 = vmatpush.msra.mxu0 0.0
        %1069 = vmatpush.msra.mxu0 0.0
        %1070 = vmatpush.msra.mxu0 0.0
        %1071 = vmatpush.msra.mxu0 0.0
        %1072 = vmatpush.msra.mxu0 %v1015
        %1073 = vmatpush.msra.mxu0 %v1011
        %1074 = vmatpush.msra.mxu0 %v1007
        %1075 = vmatpush.msra.mxu0 %v1003
        %1076 = vmatmul.f32.gmra.mxu0 %v1018
        %v1077 = vpop.f32.mrf.mxu0
        %v1078 = vadd.f32 0.0, %v1077
        %1079 = vdwg.mxu0
        %1080 = vmatpush.msra.mxu0 0.0
        %1081 = vmatpush.msra.mxu0 0.0
        %1082 = vmatpush.msra.mxu0 0.0
        %1083 = vmatpush.msra.mxu0 0.0
        %1084 = vmatpush.msra.mxu0 0.0
        %1085 = vmatpush.msra.mxu0 0.0
        %1086 = vmatpush.msra.mxu0 0.0
        %1087 = vmatpush.msra.mxu0 0.0
        %1088 = vmatpush.msra.mxu0 0.0
        %1089 = vmatpush.msra.mxu0 0.0
        %1090 = vmatpush.msra.mxu0 0.0
        %1091 = vmatpush.msra.mxu0 0.0
        %1092 = vmatpush.msra.mxu0 %v1016
        %1093 = vmatpush.msra.mxu0 %v1012
        %1094 = vmatpush.msra.mxu0 %v1008
        %1095 = vmatpush.msra.mxu0 %v1004
        %1096 = vmatmul.f32.gmra.mxu0 %v1018
        %v1097 = vpop.f32.mrf.mxu0
        %v1098 = vadd.f32 0.0, %v1097
        %1099 = vdwg.mxu0
        %v1101 = vsel %vm940, %v983, 0
        %1103 = vmatpush.msra.mxu0 0.0
        %1104 = vmatpush.msra.mxu0 0.0
        %1105 = vmatpush.msra.mxu0 0.0
        %1106 = vmatpush.msra.mxu0 0.0
        %1107 = vmatpush.msra.mxu0 0.0
        %1108 = vmatpush.msra.mxu0 0.0
        %1109 = vmatpush.msra.mxu0 0.0
        %1110 = vmatpush.msra.mxu0 0.0
        %1111 = vmatpush.msra.mxu0 0.0
        %1112 = vmatpush.msra.mxu0 0.0
        %1113 = vmatpush.msra.mxu0 0.0
        %1114 = vmatpush.msra.mxu0 0.0
        %1115 = vmatpush.msra.mxu0 %v997
        %1116 = vmatpush.msra.mxu0 %v993
        %1117 = vmatpush.msra.mxu0 %v989
        %1118 = vmatpush.msra.mxu0 %v985
        %1119 = vmatmul.f32.gmra.mxu0 %v1101
        %v1120 = vpop.f32.mrf.mxu0
        %v1121 = vadd.f32 %v1038, %v1120
        %1122 = vdwg.mxu0
        %1123 = vmatpush.msra.mxu0 0.0
        %1124 = vmatpush.msra.mxu0 0.0
        %1125 = vmatpush.msra.mxu0 0.0
        %1126 = vmatpush.msra.mxu0 0.0
        %1127 = vmatpush.msra.mxu0 0.0
        %1128 = vmatpush.msra.mxu0 0.0
        %1129 = vmatpush.msra.mxu0 0.0
        %1130 = vmatpush.msra.mxu0 0.0
        %1131 = vmatpush.msra.mxu0 0.0
        %1132 = vmatpush.msra.mxu0 0.0
        %1133 = vmatpush.msra.mxu0 0.0
        %1134 = vmatpush.msra.mxu0 0.0
        %1135 = vmatpush.msra.mxu0 %v998
        %1136 = vmatpush.msra.mxu0 %v994
        %1137 = vmatpush.msra.mxu0 %v990
        %1138 = vmatpush.msra.mxu0 %v986
        %1139 = vmatmul.f32.gmra.mxu0 %v1101
        %v1140 = vpop.f32.mrf.mxu0
        %v1141 = vadd.f32 %v1058, %v1140
        %1142 = vdwg.mxu0
        %1143 = vmatpush.msra.mxu0 0.0
        %1144 = vmatpush.msra.mxu0 0.0
        %1145 = vmatpush.msra.mxu0 0.0
        %1146 = vmatpush.msra.mxu0 0.0
        %1147 = vmatpush.msra.mxu0 0.0
        %1148 = vmatpush.msra.mxu0 0.0
        %1149 = vmatpush.msra.mxu0 0.0
        %1150 = vmatpush.msra.mxu0 0.0
        %1151 = vmatpush.msra.mxu0 0.0
        %1152 = vmatpush.msra.mxu0 0.0
        %1153 = vmatpush.msra.mxu0 0.0
        %1154 = vmatpush.msra.mxu0 0.0
        %1155 = vmatpush.msra.mxu0 %v999
        %1156 = vmatpush.msra.mxu0 %v995
        %1157 = vmatpush.msra.mxu0 %v991
        %1158 = vmatpush.msra.mxu0 %v987
        %1159 = vmatmul.f32.gmra.mxu0 %v1101
        %v1160 = vpop.f32.mrf.mxu0
        %v1161 = vadd.f32 %v1078, %v1160
        %1162 = vdwg.mxu0
        %1163 = vmatpush.msra.mxu0 0.0
        %1164 = vmatpush.msra.mxu0 0.0
        %1165 = vmatpush.msra.mxu0 0.0
        %1166 = vmatpush.msra.mxu0 0.0
        %1167 = vmatpush.msra.mxu0 0.0
        %1168 = vmatpush.msra.mxu0 0.0
        %1169 = vmatpush.msra.mxu0 0.0
        %1170 = vmatpush.msra.mxu0 0.0
        %1171 = vmatpush.msra.mxu0 0.0
        %1172 = vmatpush.msra.mxu0 0.0
        %1173 = vmatpush.msra.mxu0 0.0
        %1174 = vmatpush.msra.mxu0 0.0
        %1175 = vmatpush.msra.mxu0 %v1000
        %1176 = vmatpush.msra.mxu0 %v996
        %1177 = vmatpush.msra.mxu0 %v992
        %1178 = vmatpush.msra.mxu0 %v988
        %1179 = vmatmul.f32.gmra.mxu0 %v1101
        %v1180 = vpop.f32.mrf.mxu0
        %v1181 = vadd.f32 %v1098, %v1180
        %1182 = vdwg.mxu0
        %v1183 = vld [vmem:[#allocation2] sm:$0x3]
        %v1184 = vld [vmem:[#allocation9] sm:$0xff]
        %v1185 = vld [vmem:[#allocation9 + $0x8] sm:$0xff]
        %v1186 = vld [vmem:[#allocation9 + $0x10] sm:$0xff]
        %v1187 = vld [vmem:[#allocation9 + $0x18] sm:$0xff]
        %v1188 = vld [vmem:[#allocation9 + $0x20] sm:$0xff]
        %v1189 = vld [vmem:[#allocation9 + $0x28] sm:$0xff]
        %v1190 = vld [vmem:[#allocation9 + $0x30] sm:$0xff]
        %v1191 = vld [vmem:[#allocation9 + $0x38] sm:$0xff]
        %v1192 = vld [vmem:[#allocation9 + $0x40] sm:$0xff]
        %v1193 = vld [vmem:[#allocation9 + $0x48] sm:$0xff]
        %v1194 = vld [vmem:[#allocation9 + $0x50] sm:$0xff]
        %v1195 = vld [vmem:[#allocation9 + $0x58] sm:$0xff]
        %v1196 = vld [vmem:[#allocation9 + $0x60] sm:$0xff]
        %v1197 = vld [vmem:[#allocation9 + $0x68] sm:$0xff]
        %v1198 = vld [vmem:[#allocation9 + $0x70] sm:$0xff]
        %v1199 = vld [vmem:[#allocation9 + $0x78] sm:$0xff]
        %v1200 = vld [vmem:[#allocation9 + $0x80] sm:$0xff]
        %v1201 = vld [vmem:[#allocation9 + $0x88] sm:$0xff]
        %v1202 = vld [vmem:[#allocation9 + $0x90] sm:$0xff]
        %v1203 = vld [vmem:[#allocation9 + $0x98] sm:$0xff]
        %v1204 = vld [vmem:[#allocation9 + $0xa0] sm:$0xff]
        %v1205 = vld [vmem:[#allocation9 + $0xa8] sm:$0xff]
        %v1206 = vld [vmem:[#allocation9 + $0xb0] sm:$0xff]
        %v1207 = vld [vmem:[#allocation9 + $0xb8] sm:$0xff]
        %v1208 = vld [vmem:[#allocation9 + $0xc0] sm:$0xff]
        %v1209 = vld [vmem:[#allocation9 + $0xc8] sm:$0xff]
        %v1210 = vld [vmem:[#allocation9 + $0xd0] sm:$0xff]
        %v1211 = vld [vmem:[#allocation9 + $0xd8] sm:$0xff]
        %v1212 = vld [vmem:[#allocation9 + $0xe0] sm:$0xff]
        %v1213 = vld [vmem:[#allocation9 + $0xe8] sm:$0xff]
        %v1214 = vld [vmem:[#allocation9 + $0xf0] sm:$0xff]
        %v1215 = vld [vmem:[#allocation9 + $0xf8] sm:$0xff]
        %v1216 = vld [vmem:[#allocation9 + $0x100] sm:$0xff]
        %v1217 = vld [vmem:[#allocation9 + $0x108] sm:$0xff]
        %v1218 = vld [vmem:[#allocation9 + $0x110] sm:$0xff]
        %v1219 = vld [vmem:[#allocation9 + $0x118] sm:$0xff]
        %v1220 = vld [vmem:[#allocation9 + $0x120] sm:$0xff]
        %v1221 = vld [vmem:[#allocation9 + $0x128] sm:$0xff]
        %v1222 = vld [vmem:[#allocation9 + $0x130] sm:$0xff]
        %v1223 = vld [vmem:[#allocation9 + $0x138] sm:$0xff]
        %v1224 = vld [vmem:[#allocation9 + $0x140] sm:$0xff]
        %v1225 = vld [vmem:[#allocation9 + $0x148] sm:$0xff]
        %v1226 = vld [vmem:[#allocation9 + $0x150] sm:$0xff]
        %v1227 = vld [vmem:[#allocation9 + $0x158] sm:$0xff]
        %v1228 = vld [vmem:[#allocation9 + $0x160] sm:$0xff]
        %v1229 = vld [vmem:[#allocation9 + $0x168] sm:$0xff]
        %v1230 = vld [vmem:[#allocation9 + $0x170] sm:$0xff]
        %v1231 = vld [vmem:[#allocation9 + $0x178] sm:$0xff]
        %v1232 = vld [vmem:[#allocation9 + $0x180] sm:$0xff]
        %v1233 = vld [vmem:[#allocation9 + $0x188] sm:$0xff]
        %v1234 = vld [vmem:[#allocation9 + $0x190] sm:$0xff]
        %v1235 = vld [vmem:[#allocation9 + $0x198] sm:$0xff]
        %v1236 = vld [vmem:[#allocation9 + $0x1a0] sm:$0xff]
        %v1237 = vld [vmem:[#allocation9 + $0x1a8] sm:$0xff]
        %v1238 = vld [vmem:[#allocation9 + $0x1b0] sm:$0xff]
        %v1239 = vld [vmem:[#allocation9 + $0x1b8] sm:$0xff]
        %v1240 = vld [vmem:[#allocation9 + $0x1c0] sm:$0xff]
        %v1241 = vld [vmem:[#allocation9 + $0x1c8] sm:$0xff]
        %v1242 = vld [vmem:[#allocation9 + $0x1d0] sm:$0xff]
        %v1243 = vld [vmem:[#allocation9 + $0x1d8] sm:$0xff]
        %v1244 = vld [vmem:[#allocation9 + $0x1e0] sm:$0xff]
        %v1245 = vld [vmem:[#allocation9 + $0x1e8] sm:$0xff]
        %v1246 = vld [vmem:[#allocation9 + $0x1f0] sm:$0xff]
        %v1247 = vld [vmem:[#allocation9 + $0x1f8] sm:$0xff]
        %1248 = vmatpush.msra.mxu0 %v1244
        %1249 = vmatpush.msra.mxu0 %v1240
        %1250 = vmatpush.msra.mxu0 %v1236
        %1251 = vmatpush.msra.mxu0 %v1232
        %1252 = vmatpush.msra.mxu0 %v1228
        %1253 = vmatpush.msra.mxu0 %v1224
        %1254 = vmatpush.msra.mxu0 %v1220
        %1255 = vmatpush.msra.mxu0 %v1216
        %1256 = vmatpush.msra.mxu0 %v1212
        %1257 = vmatpush.msra.mxu0 %v1208
        %1258 = vmatpush.msra.mxu0 %v1204
        %1259 = vmatpush.msra.mxu0 %v1200
        %1260 = vmatpush.msra.mxu0 %v1196
        %1261 = vmatpush.msra.mxu0 %v1192
        %1262 = vmatpush.msra.mxu0 %v1188
        %1263 = vmatpush.msra.mxu0 %v1184
        %1264 = vmatmul.f32.gmra.mxu0 %v1183
        %v1265 = vpop.f32.mrf.mxu0
        %v1266 = vadd.f32 0.0, %v1265
        %1267 = vdwg.mxu0
        %1268 = vmatpush.msra.mxu0 %v1245
        %1269 = vmatpush.msra.mxu0 %v1241
        %1270 = vmatpush.msra.mxu0 %v1237
        %1271 = vmatpush.msra.mxu0 %v1233
        %1272 = vmatpush.msra.mxu0 %v1229
        %1273 = vmatpush.msra.mxu0 %v1225
        %1274 = vmatpush.msra.mxu0 %v1221
        %1275 = vmatpush.msra.mxu0 %v1217
        %1276 = vmatpush.msra.mxu0 %v1213
        %1277 = vmatpush.msra.mxu0 %v1209
        %1278 = vmatpush.msra.mxu0 %v1205
        %1279 = vmatpush.msra.mxu0 %v1201
        %1280 = vmatpush.msra.mxu0 %v1197
        %1281 = vmatpush.msra.mxu0 %v1193
        %1282 = vmatpush.msra.mxu0 %v1189
        %1283 = vmatpush.msra.mxu0 %v1185
        %1284 = vmatmul.f32.gmra.mxu0 %v1183
        %v1285 = vpop.f32.mrf.mxu0
        %v1286 = vadd.f32 0.0, %v1285
        %1287 = vdwg.mxu0
        %1288 = vmatpush.msra.mxu0 %v1246
        %1289 = vmatpush.msra.mxu0 %v1242
        %1290 = vmatpush.msra.mxu0 %v1238
        %1291 = vmatpush.msra.mxu0 %v1234
        %1292 = vmatpush.msra.mxu0 %v1230
        %1293 = vmatpush.msra.mxu0 %v1226
        %1294 = vmatpush.msra.mxu0 %v1222
        %1295 = vmatpush.msra.mxu0 %v1218
        %1296 = vmatpush.msra.mxu0 %v1214
        %1297 = vmatpush.msra.mxu0 %v1210
        %1298 = vmatpush.msra.mxu0 %v1206
        %1299 = vmatpush.msra.mxu0 %v1202
        %1300 = vmatpush.msra.mxu0 %v1198
        %1301 = vmatpush.msra.mxu0 %v1194
        %1302 = vmatpush.msra.mxu0 %v1190
        %1303 = vmatpush.msra.mxu0 %v1186
        %1304 = vmatmul.f32.gmra.mxu0 %v1183
        %v1305 = vpop.f32.mrf.mxu0
        %v1306 = vadd.f32 0.0, %v1305
        %1307 = vdwg.mxu0
        %1308 = vmatpush.msra.mxu0 %v1247
        %1309 = vmatpush.msra.mxu0 %v1243
        %1310 = vmatpush.msra.mxu0 %v1239
        %1311 = vmatpush.msra.mxu0 %v1235
        %1312 = vmatpush.msra.mxu0 %v1231
        %1313 = vmatpush.msra.mxu0 %v1227
        %1314 = vmatpush.msra.mxu0 %v1223
        %1315 = vmatpush.msra.mxu0 %v1219
        %1316 = vmatpush.msra.mxu0 %v1215
        %1317 = vmatpush.msra.mxu0 %v1211
        %1318 = vmatpush.msra.mxu0 %v1207
        %1319 = vmatpush.msra.mxu0 %v1203
        %1320 = vmatpush.msra.mxu0 %v1199
        %1321 = vmatpush.msra.mxu0 %v1195
        %1322 = vmatpush.msra.mxu0 %v1191
        %1323 = vmatpush.msra.mxu0 %v1187
        %1324 = vmatmul.f32.gmra.mxu0 %v1183
        %v1325 = vpop.f32.mrf.mxu0
        %v1326 = vadd.f32 0.0, %v1325
        %1327 = vdwg.mxu0
        %v1328 = vadd.f32 %v1121, %v1266
        %v1329 = vadd.f32 %v1141, %v1286
        %v1330 = vadd.f32 %v1161, %v1306
        %v1331 = vadd.f32 %v1181, %v1326
        %v1332 = vld [vmem:[%s8] sm:$0xf]
        %v1334 = vperm.slane %v1332, 0
        %v1335 = vperm.slane %v1332, 1
        %v1336 = vperm.slane %v1332, 2
        %v1337 = vperm.slane %v1332, 3
        %v1342 = vadd.f32 %v1328, %v1334
        %v1343 = vadd.f32 %v1329, %v1335
        %v1344 = vadd.f32 %v1330, %v1336
        %v1345 = vadd.f32 %v1331, %v1337
        %v1346 = vmul.f32 %v1342, 0.5
        %v1347 = vtanh.pop %v1346
        %v1348 = vadd.f32 %v1347, 1.0
        %v1349 = vmul.f32 %v1348, 0.5
        %v1350 = vmul.f32 %v1343, 0.5
        %v1351 = vtanh.pop %v1350
        %v1352 = vadd.f32 %v1351, 1.0
        %v1353 = vmul.f32 %v1352, 0.5
        %v1354 = vtanh.pop %v1344
        %v1355 = vmul.f32 %v1345, 0.5
        %v1356 = vtanh.pop %v1355
        %v1357 = vadd.f32 %v1356, 1.0
        %v1358 = vmul.f32 %v1357, 0.5
        %v1359 = vld [vmem:[#allocation3] sm:$0x3]
        %v1360 = vmul.f32 %v1353, %v1359
        %v1361 = vmul.f32 %v1349, %v1354
        %v1362 = vadd.f32 %v1360, %v1361
        %v1363 = vtanh.pop %v1362
        %v1364 = vmul.f32 %v1358, %v1363
        %1365 = vst [vmem:[#allocation2] sm:$0x3] %v1364
        %1366 = vst [vmem:[#allocation3] sm:$0x3] %v1362
        %v1367 = vld [vmem:[%s9] sm:$0xff]
        %v1368 = vld [vmem:[%s9 + $0x8] sm:$0xff]
        %v1369 = vld [vmem:[%s9 + $0x10] sm:$0xff]
        %v1370 = vld [vmem:[%s9 + $0x18] sm:$0xff]
        %v1371 = vld [vmem:[%s9 + $0x20] sm:$0xff]
        %v1372 = vld [vmem:[%s9 + $0x28] sm:$0xff]
        %v1373 = vld [vmem:[%s9 + $0x30] sm:$0xff]
        %v1374 = vld [vmem:[%s9 + $0x38] sm:$0xff]
        %v1375 = vld [vmem:[%s9 + $0x40] sm:$0xff]
        %v1376 = vld [vmem:[%s9 + $0x48] sm:$0xff]
        %v1377 = vld [vmem:[%s9 + $0x50] sm:$0xff]
        %v1378 = vld [vmem:[%s9 + $0x58] sm:$0xff]
        %v1379 = vld [vmem:[%s9 + $0x60] sm:$0xff]
        %v1380 = vld [vmem:[%s9 + $0x68] sm:$0xff]
        %v1381 = vld [vmem:[%s9 + $0x70] sm:$0xff]
        %v1382 = vld [vmem:[%s9 + $0x78] sm:$0xff]
        %v1383 = vld [vmem:[%s10] sm:$0x1]
        %v1385 = vperm.slane %v1383, 0
        %1387 = vmatpush.msra.mxu0 %v1382
        %1388 = vmatpush.msra.mxu0 %v1381
        %1389 = vmatpush.msra.mxu0 %v1380
        %1390 = vmatpush.msra.mxu0 %v1379
        %1391 = vmatpush.msra.mxu0 %v1378
        %1392 = vmatpush.msra.mxu0 %v1377
        %1393 = vmatpush.msra.mxu0 %v1376
        %1394 = vmatpush.msra.mxu0 %v1375
        %1395 = vmatpush.msra.mxu0 %v1374
        %1396 = vmatpush.msra.mxu0 %v1373
        %1397 = vmatpush.msra.mxu0 %v1372
        %1398 = vmatpush.msra.mxu0 %v1371
        %1399 = vmatpush.msra.mxu0 %v1370
        %1400 = vmatpush.msra.mxu0 %v1369
        %1401 = vmatpush.msra.mxu0 %v1368
        %1402 = vmatpush.msra.mxu0 %v1367
        %1403 = vmatmul.f32.gmra.mxu0 %v1364
        %v1404 = vpop.f32.mrf.mxu0
        %v1405 = vadd.f32 %v1385, %v1404
        %1406 = vdwg.mxu0
        %v1407 = vtanh.pop %v1405
        %v1408 = vld [vmem:[%s11] sm:$0xff]
        %v1409 = vld [vmem:[%s11 + $0x8] sm:$0xff]
        %v1410 = vld [vmem:[%s11 + $0x10] sm:$0xff]
        %v1411 = vld [vmem:[%s11 + $0x18] sm:$0xff]
        %v1412 = vld [vmem:[%s11 + $0x20] sm:$0xff]
        %v1413 = vld [vmem:[%s11 + $0x28] sm:$0xff]
        %v1414 = vld [vmem:[%s11 + $0x30] sm:$0xff]
        %v1415 = vld [vmem:[%s11 + $0x38] sm:$0xff]
        %v1416 = vld [vmem:[%s11 + $0x40] sm:$0xff]
        %v1417 = vld [vmem:[%s11 + $0x48] sm:$0xff]
        %v1418 = vld [vmem:[%s11 + $0x50] sm:$0xff]
        %v1419 = vld [vmem:[%s11 + $0x58] sm:$0xff]
        %v1420 = vld [vmem:[%s11 + $0x60] sm:$0xff]
        %v1421 = vld [vmem:[%s11 + $0x68] sm:$0xff]
        %v1422 = vld [vmem:[%s11 + $0x70] sm:$0xff]
        %v1423 = vld [vmem:[%s11 + $0x78] sm:$0xff]
        %v1424 = vld [vmem:[%s12] sm:$0x1]
        %v1426 = vperm.slane %v1424, 0
        %1428 = vmatpush.msra.mxu0 %v1423
        %1429 = vmatpush.msra.mxu0 %v1422
        %1430 = vmatpush.msra.mxu0 %v1421
        %1431 = vmatpush.msra.mxu0 %v1420
        %1432 = vmatpush.msra.mxu0 %v1419
        %1433 = vmatpush.msra.mxu0 %v1418
        %1434 = vmatpush.msra.mxu0 %v1417
        %1435 = vmatpush.msra.mxu0 %v1416
        %1436 = vmatpush.msra.mxu0 %v1415
        %1437 = vmatpush.msra.mxu0 %v1414
        %1438 = vmatpush.msra.mxu0 %v1413
        %1439 = vmatpush.msra.mxu0 %v1412
        %1440 = vmatpush.msra.mxu0 %v1411
        %1441 = vmatpush.msra.mxu0 %v1410
        %1442 = vmatpush.msra.mxu0 %v1409
        %1443 = vmatpush.msra.mxu0 %v1408
        %1444 = vmatmul.f32.gmra.mxu0 %v1407
        %v1445 = vpop.f32.mrf.mxu0
        %v1446 = vadd.f32 %v1426, %v1445
        %1447 = vdwg.mxu0
        %vm1448 = vcmask 33792
        %v1449 = vsel %vm1448, %v1446, -inf
        %1450 = vmax.xlane.f32.xlu0 %v1449
        %v1451 = vpop.xlane.xlu0 %1450
        %v1452 = vsub.f32 %v1446, %v1451
        %v1453 = vmul.f32 %v1452, 1.442695
        %v1454 = vpow.pop %v1453
        %v1455 = vsel %vm1448, %v1454, 0.0
        %1456 = vadd.xlane.f32.xlu0 %v1455
        %v1457 = vpop.xlane.xlu0 %1456
        %v1458 = vrcp.pop %v1457
        %v1459 = vmul.f32 %v1457, %v1458
        %v1460 = vsub.f32 1.0, %v1459
        %v1461 = vmul.f32 %v1458, %v1460
        %v1462 = vadd.f32 %v1458, %v1461
        %vm1463 = vweird.f32 %v1457
        %vm1464 = vweird.f32 %v1458
        %vm1465 = vmor %vm1463, %vm1464
        %v1466 = vsel %vm1465, %v1458, %v1462
        %v1467 = vand.u32 2147483647, %v1457
        %vm1468 = vcmp.eq.f32.partialorder %v1467, 8.507059e+37
        %v1469 = vand.u32 %v1457, 2147483648
        %v1470 = vor.u32 1.1754944e-38, %v1469
        %v1471 = vsel %vm1468, %v1470, %v1466
        %v1472 = vmul.f32 %v1454, %v1471
        %v1473 = vmax.f32 %v1446, 0.0
        %v1474 = vand.u32 2147483647, %v1446
        %v1475 = vsub.f32 0.0, %v1474
        %v1476 = vmul.f32 %v1475, 1.442695
        %v1477 = vpow.pop %v1476
        %v1478 = vadd.f32 %v1477, 1.0
        %v1479 = vlog2.pop %v1478
        %v1480 = vmul.f32 %v1479, 0.6931472
        %v1481 = vadd.f32 %v1473, %v1480
        %v1482 = vadd.f32 %v1481, 1e-05
        %v1483 = vld [vmem:[#allocation7] sm:$0x3]
        %1485 = vrot.lane.b32.xlu0 %v1481, 123
        %v1486 = vpop.permute.xlu0 %1485
        %v1488 = vadd.f32 %v1483, %v1486
        %1489 = vst.msk [vmem:[#allocation7] sm:$0x3] %vm1448, %v1488
        %v1490 = vlaneseq
        %v1491 = vand.u32 %v1490, 127
        %v1492 = vcvt.s32.f32 %v1491
        %v1493 = vperm.slane %v1488, 0
        %v1494 = vlaneseq
        %v1495 = vshrl.u32 %v1494, 7
        %1497 = vset.pattern.permute.xlu0 %v1495
        %1498 = vperm.xlu0 %1497, %v1493
        %v1499 = vpop.permute.xlu0 %1498
        %v1500 = vperm.slane %v1488, 1
        %v1501 = vlaneseq
        %v1502 = vshrl.u32 %v1501, 7
        %1504 = vset.pattern.permute.xlu0 %v1502
        %1505 = vperm.xlu0 %1504, %v1500
        %v1506 = vpop.permute.xlu0 %1505
        %v1507 = vsub.f32 %v1492, %v1499
        %v1508 = vsub.f32 %v1492, %v1506
        %v1509 = vmul.f32 %v1507, %v1507
        %v1510 = vmul.f32 %v1508, %v1508
        %v1511 = vmul.f32 %v1509, -0.5
        %v1512 = vmul.f32 %v1510, -0.5
        %v1513 = vmul.f32 %v1482, %v1482
        %v1514 = vperm.slane %v1513, 0
        %v1515 = vlaneseq
        %v1516 = vshrl.u32 %v1515, 7
        %v1517 = vadd.s32 %v1516, 10
        %1518 = vset.pattern.permute.xlu0 %v1517
        %1519 = vperm.xlu0 %1518, %v1514
        %v1520 = vpop.permute.xlu0 %1519
        %v1521 = vperm.slane %v1513, 1
        %v1522 = vlaneseq
        %v1523 = vshrl.u32 %v1522, 7
        %v1524 = vadd.s32 %v1523, 10
        %1525 = vset.pattern.permute.xlu0 %v1524
        %1526 = vperm.xlu0 %1525, %v1521
        %v1527 = vpop.permute.xlu0 %1526
        %v1528 = vrcp.pop %v1520
        %v1529 = vmul.f32 %v1520, %v1528
        %v1530 = vsub.f32 1.0, %v1529
        %v1531 = vmul.f32 %v1528, %v1530
        %v1532 = vadd.f32 %v1528, %v1531
        %vm1533 = vweird.f32 %v1520
        %vm1534 = vweird.f32 %v1528
        %vm1535 = vmor %vm1533, %vm1534
        %v1536 = vsel %vm1535, %v1528, %v1532
        %v1537 = vand.u32 2147483647, %v1520
        %vm1538 = vcmp.eq.f32.partialorder %v1537, 8.507059e+37
        %v1539 = vand.u32 %v1520, 2147483648
        %v1540 = vor.u32 1.1754944e-38, %v1539
        %v1541 = vsel %vm1538, %v1540, %v1536
        %v1542 = vmul.f32 %v1511, %v1541
        %v1543 = vrcp.pop %v1527
        %v1544 = vmul.f32 %v1527, %v1543
        %v1545 = vsub.f32 1.0, %v1544
        %v1546 = vmul.f32 %v1543, %v1545
        %v1547 = vadd.f32 %v1543, %v1546
        %vm1548 = vweird.f32 %v1527
        %vm1549 = vweird.f32 %v1543
        %vm1550 = vmor %vm1548, %vm1549
        %v1551 = vsel %vm1550, %v1543, %v1547
        %v1552 = vand.u32 2147483647, %v1527
        %vm1553 = vcmp.eq.f32.partialorder %v1552, 8.507059e+37
        %v1554 = vand.u32 %v1527, 2147483648
        %v1555 = vor.u32 1.1754944e-38, %v1554
        %v1556 = vsel %vm1553, %v1555, %v1551
        %v1557 = vmul.f32 %v1512, %v1556
        %v1558 = vmul.f32 %v1542, 1.442695
        %v1559 = vpow.pop %v1558
        %v1560 = vmul.f32 %v1557, 1.442695
        %v1561 = vpow.pop %v1560
        %v1562 = vmul.f32 %v1482, 2.5066283
        %1564 = vrot.lane.b32.xlu0 %v1562, 118
        %v1565 = vpop.permute.xlu0 %1564
        %v1567 = vrcp.pop %v1565
        %v1568 = vmul.f32 %v1565, %v1567
        %v1569 = vsub.f32 1.0, %v1568
        %v1570 = vmul.f32 %v1567, %v1569
        %v1571 = vadd.f32 %v1567, %v1570
        %vm1572 = vweird.f32 %v1565
        %vm1573 = vweird.f32 %v1567
        %vm1574 = vmor %vm1572, %vm1573
        %v1575 = vsel %vm1574, %v1567, %v1571
        %v1576 = vand.u32 2147483647, %v1565
        %vm1577 = vcmp.eq.f32.partialorder %v1576, 8.507059e+37
        %v1578 = vand.u32 %v1565, 2147483648
        %v1579 = vor.u32 1.1754944e-38, %v1578
        %v1580 = vsel %vm1577, %v1579, %v1575
        %v1581 = vmul.f32 %v1472, %v1580
        %v1582 = vperm.slane %v1581, 0
        %v1583 = vlaneseq
        %v1584 = vshrl.u32 %v1583, 7
        %1586 = vset.pattern.permute.xlu0 %v1584
        %1587 = vperm.xlu0 %1586, %v1582
        %v1588 = vpop.permute.xlu0 %1587
        %v1589 = vperm.slane %v1581, 1
        %v1590 = vlaneseq
        %v1591 = vshrl.u32 %v1590, 7
        %1593 = vset.pattern.permute.xlu0 %v1591
        %1594 = vperm.xlu0 %1593, %v1589
        %v1595 = vpop.permute.xlu0 %1594
        %v1596 = vmul.f32 %v1588, %v1559
        %v1597 = vmul.f32 %v1595, %v1561
        %vm1598 = vcmask 126976
        %v1599 = vsel %vm1598, %v1596, 0.0
        %v1600 = vrot.slane %v1599, 4
        %v1601 = vadd.f32 %v1599, %v1600
        %v1602 = vrot.slane %v1601, 2
        %v1603 = vadd.f32 %v1601, %v1602
        %v1604 = vrot.slane %v1603, 1
        %v1605 = vadd.f32 %v1603, %v1604
        %v1606 = vsel %vm1598, %v1597, 0.0
        %v1607 = vrot.slane %v1606, 4
        %v1608 = vadd.f32 %v1606, %v1607
        %v1609 = vrot.slane %v1608, 2
        %v1610 = vadd.f32 %v1608, %v1609
        %v1611 = vrot.slane %v1610, 1
        %v1612 = vadd.f32 %v1610, %v1611
        %v1613 = vld [vmem:[%s2] sm:$0x3]
        %v1615 = vrot.slane %v1613, 1
        %v1618 = vmul.f32 %v1605, %v1613
        %v1619 = vmul.f32 %v1612, %v1615
        %v1620 = vperm.slane %v1618, 0
        %v1621 = vlaneseq
        %v1622 = vshrl.u32 %v1621, 7
        %1624 = vset.pattern.permute.xlu0 %v1622
        %1625 = vperm.xlu0 %1624, %v1620
        %v1626 = vpop.permute.xlu0 %1625
        %v1627 = vlaneseq
        %v1628 = vshrl.u32 %v1627, 7
        %v1629 = vadd.s32 %v1628, 8
        %1630 = vset.pattern.permute.xlu0 %v1629
        %1631 = vperm.xlu0 %1630, %v1620
        %v1632 = vpop.permute.xlu0 %1631
        %v1633 = vperm.slane %v1619, 0
        %v1634 = vlaneseq
        %v1635 = vshrl.u32 %v1634, 7
        %1637 = vset.pattern.permute.xlu0 %v1635
        %1638 = vperm.xlu0 %1637, %v1633
        %v1639 = vpop.permute.xlu0 %1638
        %v1640 = vlaneseq
        %v1641 = vshrl.u32 %v1640, 7
        %v1642 = vadd.s32 %v1641, 8
        %1643 = vset.pattern.permute.xlu0 %v1642
        %1644 = vperm.xlu0 %1643, %v1633
        %v1645 = vpop.permute.xlu0 %1644
        %v1646 = vld [vmem:[%s1] sm:$0xff]
        %v1647 = vld [vmem:[%s1 + $0x8] sm:$0xff]
        %v1648 = vld [vmem:[%s1 + $0x10] sm:$0xff]
        %v1649 = vld [vmem:[%s1 + $0x18] sm:$0xff]
        %v1650 = vmul.f32 %v1626, %v1646
        %v1651 = vmul.f32 %v1632, %v1647
        %v1652 = vmul.f32 %v1639, %v1648
        %v1653 = vmul.f32 %v1645, %v1649
        %v1654 = vsel %vm940, %v1650, 0.0
        %v1655 = vsel %vm940, %v1651, 0.0
        %v1656 = vadd.f32 %v1654, %v1655
        %v1657 = vrot.slane %v1656, 4
        %v1658 = vadd.f32 %v1656, %v1657
        %v1659 = vrot.slane %v1658, 2
        %v1660 = vadd.f32 %v1658, %v1659
        %v1661 = vrot.slane %v1660, 1
        %v1662 = vadd.f32 %v1660, %v1661
        %v1663 = vsel %vm940, %v1652, 0.0
        %v1664 = vsel %vm940, %v1653, 0.0
        %v1665 = vadd.f32 %v1663, %v1664
        %v1666 = vrot.slane %v1665, 4
        %v1667 = vadd.f32 %v1665, %v1666
        %v1668 = vrot.slane %v1667, 2
        %v1669 = vadd.f32 %v1667, %v1668
        %v1670 = vrot.slane %v1669, 1
        %v1671 = vadd.f32 %v1669, %v1670
        %vm1674 = vcmask 1041409
        %v1675 = vsel %vm1674, %v1671, %v1662
        %vm1677 = vcmask 254976
        %1678 = vst.msk [vmem:[#allocation6] sm:$0x3] %vm1677, %v1675
        %v1679 = vld [vmem:[#allocation12] sm:$0xff]
        %v1680 = vld [vmem:[#allocation12 + $0x8] sm:$0xff]
        %v1681 = vld [vmem:[#allocation12 + $0x10] sm:$0xff]
        %v1682 = vld [vmem:[#allocation12 + $0x18] sm:$0xff]
        %v1683 = vld [vmem:[#allocation12 + $0x20] sm:$0xff]
        %v1684 = vld [vmem:[#allocation12 + $0x28] sm:$0xff]
        %v1685 = vld [vmem:[#allocation12 + $0x30] sm:$0xff]
        %v1686 = vld [vmem:[#allocation12 + $0x38] sm:$0xff]
        %v1687 = vld [vmem:[#allocation12 + $0x40] sm:$0xff]
        %v1688 = vld [vmem:[#allocation12 + $0x48] sm:$0xff]
        %v1689 = vld [vmem:[#allocation12 + $0x50] sm:$0xff]
        %v1690 = vld [vmem:[#allocation12 + $0x58] sm:$0xff]
        %v1691 = vld [vmem:[#allocation12 + $0x60] sm:$0xff]
        %v1692 = vld [vmem:[#allocation12 + $0x68] sm:$0xff]
        %v1693 = vld [vmem:[#allocation12 + $0x70] sm:$0xff]
        %v1694 = vld [vmem:[#allocation12 + $0x78] sm:$0xff]
        %v1695 = vld [vmem:[#allocation12 + $0x80] sm:$0xff]
        %v1696 = vld [vmem:[#allocation12 + $0x88] sm:$0xff]
        %v1697 = vld [vmem:[#allocation12 + $0x90] sm:$0xff]
        %v1698 = vld [vmem:[#allocation12 + $0x98] sm:$0xff]
        %v1699 = vld [vmem:[#allocation12 + $0xa0] sm:$0xff]
        %v1700 = vld [vmem:[#allocation12 + $0xa8] sm:$0xff]
        %v1701 = vld [vmem:[#allocation12 + $0xb0] sm:$0xff]
        %v1702 = vld [vmem:[#allocation12 + $0xb8] sm:$0xff]
        %v1703 = vld [vmem:[#allocation12 + $0xc0] sm:$0xff]
        %v1704 = vld [vmem:[#allocation12 + $0xc8] sm:$0xff]
        %v1705 = vld [vmem:[#allocation12 + $0xd0] sm:$0xff]
        %v1706 = vld [vmem:[#allocation12 + $0xd8] sm:$0xff]
        %v1707 = vld [vmem:[#allocation12 + $0xe0] sm:$0xff]
        %v1708 = vld [vmem:[#allocation12 + $0xe8] sm:$0xff]
        %v1709 = vld [vmem:[#allocation12 + $0xf0] sm:$0xff]
        %v1710 = vld [vmem:[#allocation12 + $0xf8] sm:$0xff]
        %v1711 = vld [vmem:[#allocation12 + $0x100] sm:$0xff]
        %v1712 = vld [vmem:[#allocation12 + $0x108] sm:$0xff]
        %v1713 = vld [vmem:[#allocation12 + $0x110] sm:$0xff]
        %v1714 = vld [vmem:[#allocation12 + $0x118] sm:$0xff]
        %v1715 = vld [vmem:[#allocation12 + $0x120] sm:$0xff]
        %v1716 = vld [vmem:[#allocation12 + $0x128] sm:$0xff]
        %v1717 = vld [vmem:[#allocation12 + $0x130] sm:$0xff]
        %v1718 = vld [vmem:[#allocation12 + $0x138] sm:$0xff]
        %v1719 = vld [vmem:[#allocation12 + $0x140] sm:$0xff]
        %v1720 = vld [vmem:[#allocation12 + $0x148] sm:$0xff]
        %v1721 = vld [vmem:[#allocation12 + $0x150] sm:$0xff]
        %v1722 = vld [vmem:[#allocation12 + $0x158] sm:$0xff]
        %v1723 = vld [vmem:[#allocation12 + $0x160] sm:$0xff]
        %v1724 = vld [vmem:[#allocation12 + $0x168] sm:$0xff]
        %v1725 = vld [vmem:[#allocation12 + $0x170] sm:$0xff]
        %v1726 = vld [vmem:[#allocation12 + $0x178] sm:$0xff]
        %v1727 = vld [vmem:[#allocation12 + $0x180] sm:$0xff]
        %v1728 = vld [vmem:[#allocation12 + $0x188] sm:$0xff]
        %v1729 = vld [vmem:[#allocation12 + $0x190] sm:$0xff]
        %v1730 = vld [vmem:[#allocation12 + $0x198] sm:$0xff]
        %v1731 = vld [vmem:[#allocation12 + $0x1a0] sm:$0xff]
        %v1732 = vld [vmem:[#allocation12 + $0x1a8] sm:$0xff]
        %v1733 = vld [vmem:[#allocation12 + $0x1b0] sm:$0xff]
        %v1734 = vld [vmem:[#allocation12 + $0x1b8] sm:$0xff]
        %v1735 = vld [vmem:[#allocation12 + $0x1c0] sm:$0xff]
        %v1736 = vld [vmem:[#allocation12 + $0x1c8] sm:$0xff]
        %v1737 = vld [vmem:[#allocation12 + $0x1d0] sm:$0xff]
        %v1738 = vld [vmem:[#allocation12 + $0x1d8] sm:$0xff]
        %v1739 = vld [vmem:[#allocation12 + $0x1e0] sm:$0xff]
        %v1740 = vld [vmem:[#allocation12 + $0x1e8] sm:$0xff]
        %v1741 = vld [vmem:[#allocation12 + $0x1f0] sm:$0xff]
        %v1742 = vld [vmem:[#allocation12 + $0x1f8] sm:$0xff]
        %v1743 = vld [vmem:[%s14] sm:$0xff]
        %v1744 = vld [vmem:[%s14 + $0x8] sm:$0xff]
        %v1745 = vld [vmem:[%s14 + $0x10] sm:$0xff]
        %v1746 = vld [vmem:[%s14 + $0x18] sm:$0xff]
        %v1747 = vld [vmem:[%s14 + $0x20] sm:$0xff]
        %v1748 = vld [vmem:[%s14 + $0x28] sm:$0xff]
        %v1749 = vld [vmem:[%s14 + $0x30] sm:$0xff]
        %v1750 = vld [vmem:[%s14 + $0x38] sm:$0xff]
        %v1751 = vld [vmem:[%s14 + $0x40] sm:$0xff]
        %v1752 = vld [vmem:[%s14 + $0x48] sm:$0xff]
        %v1753 = vld [vmem:[%s14 + $0x50] sm:$0xff]
        %v1754 = vld [vmem:[%s14 + $0x58] sm:$0xff]
        %v1755 = vld [vmem:[%s14 + $0x60] sm:$0xff]
        %v1756 = vld [vmem:[%s14 + $0x68] sm:$0xff]
        %v1757 = vld [vmem:[%s14 + $0x70] sm:$0xff]
        %v1758 = vld [vmem:[%s14 + $0x78] sm:$0xff]
        %v1759 = vsel %vm940, %v1675, 0
        %1761 = vmatpush.msra.mxu0 0.0
        %1762 = vmatpush.msra.mxu0 0.0
        %1763 = vmatpush.msra.mxu0 0.0
        %1764 = vmatpush.msra.mxu0 0.0
        %1765 = vmatpush.msra.mxu0 0.0
        %1766 = vmatpush.msra.mxu0 0.0
        %1767 = vmatpush.msra.mxu0 0.0
        %1768 = vmatpush.msra.mxu0 0.0
        %1769 = vmatpush.msra.mxu0 0.0
        %1770 = vmatpush.msra.mxu0 0.0
        %1771 = vmatpush.msra.mxu0 0.0
        %1772 = vmatpush.msra.mxu0 0.0
        %1773 = vmatpush.msra.mxu0 %v1755
        %1774 = vmatpush.msra.mxu0 %v1751
        %1775 = vmatpush.msra.mxu0 %v1747
        %1776 = vmatpush.msra.mxu0 %v1743
        %1777 = vmatmul.f32.gmra.mxu0 %v1759
        %v1778 = vpop.f32.mrf.mxu0
        %v1779 = vadd.f32 0.0, %v1778
        %1780 = vdwg.mxu0
        %1781 = vmatpush.msra.mxu0 0.0
        %1782 = vmatpush.msra.mxu0 0.0
        %1783 = vmatpush.msra.mxu0 0.0
        %1784 = vmatpush.msra.mxu0 0.0
        %1785 = vmatpush.msra.mxu0 0.0
        %1786 = vmatpush.msra.mxu0 0.0
        %1787 = vmatpush.msra.mxu0 0.0
        %1788 = vmatpush.msra.mxu0 0.0
        %1789 = vmatpush.msra.mxu0 0.0
        %1790 = vmatpush.msra.mxu0 0.0
        %1791 = vmatpush.msra.mxu0 0.0
        %1792 = vmatpush.msra.mxu0 0.0
        %1793 = vmatpush.msra.mxu0 %v1756
        %1794 = vmatpush.msra.mxu0 %v1752
        %1795 = vmatpush.msra.mxu0 %v1748
        %1796 = vmatpush.msra.mxu0 %v1744
        %1797 = vmatmul.f32.gmra.mxu0 %v1759
        %v1798 = vpop.f32.mrf.mxu0
        %v1799 = vadd.f32 0.0, %v1798
        %1800 = vdwg.mxu0
        %1801 = vmatpush.msra.mxu0 0.0
        %1802 = vmatpush.msra.mxu0 0.0
        %1803 = vmatpush.msra.mxu0 0.0
        %1804 = vmatpush.msra.mxu0 0.0
        %1805 = vmatpush.msra.mxu0 0.0
        %1806 = vmatpush.msra.mxu0 0.0
        %1807 = vmatpush.msra.mxu0 0.0
        %1808 = vmatpush.msra.mxu0 0.0
        %1809 = vmatpush.msra.mxu0 0.0
        %1810 = vmatpush.msra.mxu0 0.0
        %1811 = vmatpush.msra.mxu0 0.0
        %1812 = vmatpush.msra.mxu0 0.0
        %1813 = vmatpush.msra.mxu0 %v1757
        %1814 = vmatpush.msra.mxu0 %v1753
        %1815 = vmatpush.msra.mxu0 %v1749
        %1816 = vmatpush.msra.mxu0 %v1745
        %1817 = vmatmul.f32.gmra.mxu0 %v1759
        %v1818 = vpop.f32.mrf.mxu0
        %v1819 = vadd.f32 0.0, %v1818
        %1820 = vdwg.mxu0
        %1821 = vmatpush.msra.mxu0 0.0
        %1822 = vmatpush.msra.mxu0 0.0
        %1823 = vmatpush.msra.mxu0 0.0
        %1824 = vmatpush.msra.mxu0 0.0
        %1825 = vmatpush.msra.mxu0 0.0
        %1826 = vmatpush.msra.mxu0 0.0
        %1827 = vmatpush.msra.mxu0 0.0
        %1828 = vmatpush.msra.mxu0 0.0
        %1829 = vmatpush.msra.mxu0 0.0
        %1830 = vmatpush.msra.mxu0 0.0
        %1831 = vmatpush.msra.mxu0 0.0
        %1832 = vmatpush.msra.mxu0 0.0
        %1833 = vmatpush.msra.mxu0 %v1758
        %1834 = vmatpush.msra.mxu0 %v1754
        %1835 = vmatpush.msra.mxu0 %v1750
        %1836 = vmatpush.msra.mxu0 %v1746
        %1837 = vmatmul.f32.gmra.mxu0 %v1759
        %v1838 = vpop.f32.mrf.mxu0
        %v1839 = vadd.f32 0.0, %v1838
        %1840 = vdwg.mxu0
        %1841 = vmatpush.msra.mxu0 %v1739
        %1842 = vmatpush.msra.mxu0 %v1735
        %1843 = vmatpush.msra.mxu0 %v1731
        %1844 = vmatpush.msra.mxu0 %v1727
        %1845 = vmatpush.msra.mxu0 %v1723
        %1846 = vmatpush.msra.mxu0 %v1719
        %1847 = vmatpush.msra.mxu0 %v1715
        %1848 = vmatpush.msra.mxu0 %v1711
        %1849 = vmatpush.msra.mxu0 %v1707
        %1850 = vmatpush.msra.mxu0 %v1703
        %1851 = vmatpush.msra.mxu0 %v1699
        %1852 = vmatpush.msra.mxu0 %v1695
        %1853 = vmatpush.msra.mxu0 %v1691
        %1854 = vmatpush.msra.mxu0 %v1687
        %1855 = vmatpush.msra.mxu0 %v1683
        %1856 = vmatpush.msra.mxu0 %v1679
        %1857 = vmatmul.f32.gmra.mxu0 %v1364
        %v1858 = vpop.f32.mrf.mxu0
        %v1859 = vadd.f32 %v1779, %v1858
        %1860 = vdwg.mxu0
        %1861 = vmatpush.msra.mxu0 %v1740
        %1862 = vmatpush.msra.mxu0 %v1736
        %1863 = vmatpush.msra.mxu0 %v1732
        %1864 = vmatpush.msra.mxu0 %v1728
        %1865 = vmatpush.msra.mxu0 %v1724
        %1866 = vmatpush.msra.mxu0 %v1720
        %1867 = vmatpush.msra.mxu0 %v1716
        %1868 = vmatpush.msra.mxu0 %v1712
        %1869 = vmatpush.msra.mxu0 %v1708
        %1870 = vmatpush.msra.mxu0 %v1704
        %1871 = vmatpush.msra.mxu0 %v1700
        %1872 = vmatpush.msra.mxu0 %v1696
        %1873 = vmatpush.msra.mxu0 %v1692
        %1874 = vmatpush.msra.mxu0 %v1688
        %1875 = vmatpush.msra.mxu0 %v1684
        %1876 = vmatpush.msra.mxu0 %v1680
        %1877 = vmatmul.f32.gmra.mxu0 %v1364
        %v1878 = vpop.f32.mrf.mxu0
        %v1879 = vadd.f32 %v1799, %v1878
        %1880 = vdwg.mxu0
        %1881 = vmatpush.msra.mxu0 %v1741
        %1882 = vmatpush.msra.mxu0 %v1737
        %1883 = vmatpush.msra.mxu0 %v1733
        %1884 = vmatpush.msra.mxu0 %v1729
        %1885 = vmatpush.msra.mxu0 %v1725
        %1886 = vmatpush.msra.mxu0 %v1721
        %1887 = vmatpush.msra.mxu0 %v1717
        %1888 = vmatpush.msra.mxu0 %v1713
        %1889 = vmatpush.msra.mxu0 %v1709
        %1890 = vmatpush.msra.mxu0 %v1705
        %1891 = vmatpush.msra.mxu0 %v1701
        %1892 = vmatpush.msra.mxu0 %v1697
        %1893 = vmatpush.msra.mxu0 %v1693
        %1894 = vmatpush.msra.mxu0 %v1689
        %1895 = vmatpush.msra.mxu0 %v1685
        %1896 = vmatpush.msra.mxu0 %v1681
        %1897 = vmatmul.f32.gmra.mxu0 %v1364
        %v1898 = vpop.f32.mrf.mxu0
        %v1899 = vadd.f32 %v1819, %v1898
        %1900 = vdwg.mxu0
        %1901 = vmatpush.msra.mxu0 %v1742
        %1902 = vmatpush.msra.mxu0 %v1738
        %1903 = vmatpush.msra.mxu0 %v1734
        %1904 = vmatpush.msra.mxu0 %v1730
        %1905 = vmatpush.msra.mxu0 %v1726
        %1906 = vmatpush.msra.mxu0 %v1722
        %1907 = vmatpush.msra.mxu0 %v1718
        %1908 = vmatpush.msra.mxu0 %v1714
        %1909 = vmatpush.msra.mxu0 %v1710
        %1910 = vmatpush.msra.mxu0 %v1706
        %1911 = vmatpush.msra.mxu0 %v1702
        %1912 = vmatpush.msra.mxu0 %v1698
        %1913 = vmatpush.msra.mxu0 %v1694
        %1914 = vmatpush.msra.mxu0 %v1690
        %1915 = vmatpush.msra.mxu0 %v1686
        %1916 = vmatpush.msra.mxu0 %v1682
        %1917 = vmatmul.f32.gmra.mxu0 %v1364
        %v1918 = vpop.f32.mrf.mxu0
        %v1919 = vadd.f32 %v1839, %v1918
        %1920 = vdwg.mxu0
        %v1921 = vld [vmem:[#allocation4] sm:$0x3]
        %v1922 = vld [vmem:[#allocation14] sm:$0xff]
        %v1923 = vld [vmem:[#allocation14 + $0x8] sm:$0xff]
        %v1924 = vld [vmem:[#allocation14 + $0x10] sm:$0xff]
        %v1925 = vld [vmem:[#allocation14 + $0x18] sm:$0xff]
        %v1926 = vld [vmem:[#allocation14 + $0x20] sm:$0xff]
        %v1927 = vld [vmem:[#allocation14 + $0x28] sm:$0xff]
        %v1928 = vld [vmem:[#allocation14 + $0x30] sm:$0xff]
        %v1929 = vld [vmem:[#allocation14 + $0x38] sm:$0xff]
        %v1930 = vld [vmem:[#allocation14 + $0x40] sm:$0xff]
        %v1931 = vld [vmem:[#allocation14 + $0x48] sm:$0xff]
        %v1932 = vld [vmem:[#allocation14 + $0x50] sm:$0xff]
        %v1933 = vld [vmem:[#allocation14 + $0x58] sm:$0xff]
        %v1934 = vld [vmem:[#allocation14 + $0x60] sm:$0xff]
        %v1935 = vld [vmem:[#allocation14 + $0x68] sm:$0xff]
        %v1936 = vld [vmem:[#allocation14 + $0x70] sm:$0xff]
        %v1937 = vld [vmem:[#allocation14 + $0x78] sm:$0xff]
        %v1938 = vld [vmem:[#allocation14 + $0x80] sm:$0xff]
        %v1939 = vld [vmem:[#allocation14 + $0x88] sm:$0xff]
        %v1940 = vld [vmem:[#allocation14 + $0x90] sm:$0xff]
        %v1941 = vld [vmem:[#allocation14 + $0x98] sm:$0xff]
        %v1942 = vld [vmem:[#allocation14 + $0xa0] sm:$0xff]
        %v1943 = vld [vmem:[#allocation14 + $0xa8] sm:$0xff]
        %v1944 = vld [vmem:[#allocation14 + $0xb0] sm:$0xff]
        %v1945 = vld [vmem:[#allocation14 + $0xb8] sm:$0xff]
        %v1946 = vld [vmem:[#allocation14 + $0xc0] sm:$0xff]
        %v1947 = vld [vmem:[#allocation14 + $0xc8] sm:$0xff]
        %v1948 = vld [vmem:[#allocation14 + $0xd0] sm:$0xff]
        %v1949 = vld [vmem:[#allocation14 + $0xd8] sm:$0xff]
        %v1950 = vld [vmem:[#allocation14 + $0xe0] sm:$0xff]
        %v1951 = vld [vmem:[#allocation14 + $0xe8] sm:$0xff]
        %v1952 = vld [vmem:[#allocation14 + $0xf0] sm:$0xff]
        %v1953 = vld [vmem:[#allocation14 + $0xf8] sm:$0xff]
        %v1954 = vld [vmem:[#allocation14 + $0x100] sm:$0xff]
        %v1955 = vld [vmem:[#allocation14 + $0x108] sm:$0xff]
        %v1956 = vld [vmem:[#allocation14 + $0x110] sm:$0xff]
        %v1957 = vld [vmem:[#allocation14 + $0x118] sm:$0xff]
        %v1958 = vld [vmem:[#allocation14 + $0x120] sm:$0xff]
        %v1959 = vld [vmem:[#allocation14 + $0x128] sm:$0xff]
        %v1960 = vld [vmem:[#allocation14 + $0x130] sm:$0xff]
        %v1961 = vld [vmem:[#allocation14 + $0x138] sm:$0xff]
        %v1962 = vld [vmem:[#allocation14 + $0x140] sm:$0xff]
        %v1963 = vld [vmem:[#allocation14 + $0x148] sm:$0xff]
        %v1964 = vld [vmem:[#allocation14 + $0x150] sm:$0xff]
        %v1965 = vld [vmem:[#allocation14 + $0x158] sm:$0xff]
        %v1966 = vld [vmem:[#allocation14 + $0x160] sm:$0xff]
        %v1967 = vld [vmem:[#allocation14 + $0x168] sm:$0xff]
        %v1968 = vld [vmem:[#allocation14 + $0x170] sm:$0xff]
        %v1969 = vld [vmem:[#allocation14 + $0x178] sm:$0xff]
        %v1970 = vld [vmem:[#allocation14 + $0x180] sm:$0xff]
        %v1971 = vld [vmem:[#allocation14 + $0x188] sm:$0xff]
        %v1972 = vld [vmem:[#allocation14 + $0x190] sm:$0xff]
        %v1973 = vld [vmem:[#allocation14 + $0x198] sm:$0xff]
        %v1974 = vld [vmem:[#allocation14 + $0x1a0] sm:$0xff]
        %v1975 = vld [vmem:[#allocation14 + $0x1a8] sm:$0xff]
        %v1976 = vld [vmem:[#allocation14 + $0x1b0] sm:$0xff]
        %v1977 = vld [vmem:[#allocation14 + $0x1b8] sm:$0xff]
        %v1978 = vld [vmem:[#allocation14 + $0x1c0] sm:$0xff]
        %v1979 = vld [vmem:[#allocation14 + $0x1c8] sm:$0xff]
        %v1980 = vld [vmem:[#allocation14 + $0x1d0] sm:$0xff]
        %v1981 = vld [vmem:[#allocation14 + $0x1d8] sm:$0xff]
        %v1982 = vld [vmem:[#allocation14 + $0x1e0] sm:$0xff]
        %v1983 = vld [vmem:[#allocation14 + $0x1e8] sm:$0xff]
        %v1984 = vld [vmem:[#allocation14 + $0x1f0] sm:$0xff]
        %v1985 = vld [vmem:[#allocation14 + $0x1f8] sm:$0xff]
        %1986 = vmatpush.msra.mxu0 %v1982
        %1987 = vmatpush.msra.mxu0 %v1978
        %1988 = vmatpush.msra.mxu0 %v1974
        %1989 = vmatpush.msra.mxu0 %v1970
        %1990 = vmatpush.msra.mxu0 %v1966
        %1991 = vmatpush.msra.mxu0 %v1962
        %1992 = vmatpush.msra.mxu0 %v1958
        %1993 = vmatpush.msra.mxu0 %v1954
        %1994 = vmatpush.msra.mxu0 %v1950
        %1995 = vmatpush.msra.mxu0 %v1946
        %1996 = vmatpush.msra.mxu0 %v1942
        %1997 = vmatpush.msra.mxu0 %v1938
        %1998 = vmatpush.msra.mxu0 %v1934
        %1999 = vmatpush.msra.mxu0 %v1930
        %2000 = vmatpush.msra.mxu0 %v1926
        %2001 = vmatpush.msra.mxu0 %v1922
        %2002 = vmatmul.f32.gmra.mxu0 %v1921
        %v2003 = vpop.f32.mrf.mxu0
        %v2004 = vadd.f32 0.0, %v2003
        %2005 = vdwg.mxu0
        %2006 = vmatpush.msra.mxu0 %v1983
        %2007 = vmatpush.msra.mxu0 %v1979
        %2008 = vmatpush.msra.mxu0 %v1975
        %2009 = vmatpush.msra.mxu0 %v1971
        %2010 = vmatpush.msra.mxu0 %v1967
        %2011 = vmatpush.msra.mxu0 %v1963
        %2012 = vmatpush.msra.mxu0 %v1959
        %2013 = vmatpush.msra.mxu0 %v1955
        %2014 = vmatpush.msra.mxu0 %v1951
        %2015 = vmatpush.msra.mxu0 %v1947
        %2016 = vmatpush.msra.mxu0 %v1943
        %2017 = vmatpush.msra.mxu0 %v1939
        %2018 = vmatpush.msra.mxu0 %v1935
        %2019 = vmatpush.msra.mxu0 %v1931
        %2020 = vmatpush.msra.mxu0 %v1927
        %2021 = vmatpush.msra.mxu0 %v1923
        %2022 = vmatmul.f32.gmra.mxu0 %v1921
        %v2023 = vpop.f32.mrf.mxu0
        %v2024 = vadd.f32 0.0, %v2023
        %2025 = vdwg.mxu0
        %2026 = vmatpush.msra.mxu0 %v1984
        %2027 = vmatpush.msra.mxu0 %v1980
        %2028 = vmatpush.msra.mxu0 %v1976
        %2029 = vmatpush.msra.mxu0 %v1972
        %2030 = vmatpush.msra.mxu0 %v1968
        %2031 = vmatpush.msra.mxu0 %v1964
        %2032 = vmatpush.msra.mxu0 %v1960
        %2033 = vmatpush.msra.mxu0 %v1956
        %2034 = vmatpush.msra.mxu0 %v1952
        %2035 = vmatpush.msra.mxu0 %v1948
        %2036 = vmatpush.msra.mxu0 %v1944
        %2037 = vmatpush.msra.mxu0 %v1940
        %2038 = vmatpush.msra.mxu0 %v1936
        %2039 = vmatpush.msra.mxu0 %v1932
        %2040 = vmatpush.msra.mxu0 %v1928
        %2041 = vmatpush.msra.mxu0 %v1924
        %2042 = vmatmul.f32.gmra.mxu0 %v1921
        %v2043 = vpop.f32.mrf.mxu0
        %v2044 = vadd.f32 0.0, %v2043
        %2045 = vdwg.mxu0
        %2046 = vmatpush.msra.mxu0 %v1985
        %2047 = vmatpush.msra.mxu0 %v1981
        %2048 = vmatpush.msra.mxu0 %v1977
        %2049 = vmatpush.msra.mxu0 %v1973
        %2050 = vmatpush.msra.mxu0 %v1969
        %2051 = vmatpush.msra.mxu0 %v1965
        %2052 = vmatpush.msra.mxu0 %v1961
        %2053 = vmatpush.msra.mxu0 %v1957
        %2054 = vmatpush.msra.mxu0 %v1953
        %2055 = vmatpush.msra.mxu0 %v1949
        %2056 = vmatpush.msra.mxu0 %v1945
        %2057 = vmatpush.msra.mxu0 %v1941
        %2058 = vmatpush.msra.mxu0 %v1937
        %2059 = vmatpush.msra.mxu0 %v1933
        %2060 = vmatpush.msra.mxu0 %v1929
        %2061 = vmatpush.msra.mxu0 %v1925
        %2062 = vmatmul.f32.gmra.mxu0 %v1921
        %v2063 = vpop.f32.mrf.mxu0
        %v2064 = vadd.f32 0.0, %v2063
        %2065 = vdwg.mxu0
        %v2066 = vadd.f32 %v1859, %v2004
        %v2067 = vadd.f32 %v1879, %v2024
        %v2068 = vadd.f32 %v1899, %v2044
        %v2069 = vadd.f32 %v1919, %v2064
        %v2070 = vld [vmem:[%s16] sm:$0xf]
        %v2072 = vperm.slane %v2070, 0
        %v2073 = vperm.slane %v2070, 1
        %v2074 = vperm.slane %v2070, 2
        %v2075 = vperm.slane %v2070, 3
        %v2080 = vadd.f32 %v2066, %v2072
        %v2081 = vadd.f32 %v2067, %v2073
        %v2082 = vadd.f32 %v2068, %v2074
        %v2083 = vadd.f32 %v2069, %v2075
        %v2084 = vmul.f32 %v2080, 0.5
        %v2085 = vtanh.pop %v2084
        %v2086 = vadd.f32 %v2085, 1.0
        %v2087 = vmul.f32 %v2086, 0.5
        %v2088 = vmul.f32 %v2081, 0.5
        %v2089 = vtanh.pop %v2088
        %v2090 = vadd.f32 %v2089, 1.0
        %v2091 = vmul.f32 %v2090, 0.5
        %v2092 = vtanh.pop %v2082
        %v2093 = vmul.f32 %v2083, 0.5
        %v2094 = vtanh.pop %v2093
        %v2095 = vadd.f32 %v2094, 1.0
        %v2096 = vmul.f32 %v2095, 0.5
        %v2097 = vld [vmem:[#allocation5] sm:$0x3]
        %v2098 = vmul.f32 %v2091, %v2097
        %v2099 = vmul.f32 %v2087, %v2092
        %v2100 = vadd.f32 %v2098, %v2099
        %v2101 = vtanh.pop %v2100
        %v2102 = vmul.f32 %v2096, %v2101
        %2103 = vst [vmem:[#allocation4] sm:$0x3] %v2102
        %2104 = vst [vmem:[#allocation5] sm:$0x3] %v2100
        %v2105 = vld [vmem:[%s17] sm:$0xff]
        %v2106 = vld [vmem:[%s17 + $0x8] sm:$0xff]
        %v2107 = vld [vmem:[%s17 + $0x10] sm:$0xff]
        %v2108 = vld [vmem:[%s17 + $0x18] sm:$0xff]
        %v2109 = vld [vmem:[%s17 + $0x20] sm:$0xff]
        %v2110 = vld [vmem:[%s17 + $0x28] sm:$0xff]
        %v2111 = vld [vmem:[%s17 + $0x30] sm:$0xff]
        %v2112 = vld [vmem:[%s17 + $0x38] sm:$0xff]
        %v2113 = vld [vmem:[%s17 + $0x40] sm:$0xff]
        %v2114 = vld [vmem:[%s17 + $0x48] sm:$0xff]
        %v2115 = vld [vmem:[%s17 + $0x50] sm:$0xff]
        %v2116 = vld [vmem:[%s17 + $0x58] sm:$0xff]
        %v2117 = vld [vmem:[%s17 + $0x60] sm:$0xff]
        %v2118 = vld [vmem:[%s17 + $0x68] sm:$0xff]
        %v2119 = vld [vmem:[%s17 + $0x70] sm:$0xff]
        %v2120 = vld [vmem:[%s17 + $0x78] sm:$0xff]
        %v2121 = vld [vmem:[%s18] sm:$0xff]
        %v2122 = vld [vmem:[%s18 + $0x8] sm:$0xff]
        %v2123 = vld [vmem:[%s18 + $0x10] sm:$0xff]
        %v2124 = vld [vmem:[%s18 + $0x18] sm:$0xff]
        %2125 = vmatpush.msra.mxu0 0.0
        %2126 = vmatpush.msra.mxu0 0.0
        %2127 = vmatpush.msra.mxu0 0.0
        %2128 = vmatpush.msra.mxu0 0.0
        %2129 = vmatpush.msra.mxu0 0.0
        %2130 = vmatpush.msra.mxu0 0.0
        %2131 = vmatpush.msra.mxu0 0.0
        %2132 = vmatpush.msra.mxu0 0.0
        %2133 = vmatpush.msra.mxu0 0.0
        %2134 = vmatpush.msra.mxu0 0.0
        %2135 = vmatpush.msra.mxu0 0.0
        %2136 = vmatpush.msra.mxu0 0.0
        %2137 = vmatpush.msra.mxu0 %v2124
        %2138 = vmatpush.msra.mxu0 %v2123
        %2139 = vmatpush.msra.mxu0 %v2122
        %2140 = vmatpush.msra.mxu0 %v2121
        %2141 = vmatmul.f32.gmra.mxu0 %v1759
        %v2142 = vpop.f32.mrf.mxu0
        %v2143 = vadd.f32 0.0, %v2142
        %2144 = vdwg.mxu0
        %2145 = vmatpush.msra.mxu0 %v2120
        %2146 = vmatpush.msra.mxu0 %v2119
        %2147 = vmatpush.msra.mxu0 %v2118
        %2148 = vmatpush.msra.mxu0 %v2117
        %2149 = vmatpush.msra.mxu0 %v2116
        %2150 = vmatpush.msra.mxu0 %v2115
        %2151 = vmatpush.msra.mxu0 %v2114
        %2152 = vmatpush.msra.mxu0 %v2113
        %2153 = vmatpush.msra.mxu0 %v2112
        %2154 = vmatpush.msra.mxu0 %v2111
        %2155 = vmatpush.msra.mxu0 %v2110
        %2156 = vmatpush.msra.mxu0 %v2109
        %2157 = vmatpush.msra.mxu0 %v2108
        %2158 = vmatpush.msra.mxu0 %v2107
        %2159 = vmatpush.msra.mxu0 %v2106
        %2160 = vmatpush.msra.mxu0 %v2105
        %2161 = vmatmul.f32.gmra.mxu0 %v2102
        %v2162 = vpop.f32.mrf.mxu0
        %v2163 = vadd.f32 %v2143, %v2162
        %2164 = vdwg.mxu0
        %v2165 = vld [vmem:[%s19] sm:$0x1]
        %v2167 = vperm.slane %v2165, 0
        %v2169 = vadd.f32 %v2163, %v2167
        %v2170 = vld [vmem:[%s20] sm:$0xff]
        %v2171 = vld [vmem:[%s20 + $0x8] sm:$0xff]
        %v2172 = vld [vmem:[%s20 + $0x10] sm:$0xff]
        %v2173 = vld [vmem:[%s20 + $0x18] sm:$0xff]
        %v2174 = vld [vmem:[%s20 + $0x20] sm:$0xff]
        %v2175 = vld [vmem:[%s20 + $0x28] sm:$0xff]
        %v2176 = vld [vmem:[%s20 + $0x30] sm:$0xff]
        %v2177 = vld [vmem:[%s20 + $0x38] sm:$0xff]
        %v2178 = vld [vmem:[%s20 + $0x40] sm:$0xff]
        %v2179 = vld [vmem:[%s20 + $0x48] sm:$0xff]
        %v2180 = vld [vmem:[%s20 + $0x50] sm:$0xff]
        %v2181 = vld [vmem:[%s20 + $0x58] sm:$0xff]
        %v2182 = vld [vmem:[%s20 + $0x60] sm:$0xff]
        %v2183 = vld [vmem:[%s20 + $0x68] sm:$0xff]
        %v2184 = vld [vmem:[%s20 + $0x70] sm:$0xff]
        %v2185 = vld [vmem:[%s20 + $0x78] sm:$0xff]
        %v2186 = vld [vmem:[%s21] sm:$0xff]
        %v2187 = vld [vmem:[%s21 + $0x8] sm:$0xff]
        %v2188 = vld [vmem:[%s21 + $0x10] sm:$0xff]
        %v2189 = vld [vmem:[%s21 + $0x18] sm:$0xff]
        %v2190 = vld [vmem:[%s21 + $0x20] sm:$0xff]
        %v2191 = vld [vmem:[%s21 + $0x28] sm:$0xff]
        %v2192 = vld [vmem:[%s21 + $0x30] sm:$0xff]
        %v2193 = vld [vmem:[%s21 + $0x38] sm:$0xf]
        %vm2194 = vcmask 490496
        %v2196 = vsel %vm2194, %v2169, 0
        %vm2198 = vcmask 1043456
        %v2200 = vsel %vm2198, %v2193, 0
        %2202 = vmatpush.msra.mxu0 0.0
        %2203 = vmatpush.msra.mxu0 0.0
        %2204 = vmatpush.msra.mxu0 0.0
        %2205 = vmatpush.msra.mxu0 0.0
        %2206 = vmatpush.msra.mxu0 0.0
        %2207 = vmatpush.msra.mxu0 0.0
        %2208 = vmatpush.msra.mxu0 0.0
        %2209 = vmatpush.msra.mxu0 0.0
        %2210 = vmatpush.msra.mxu0 %v2200
        %2211 = vmatpush.msra.mxu0 %v2192
        %2212 = vmatpush.msra.mxu0 %v2191
        %2213 = vmatpush.msra.mxu0 %v2190
        %2214 = vmatpush.msra.mxu0 %v2189
        %2215 = vmatpush.msra.mxu0 %v2188
        %2216 = vmatpush.msra.mxu0 %v2187
        %2217 = vmatpush.msra.mxu0 %v2186
        %2218 = vmatmul.f32.gmra.mxu0 %v2196
        %v2219 = vpop.f32.mrf.mxu0
        %v2220 = vadd.f32 0.0, %v2219
        %2221 = vdwg.mxu0
        %2222 = vmatpush.msra.mxu0 %v2185
        %2223 = vmatpush.msra.mxu0 %v2184
        %2224 = vmatpush.msra.mxu0 %v2183
        %2225 = vmatpush.msra.mxu0 %v2182
        %2226 = vmatpush.msra.mxu0 %v2181
        %2227 = vmatpush.msra.mxu0 %v2180
        %2228 = vmatpush.msra.mxu0 %v2179
        %2229 = vmatpush.msra.mxu0 %v2178
        %2230 = vmatpush.msra.mxu0 %v2177
        %2231 = vmatpush.msra.mxu0 %v2176
        %2232 = vmatpush.msra.mxu0 %v2175
        %2233 = vmatpush.msra.mxu0 %v2174
        %2234 = vmatpush.msra.mxu0 %v2173
        %2235 = vmatpush.msra.mxu0 %v2172
        %2236 = vmatpush.msra.mxu0 %v2171
        %2237 = vmatpush.msra.mxu0 %v2170
        %2238 = vmatmul.f32.gmra.mxu0 %v2102
        %v2239 = vpop.f32.mrf.mxu0
        %v2240 = vadd.f32 %v2220, %v2239
        %2241 = vdwg.mxu0
        %v2242 = vld [vmem:[#allocation8] sm:$0x1]
        %v2244 = vperm.slane %v2242, 0
        %v2246 = vadd.f32 %v2240, %v2244
        %vm2247 = vcmask 484352
        %2248 = vst.msk [vmem:[%s867] sm:$0x3] %vm2247, %v2169
        %vm2249 = vcmask 1024
        %2250 = vst.msk [vmem:[%s889] sm:$0x3] %vm2249, %v2246
        %v2253 = vrot.slane %v1619, 7
        %v2254 = vsel %vm1674, %v2253, %v1618
        %vm2256 = vcmask 123904
        %2257 = vst.msk [vmem:[%s880] sm:$0x3] %vm2256, %v2254
        %s2258 = sand.u32 %s587, 1
        %s2259 = scalar_lea.sflag [#allocation11], %s2258
        %s2260 = sand.u32 %s587, 1
        %s2261 = smul.addr %s2260, 2
        %s2262 = scalar_lea.vmem [#allocation15], %s2261
        %p2263 = scmp.lt.s32.totalorder %s49, 3
        %s2264 = scalar_select %p2263, %s49, 3
        %s2265 = smul.addr %s2264, 2
        %s2266 = scalar_lea.vmem %s26, %s2265
        %s2267 = sand.u32 %s639, 1
        %s2268 = scalar_lea.sflag [#allocation17], %s2267
        %s2269 = sand.u32 %s639, 1
        %s2270 = smul.addr %s2269, 2
        %s2271 = scalar_lea.vmem [#allocation16], %s2270
        // Predicated region
        $region137: #{tpu_custom_call.1} parent=119 // pred_check
          %p2272 = pneg %p597
        $region138: #{tpu_custom_call.1} parent=119 // pred_check_branch
          %2274 = sbr.rel (%p2272) target = $region140
        $region139: #{tpu_custom_call.1} parent=119 // pred_region
          %2276 = vsyncadd %s2259, 0
          %s2277 = smul.addr %s49, 2
          %s2278 = scalar_lea.hbm %s25, %s2277
          %s2280 = sshll.u32 %s2262, 4
          %s2281 = int_to_ptr.vmem [resolvable:$true] %s2280
          %s2282 = sshll.u32 %s2278, 4
          %s2283 = int_to_ptr.hbm [resolvable:$true] %s2282
          %2285 = dma.vmem_to_hbm [thread:$0]  %s2281, 32, %s2283, %s2259
        $region140: #{tpu_custom_call.1} parent=119 // pred_fallthru
          _
        // Predicated region
        $region141: #{tpu_custom_call.1} parent=119 // pred_check
          %p2286 = pneg %p623
        $region142: #{tpu_custom_call.1} parent=119 // pred_check_branch
          %2288 = sbr.rel (%p2286) target = $region144
        $region143: #{tpu_custom_call.1} parent=119 // pred_region
          _
        $region144: #{tpu_custom_call.1} parent=119 // pred_fallthru
          _
        // Predicated region
        $region145: #{tpu_custom_call.1} parent=119 // pred_check
          %p2289 = pneg %p649
        $region146: #{tpu_custom_call.1} parent=119 // pred_check_branch
          %2291 = sbr.rel (%p2289) target = $region148
        $region147: #{tpu_custom_call.1} parent=119 // pred_region
          %2293 = vsyncadd %s2268, 0
          %s2294 = smul.addr %s49, 2
          %s2295 = scalar_lea.hbm %s27, %s2294
          %s2297 = sshll.u32 %s2271, 4
          %s2298 = int_to_ptr.vmem [resolvable:$true] %s2297
          %s2299 = sshll.u32 %s2295, 4
          %s2300 = int_to_ptr.hbm [resolvable:$true] %s2299
          %2302 = dma.vmem_to_hbm [thread:$0]  %s2298, 32, %s2300, %s2268
        $region148: #{tpu_custom_call.1} parent=119 // pred_fallthru
          _
      $region120: #{tpu_custom_call.1} parent=5 // pred_fallthru
        _
      %p2303 = scmp.le.s32.totalorder 2, %s44
      // Predicated region
      $region149: #{tpu_custom_call.1} parent=5 // pred_check
        %p2304 = pneg %p2303
      $region150: #{tpu_custom_call.1} parent=5 // pred_check_branch
        %2306 = sbr.rel (%p2304) target = $region152
      $region151: #{tpu_custom_call.1} parent=5 // pred_region
        %s2307 = ssub.s32 %s44, 2
        // Predicated region
        $region153: #{tpu_custom_call.1} parent=151 // pred_check
          %p2308 = pneg %p603
        $region154: #{tpu_custom_call.1} parent=151 // pred_check_branch
          %2310 = sbr.rel (%p2308) target = $region156
        $region155: #{tpu_custom_call.1} parent=151 // pred_region
          %s2311 = sand.u32 %s588, 1
          %s2312 = scalar_lea.sflag [#allocation11], %s2311
          %s2313 = sand.u32 %s588, 1
          %s2314 = smul.addr %s2313, 2
          %s2315 = scalar_lea.vmem [#allocation15], %s2314
          %2317 = dma.done %s2312, 32
        $region156: #{tpu_custom_call.1} parent=151 // pred_fallthru
          _
        // Predicated region
        $region157: #{tpu_custom_call.1} parent=151 // pred_check
          %p2318 = pneg %p629
        $region158: #{tpu_custom_call.1} parent=151 // pred_check_branch
          %2320 = sbr.rel (%p2318) target = $region160
        $region159: #{tpu_custom_call.1} parent=151 // pred_region
          %p2321 = scmp.lt.s32.totalorder %s50, 3
          %s2322 = scalar_select %p2321, %s50, 3
          %s2323 = smul.addr %s2322, 2
          %s2324 = scalar_lea.vmem %s26, %s2323
        $region160: #{tpu_custom_call.1} parent=151 // pred_fallthru
          _
        // Predicated region
        $region161: #{tpu_custom_call.1} parent=151 // pred_check
          %p2325 = pneg %p655
        $region162: #{tpu_custom_call.1} parent=151 // pred_check_branch
          %2327 = sbr.rel (%p2325) target = $region164
        $region163: #{tpu_custom_call.1} parent=151 // pred_region
          %s2328 = sand.u32 %s640, 1
          %s2329 = scalar_lea.sflag [#allocation17], %s2328
          %s2330 = sand.u32 %s640, 1
          %s2331 = smul.addr %s2330, 2
          %s2332 = scalar_lea.vmem [#allocation16], %s2331
          %2334 = dma.done %s2329, 32
        $region164: #{tpu_custom_call.1} parent=151 // pred_fallthru
          _
      $region152: #{tpu_custom_call.1} parent=5 // pred_fallthru
        _
    $region6: #{tpu_custom_call.1} parent=1 // loop_footer
      %s48 = sadd.s32 1, %s44
    $region7: #{tpu_custom_call.1} parent=1 // loop_footer_branch
      %43 = sbr.rel target = $region3
    $region8: #{tpu_custom_call.1} parent=1 // loop_exit
      _
    %2335 = vsyncpa [#allocation10], 1
    %s2336 = scalar_lea.sflag [#allocation10], 1
    %2337 = vsyncpa %s2336, 1
    %2338 = vsyncpa [#allocation13], 1
    %2339 = vsyncpa [#allocation11], 1
    %s2340 = scalar_lea.sflag [#allocation11], 1
    %2341 = vsyncpa %s2340, 1
    %2342 = vsyncpa [#allocation17], 1
    %s2343 = scalar_lea.sflag [#allocation17], 1
    %2344 = vsyncpa %s2343, 1

</llo_original>
